<compile_context>
chip_gen: v6e
topology: v6e:2x2x1
jax: 0.10.0
libtpu: 0.0.40
codegen_flags: <defaults>
</compile_context>

<pallas_src>
import jax
import jax.numpy as jnp
from jax.experimental import pallas as pl
from jax.experimental.pallas import tpu as pltpu

IN_FEATURES = 512 * 16   # 8192
OUT_FEATURES = 13


def _linear_kernel(x_ref, w_ref, b_ref, o_ref):
    """Single-step full-K linear layer.

    x_ref : (B, 8192)    flattened input (compute dtype, e.g. bf16)
    w_ref : (8192, 13)   W^T (compute dtype)
    b_ref : (1, 13)      bias (f32)
    o_ref : (B, 13)      output
    """
    acc = jnp.dot(x_ref[...], w_ref[...], preferred_element_type=jnp.float32)
    o_ref[...] = (acc + b_ref[...]).astype(o_ref.dtype)


def fine_tuning_forward(x, w_t, b, *, compute_dtype=jnp.bfloat16):
    """x: any shape (B, ...) with prod(...) == 8192 (e.g. NCHW (B,512,4,4)).
    w_t: (8192, 13) = fc.weight.T ; b: (13,).

    compute_dtype: dtype the MXU sees (bf16 recommended, f32 for exact
    parity with the f32 torch reference).  Accumulation is always f32.
    """
    bsz = x.shape[0]
    out_dtype = x.dtype
    x2d = x.reshape(bsz, IN_FEATURES).astype(compute_dtype)   # torch .view semantics
    w2d = w_t.astype(compute_dtype)
    b2d = b.reshape(1, OUT_FEATURES).astype(jnp.float32)

    return pl.pallas_call(
        _linear_kernel,
        out_shape=jax.ShapeDtypeStruct((bsz, OUT_FEATURES), out_dtype),
        grid_spec=pltpu.PrefetchScalarGridSpec(
            num_scalar_prefetch=0,
            grid=(1,),                                   # single step: no reduction loop
            in_specs=[
                pl.BlockSpec((bsz, IN_FEATURES), lambda i: (0, 0)),
                pl.BlockSpec((IN_FEATURES, OUT_FEATURES), lambda i: (0, 0)),
                pl.BlockSpec((1, OUT_FEATURES), lambda i: (0, 0)),
            ],
            out_specs=pl.BlockSpec((bsz, OUT_FEATURES), lambda i: (0, 0)),
        ),
        compiler_params=pltpu.CompilerParams(
            dimension_semantics=("arbitrary",),
        ),
    )(x2d, w2d, b2d)


if __name__ == "__main__":
    key = jax.random.PRNGKey(0)
    k_x, k_w = jax.random.split(key)

    # Deterministic "normal_init": weight ~ N(0, 0.01), bias = 0
    batch = 2
    x = jax.random.normal(k_x, (batch, 512, 4, 4), dtype=jnp.float32)   # NCHW
    weight = 0.01 * jax.random.normal(
        k_w, (OUT_FEATURES, IN_FEATURES), dtype=jnp.float32
    )                                                                    # torch fc.weight (13, 8192)
    bias = jnp.zeros((OUT_FEATURES,), dtype=jnp.float32)

    # Reference (same math as torch F.linear, f32)
    ref = x.reshape(batch, IN_FEATURES) @ weight.T + bias

    # Default bf16 compute path (f32 MXU accumulation) — loosened tolerance.
    out = jax.block_until_ready(fine_tuning_forward(x, weight.T, bias))
    assert out.shape == (batch, OUT_FEATURES)
    assert out.dtype == jnp.float32
    assert jnp.allclose(out, ref, atol=5e-2, rtol=5e-2)

    # f32 compute path — exact parity with the original module's numerics.
    out_f32 = jax.block_until_ready(
        fine_tuning_forward(x, weight.T, bias, compute_dtype=jnp.float32)
    )
    assert jnp.allclose(out_f32, ref, atol=1e-4, rtol=1e-4)

    print("KERNEL_OK")
</pallas_src>

<mosaic_0001>
module attributes {stable_mosaic.version = 11 : i64} {
  func.func @_linear_kernel(%arg0: i32, %arg1: memref<2x8192xbf16, #tpu.memory_space<vmem>>, %arg2: memref<8192x13xbf16, #tpu.memory_space<vmem>>, %arg3: memref<1x13xf32, #tpu.memory_space<vmem>>, %arg4: memref<2x13xf32, #tpu.memory_space<vmem>>) attributes {dimension_semantics = [#tpu.dimension_semantics<arbitrary>], iteration_bounds = array<i64: 1>, scalar_prefetch = 0 : i64, scratch_operands = 0 : i64, tpu.core_type = #tpu.core_type<tc>, window_params = [{pipeline_mode = #tpu.pipeline_mode<synchronous>, transform_indices = @transform_0, window_bounds = array<i64: 2, 8192>}, {pipeline_mode = #tpu.pipeline_mode<synchronous>, transform_indices = @transform_1, window_bounds = array<i64: 8192, 13>}, {pipeline_mode = #tpu.pipeline_mode<synchronous>, transform_indices = @transform_2, window_bounds = array<i64: 1, 13>}, {pipeline_mode = #tpu.pipeline_mode<synchronous>, transform_indices = @transform_3, window_bounds = array<i64: 2, 13>}]} {
    %c0 = arith.constant 0 : index
    %c0_0 = arith.constant 0 : index
    %0 = vector.load %arg1[%c0, %c0_0] : memref<2x8192xbf16, #tpu.memory_space<vmem>>, vector<2x8192xbf16>
    %c0_1 = arith.constant 0 : index
    %c0_2 = arith.constant 0 : index
    %1 = vector.load %arg2[%c0_1, %c0_2] : memref<8192x13xbf16, #tpu.memory_space<vmem>>, vector<8192x13xbf16>
    %cst = arith.constant dense<0.000000e+00> : vector<2x13xf32>
    %2 = tpu.matmul %0, %1, %cst {dimension_numbers = #tpu.dot_dimension_numbers<[1], [0], [0], [1], [0, 0, 1, 1], [], []>} : vector<2x8192xbf16>, vector<8192x13xbf16>, vector<2x13xf32> -> vector<2x13xf32>
    %c0_3 = arith.constant 0 : index
    %c0_4 = arith.constant 0 : index
    %3 = vector.load %arg3[%c0_3, %c0_4] : memref<1x13xf32, #tpu.memory_space<vmem>>, vector<1x13xf32>
    %4 = vector.broadcast %3 : vector<1x13xf32> to vector<2x13xf32>
    %5 = arith.addf %2, %4 : vector<2x13xf32>
    %c0_5 = arith.constant 0 : index
    %c0_6 = arith.constant 0 : index
    %6 = vector.load %arg4[%c0_5, %c0_6] : memref<2x13xf32, #tpu.memory_space<vmem>>, vector<2x13xf32>
    tpu.vector_store %arg4[%c0_5, %c0_6], %5 {strides = array<i32>} : memref<2x13xf32, #tpu.memory_space<vmem>>, vector<2x13xf32>,
    return
  }
  func.func @transform_0(%arg0: i32) -> (i32, i32) {
    %c0_i32 = arith.constant 0 : i32
    %c0_i32_0 = arith.constant 0 : i32
    %c0_i32_1 = arith.constant 0 : i32
    return %c0_i32, %c0_i32_0 : i32, i32
  }
  func.func @transform_1(%arg0: i32) -> (i32, i32) {
    %c0_i32 = arith.constant 0 : i32
    %c0_i32_0 = arith.constant 0 : i32
    %c0_i32_1 = arith.constant 0 : i32
    return %c0_i32, %c0_i32_0 : i32, i32
  }
  func.func @transform_2(%arg0: i32) -> (i32, i32) {
    %c0_i32 = arith.constant 0 : i32
    %c0_i32_0 = arith.constant 0 : i32
    %c0_i32_1 = arith.constant 0 : i32
    return %c0_i32, %c0_i32_0 : i32, i32
  }
  func.func @transform_3(%arg0: i32) -> (i32, i32) {
    %c0_i32 = arith.constant 0 : i32
    %c0_i32_0 = arith.constant 0 : i32
    %c0_i32_1 = arith.constant 0 : i32
    return %c0_i32, %c0_i32_0 : i32, i32
  }
}

</mosaic_0001>

<llo_original>
// kernel: tpu_custom_call.1
$region0: #{tpu_custom_call.1}
  #allocation0 [shape = 'u32[]', space=smem, size = 0x4, offset = 0x4, fixed_abs, tag = 'smem constant byte address 0x4 - core index']
  #allocation1 [shape = 'u32[144,128]{1,0:T(1,128)}', space=vmem, size = 0x12000, scoped, tag = 'internal scratch']
  %s0 = inlined_call_operand.vmem [shape: bf16[2,8192], index: 0, kind: input, shape index: {}]
  %s1 = inlined_call_operand.vmem [shape: bf16[8192,13], index: 1, kind: input, shape index: {}]
  %s2 = inlined_call_operand.vmem [shape: f32[1,13], index: 2, kind: input, shape index: {}]
  %s3 = inlined_call_operand.hbm [shape: f32[2,13], index: 3, kind: output, shape index: {}]
  %s4 = sld [smem:[#allocation0]]
  $region22: #{tpu_custom_call.1} parent=0
    _
  %s6 = ssub.s32 1, %s4
  %s7 = scalar_select 0, %s6, %s4
  $region1: #{tpu_custom_call.1} parent=0
    #allocation2 [shape = 'u8[1024]{0}', space=vmem, size = 0x400, scoped, tag = 'output window, operand 0, single buffered']
    #allocation3 [shape = 's32[1]{0}', space=sflag, size = 0x4, scoped, tag = 'scoped memory for tpu_custom_call.1']
    %8 = vsyncpa [#allocation3], 0
    // Predicated region
    $region2: #{tpu_custom_call.1} parent=1 // pred_check
      _
    $region3: #{tpu_custom_call.1} parent=1 // pred_check_branch
      %10 = sbr.rel (0) target = $region5
    $region4: #{tpu_custom_call.1} parent=1 // pred_region
      _
    $region5: #{tpu_custom_call.1} parent=1 // pred_fallthru
      _
    // Predicated region
    $region6: #{tpu_custom_call.1} parent=1 // pred_check
      _
    $region7: #{tpu_custom_call.1} parent=1 // pred_check_branch
      %12 = sbr.rel (0) target = $region9
    $region8: #{tpu_custom_call.1} parent=1 // pred_region
      _
    $region9: #{tpu_custom_call.1} parent=1 // pred_fallthru
      _
    // Predicated region
    $region10: #{tpu_custom_call.1} parent=1 // pred_check
      _
    $region11: #{tpu_custom_call.1} parent=1 // pred_check_branch
      %14 = sbr.rel (0) target = $region13
    $region12: #{tpu_custom_call.1} parent=1 // pred_region
      _
    $region13: #{tpu_custom_call.1} parent=1 // pred_fallthru
      _
    %v16 = vld [vmem:[%s0] sm:$0xff]
    %v17 = vld [vmem:[%s0 + $0x8] sm:$0xff]
    %v18 = vld [vmem:[%s0 + $0x10] sm:$0xff]
    %v19 = vld [vmem:[%s0 + $0x18] sm:$0xff]
    %v20 = vld [vmem:[%s0 + $0x20] sm:$0xff]
    %v21 = vld [vmem:[%s0 + $0x28] sm:$0xff]
    %v22 = vld [vmem:[%s0 + $0x30] sm:$0xff]
    %v23 = vld [vmem:[%s0 + $0x38] sm:$0xff]
    %v24 = vld [vmem:[%s1] sm:$0xf]
    %v25 = vld [vmem:[%s1 + $0x4] sm:$0xf]
    %v26 = vld [vmem:[%s1 + $0x8] sm:$0xf]
    %v27 = vld [vmem:[%s1 + $0xc] sm:$0xf]
    %v28 = vld [vmem:[%s1 + $0x10] sm:$0xf]
    %v29 = vld [vmem:[%s1 + $0x14] sm:$0xf]
    %v30 = vld [vmem:[%s1 + $0x18] sm:$0xf]
    %v31 = vld [vmem:[%s1 + $0x1c] sm:$0xf]
    %v32 = vld [vmem:[%s1 + $0x20] sm:$0xf]
    %v33 = vld [vmem:[%s1 + $0x24] sm:$0xf]
    %v34 = vld [vmem:[%s1 + $0x28] sm:$0xf]
    %v35 = vld [vmem:[%s1 + $0x2c] sm:$0xf]
    %v36 = vld [vmem:[%s1 + $0x30] sm:$0xf]
    %v37 = vld [vmem:[%s1 + $0x34] sm:$0xf]
    %v38 = vld [vmem:[%s1 + $0x38] sm:$0xf]
    %v39 = vld [vmem:[%s1 + $0x3c] sm:$0xf]
    %v40 = vld [vmem:[%s1 + $0x40] sm:$0xf]
    %v41 = vld [vmem:[%s1 + $0x44] sm:$0xf]
    %v42 = vld [vmem:[%s1 + $0x48] sm:$0xf]
    %v43 = vld [vmem:[%s1 + $0x4c] sm:$0xf]
    %v44 = vld [vmem:[%s1 + $0x50] sm:$0xf]
    %v45 = vld [vmem:[%s1 + $0x54] sm:$0xf]
    %v46 = vld [vmem:[%s1 + $0x58] sm:$0xf]
    %v47 = vld [vmem:[%s1 + $0x5c] sm:$0xf]
    %v48 = vld [vmem:[%s1 + $0x60] sm:$0xf]
    %v49 = vld [vmem:[%s1 + $0x64] sm:$0xf]
    %v50 = vld [vmem:[%s1 + $0x68] sm:$0xf]
    %v51 = vld [vmem:[%s1 + $0x6c] sm:$0xf]
    %v52 = vld [vmem:[%s1 + $0x70] sm:$0xf]
    %v53 = vld [vmem:[%s1 + $0x74] sm:$0xf]
    %v54 = vld [vmem:[%s1 + $0x78] sm:$0xf]
    %v55 = vld [vmem:[%s1 + $0x7c] sm:$0xf]
    %v56 = vld [vmem:[%s1 + $0x80] sm:$0xf]
    %v57 = vld [vmem:[%s1 + $0x84] sm:$0xf]
    %v58 = vld [vmem:[%s1 + $0x88] sm:$0xf]
    %v59 = vld [vmem:[%s1 + $0x8c] sm:$0xf]
    %v60 = vld [vmem:[%s1 + $0x90] sm:$0xf]
    %v61 = vld [vmem:[%s1 + $0x94] sm:$0xf]
    %v62 = vld [vmem:[%s1 + $0x98] sm:$0xf]
    %v63 = vld [vmem:[%s1 + $0x9c] sm:$0xf]
    %v64 = vld [vmem:[%s1 + $0xa0] sm:$0xf]
    %v65 = vld [vmem:[%s1 + $0xa4] sm:$0xf]
    %v66 = vld [vmem:[%s1 + $0xa8] sm:$0xf]
    %v67 = vld [vmem:[%s1 + $0xac] sm:$0xf]
    %v68 = vld [vmem:[%s1 + $0xb0] sm:$0xf]
    %v69 = vld [vmem:[%s1 + $0xb4] sm:$0xf]
    %v70 = vld [vmem:[%s1 + $0xb8] sm:$0xf]
    %v71 = vld [vmem:[%s1 + $0xbc] sm:$0xf]
    %v72 = vld [vmem:[%s1 + $0xc0] sm:$0xf]
    %v73 = vld [vmem:[%s1 + $0xc4] sm:$0xf]
    %v74 = vld [vmem:[%s1 + $0xc8] sm:$0xf]
    %v75 = vld [vmem:[%s1 + $0xcc] sm:$0xf]
    %v76 = vld [vmem:[%s1 + $0xd0] sm:$0xf]
    %v77 = vld [vmem:[%s1 + $0xd4] sm:$0xf]
    %v78 = vld [vmem:[%s1 + $0xd8] sm:$0xf]
    %v79 = vld [vmem:[%s1 + $0xdc] sm:$0xf]
    %v80 = vld [vmem:[%s1 + $0xe0] sm:$0xf]
    %v81 = vld [vmem:[%s1 + $0xe4] sm:$0xf]
    %v82 = vld [vmem:[%s1 + $0xe8] sm:$0xf]
    %v83 = vld [vmem:[%s1 + $0xec] sm:$0xf]
    %v84 = vld [vmem:[%s1 + $0xf0] sm:$0xf]
    %v85 = vld [vmem:[%s1 + $0xf4] sm:$0xf]
    %v86 = vld [vmem:[%s1 + $0xf8] sm:$0xf]
    %v87 = vld [vmem:[%s1 + $0xfc] sm:$0xf]
    %v88 = vld [vmem:[%s1 + $0x100] sm:$0xf]
    %v89 = vld [vmem:[%s1 + $0x104] sm:$0xf]
    %v90 = vld [vmem:[%s1 + $0x108] sm:$0xf]
    %v91 = vld [vmem:[%s1 + $0x10c] sm:$0xf]
    %v92 = vld [vmem:[%s1 + $0x110] sm:$0xf]
    %v93 = vld [vmem:[%s1 + $0x114] sm:$0xf]
    %v94 = vld [vmem:[%s1 + $0x118] sm:$0xf]
    %v95 = vld [vmem:[%s1 + $0x11c] sm:$0xf]
    %v96 = vld [vmem:[%s1 + $0x120] sm:$0xf]
    %v97 = vld [vmem:[%s1 + $0x124] sm:$0xf]
    %v98 = vld [vmem:[%s1 + $0x128] sm:$0xf]
    %v99 = vld [vmem:[%s1 + $0x12c] sm:$0xf]
    %v100 = vld [vmem:[%s1 + $0x130] sm:$0xf]
    %v101 = vld [vmem:[%s1 + $0x134] sm:$0xf]
    %v102 = vld [vmem:[%s1 + $0x138] sm:$0xf]
    %v103 = vld [vmem:[%s1 + $0x13c] sm:$0xf]
    %v104 = vld [vmem:[%s1 + $0x140] sm:$0xf]
    %v105 = vld [vmem:[%s1 + $0x144] sm:$0xf]
    %v106 = vld [vmem:[%s1 + $0x148] sm:$0xf]
    %v107 = vld [vmem:[%s1 + $0x14c] sm:$0xf]
    %v108 = vld [vmem:[%s1 + $0x150] sm:$0xf]
    %v109 = vld [vmem:[%s1 + $0x154] sm:$0xf]
    %v110 = vld [vmem:[%s1 + $0x158] sm:$0xf]
    %v111 = vld [vmem:[%s1 + $0x15c] sm:$0xf]
    %v112 = vld [vmem:[%s1 + $0x160] sm:$0xf]
    %v113 = vld [vmem:[%s1 + $0x164] sm:$0xf]
    %v114 = vld [vmem:[%s1 + $0x168] sm:$0xf]
    %v115 = vld [vmem:[%s1 + $0x16c] sm:$0xf]
    %v116 = vld [vmem:[%s1 + $0x170] sm:$0xf]
    %v117 = vld [vmem:[%s1 + $0x174] sm:$0xf]
    %v118 = vld [vmem:[%s1 + $0x178] sm:$0xf]
    %v119 = vld [vmem:[%s1 + $0x17c] sm:$0xf]
    %v120 = vld [vmem:[%s1 + $0x180] sm:$0xf]
    %v121 = vld [vmem:[%s1 + $0x184] sm:$0xf]
    %v122 = vld [vmem:[%s1 + $0x188] sm:$0xf]
    %v123 = vld [vmem:[%s1 + $0x18c] sm:$0xf]
    %v124 = vld [vmem:[%s1 + $0x190] sm:$0xf]
    %v125 = vld [vmem:[%s1 + $0x194] sm:$0xf]
    %v126 = vld [vmem:[%s1 + $0x198] sm:$0xf]
    %v127 = vld [vmem:[%s1 + $0x19c] sm:$0xf]
    %v128 = vld [vmem:[%s1 + $0x1a0] sm:$0xf]
    %v129 = vld [vmem:[%s1 + $0x1a4] sm:$0xf]
    %v130 = vld [vmem:[%s1 + $0x1a8] sm:$0xf]
    %v131 = vld [vmem:[%s1 + $0x1ac] sm:$0xf]
    %v132 = vld [vmem:[%s1 + $0x1b0] sm:$0xf]
    %v133 = vld [vmem:[%s1 + $0x1b4] sm:$0xf]
    %v134 = vld [vmem:[%s1 + $0x1b8] sm:$0xf]
    %v135 = vld [vmem:[%s1 + $0x1bc] sm:$0xf]
    %v136 = vld [vmem:[%s1 + $0x1c0] sm:$0xf]
    %v137 = vld [vmem:[%s1 + $0x1c4] sm:$0xf]
    %v138 = vld [vmem:[%s1 + $0x1c8] sm:$0xf]
    %v139 = vld [vmem:[%s1 + $0x1cc] sm:$0xf]
    %v140 = vld [vmem:[%s1 + $0x1d0] sm:$0xf]
    %v141 = vld [vmem:[%s1 + $0x1d4] sm:$0xf]
    %v142 = vld [vmem:[%s1 + $0x1d8] sm:$0xf]
    %v143 = vld [vmem:[%s1 + $0x1dc] sm:$0xf]
    %v144 = vld [vmem:[%s1 + $0x1e0] sm:$0xf]
    %v145 = vld [vmem:[%s1 + $0x1e4] sm:$0xf]
    %v146 = vld [vmem:[%s1 + $0x1e8] sm:$0xf]
    %v147 = vld [vmem:[%s1 + $0x1ec] sm:$0xf]
    %v148 = vld [vmem:[%s1 + $0x1f0] sm:$0xf]
    %v149 = vld [vmem:[%s1 + $0x1f4] sm:$0xf]
    %v150 = vld [vmem:[%s1 + $0x1f8] sm:$0xf]
    %v151 = vld [vmem:[%s1 + $0x1fc] sm:$0xf]
    %v152 = vld [vmem:[%s1 + $0x200] sm:$0xf]
    %v153 = vld [vmem:[%s1 + $0x204] sm:$0xf]
    %v154 = vld [vmem:[%s1 + $0x208] sm:$0xf]
    %v155 = vld [vmem:[%s1 + $0x20c] sm:$0xf]
    %v156 = vld [vmem:[%s1 + $0x210] sm:$0xf]
    %v157 = vld [vmem:[%s1 + $0x214] sm:$0xf]
    %v158 = vld [vmem:[%s1 + $0x218] sm:$0xf]
    %v159 = vld [vmem:[%s1 + $0x21c] sm:$0xf]
    %v160 = vld [vmem:[%s1 + $0x220] sm:$0xf]
    %v161 = vld [vmem:[%s1 + $0x224] sm:$0xf]
    %v162 = vld [vmem:[%s1 + $0x228] sm:$0xf]
    %v163 = vld [vmem:[%s1 + $0x22c] sm:$0xf]
    %v164 = vld [vmem:[%s1 + $0x230] sm:$0xf]
    %v165 = vld [vmem:[%s1 + $0x234] sm:$0xf]
    %v166 = vld [vmem:[%s1 + $0x238] sm:$0xf]
    %v167 = vld [vmem:[%s1 + $0x23c] sm:$0xf]
    %v168 = vld [vmem:[%s1 + $0x240] sm:$0xf]
    %v169 = vld [vmem:[%s1 + $0x244] sm:$0xf]
    %v170 = vld [vmem:[%s1 + $0x248] sm:$0xf]
    %v171 = vld [vmem:[%s1 + $0x24c] sm:$0xf]
    %v172 = vld [vmem:[%s1 + $0x250] sm:$0xf]
    %v173 = vld [vmem:[%s1 + $0x254] sm:$0xf]
    %v174 = vld [vmem:[%s1 + $0x258] sm:$0xf]
    %v175 = vld [vmem:[%s1 + $0x25c] sm:$0xf]
    %v176 = vld [vmem:[%s1 + $0x260] sm:$0xf]
    %v177 = vld [vmem:[%s1 + $0x264] sm:$0xf]
    %v178 = vld [vmem:[%s1 + $0x268] sm:$0xf]
    %v179 = vld [vmem:[%s1 + $0x26c] sm:$0xf]
    %v180 = vld [vmem:[%s1 + $0x270] sm:$0xf]
    %v181 = vld [vmem:[%s1 + $0x274] sm:$0xf]
    %v182 = vld [vmem:[%s1 + $0x278] sm:$0xf]
    %v183 = vld [vmem:[%s1 + $0x27c] sm:$0xf]
    %v184 = vld [vmem:[%s1 + $0x280] sm:$0xf]
    %v185 = vld [vmem:[%s1 + $0x284] sm:$0xf]
    %v186 = vld [vmem:[%s1 + $0x288] sm:$0xf]
    %v187 = vld [vmem:[%s1 + $0x28c] sm:$0xf]
    %v188 = vld [vmem:[%s1 + $0x290] sm:$0xf]
    %v189 = vld [vmem:[%s1 + $0x294] sm:$0xf]
    %v190 = vld [vmem:[%s1 + $0x298] sm:$0xf]
    %v191 = vld [vmem:[%s1 + $0x29c] sm:$0xf]
    %v192 = vld [vmem:[%s1 + $0x2a0] sm:$0xf]
    %v193 = vld [vmem:[%s1 + $0x2a4] sm:$0xf]
    %v194 = vld [vmem:[%s1 + $0x2a8] sm:$0xf]
    %v195 = vld [vmem:[%s1 + $0x2ac] sm:$0xf]
    %v196 = vld [vmem:[%s1 + $0x2b0] sm:$0xf]
    %v197 = vld [vmem:[%s1 + $0x2b4] sm:$0xf]
    %v198 = vld [vmem:[%s1 + $0x2b8] sm:$0xf]
    %v199 = vld [vmem:[%s1 + $0x2bc] sm:$0xf]
    %v200 = vld [vmem:[%s1 + $0x2c0] sm:$0xf]
    %v201 = vld [vmem:[%s1 + $0x2c4] sm:$0xf]
    %v202 = vld [vmem:[%s1 + $0x2c8] sm:$0xf]
    %v203 = vld [vmem:[%s1 + $0x2cc] sm:$0xf]
    %v204 = vld [vmem:[%s1 + $0x2d0] sm:$0xf]
    %v205 = vld [vmem:[%s1 + $0x2d4] sm:$0xf]
    %v206 = vld [vmem:[%s1 + $0x2d8] sm:$0xf]
    %v207 = vld [vmem:[%s1 + $0x2dc] sm:$0xf]
    %v208 = vld [vmem:[%s1 + $0x2e0] sm:$0xf]
    %v209 = vld [vmem:[%s1 + $0x2e4] sm:$0xf]
    %v210 = vld [vmem:[%s1 + $0x2e8] sm:$0xf]
    %v211 = vld [vmem:[%s1 + $0x2ec] sm:$0xf]
    %v212 = vld [vmem:[%s1 + $0x2f0] sm:$0xf]
    %v213 = vld [vmem:[%s1 + $0x2f4] sm:$0xf]
    %v214 = vld [vmem:[%s1 + $0x2f8] sm:$0xf]
    %v215 = vld [vmem:[%s1 + $0x2fc] sm:$0xf]
    %v216 = vld [vmem:[%s1 + $0x300] sm:$0xf]
    %v217 = vld [vmem:[%s1 + $0x304] sm:$0xf]
    %v218 = vld [vmem:[%s1 + $0x308] sm:$0xf]
    %v219 = vld [vmem:[%s1 + $0x30c] sm:$0xf]
    %v220 = vld [vmem:[%s1 + $0x310] sm:$0xf]
    %v221 = vld [vmem:[%s1 + $0x314] sm:$0xf]
    %v222 = vld [vmem:[%s1 + $0x318] sm:$0xf]
    %v223 = vld [vmem:[%s1 + $0x31c] sm:$0xf]
    %v224 = vld [vmem:[%s1 + $0x320] sm:$0xf]
    %v225 = vld [vmem:[%s1 + $0x324] sm:$0xf]
    %v226 = vld [vmem:[%s1 + $0x328] sm:$0xf]
    %v227 = vld [vmem:[%s1 + $0x32c] sm:$0xf]
    %v228 = vld [vmem:[%s1 + $0x330] sm:$0xf]
    %v229 = vld [vmem:[%s1 + $0x334] sm:$0xf]
    %v230 = vld [vmem:[%s1 + $0x338] sm:$0xf]
    %v231 = vld [vmem:[%s1 + $0x33c] sm:$0xf]
    %v232 = vld [vmem:[%s1 + $0x340] sm:$0xf]
    %v233 = vld [vmem:[%s1 + $0x344] sm:$0xf]
    %v234 = vld [vmem:[%s1 + $0x348] sm:$0xf]
    %v235 = vld [vmem:[%s1 + $0x34c] sm:$0xf]
    %v236 = vld [vmem:[%s1 + $0x350] sm:$0xf]
    %v237 = vld [vmem:[%s1 + $0x354] sm:$0xf]
    %v238 = vld [vmem:[%s1 + $0x358] sm:$0xf]
    %v239 = vld [vmem:[%s1 + $0x35c] sm:$0xf]
    %v240 = vld [vmem:[%s1 + $0x360] sm:$0xf]
    %v241 = vld [vmem:[%s1 + $0x364] sm:$0xf]
    %v242 = vld [vmem:[%s1 + $0x368] sm:$0xf]
    %v243 = vld [vmem:[%s1 + $0x36c] sm:$0xf]
    %v244 = vld [vmem:[%s1 + $0x370] sm:$0xf]
    %v245 = vld [vmem:[%s1 + $0x374] sm:$0xf]
    %v246 = vld [vmem:[%s1 + $0x378] sm:$0xf]
    %v247 = vld [vmem:[%s1 + $0x37c] sm:$0xf]
    %v248 = vld [vmem:[%s1 + $0x380] sm:$0xf]
    %v249 = vld [vmem:[%s1 + $0x384] sm:$0xf]
    %v250 = vld [vmem:[%s1 + $0x388] sm:$0xf]
    %v251 = vld [vmem:[%s1 + $0x38c] sm:$0xf]
    %v252 = vld [vmem:[%s1 + $0x390] sm:$0xf]
    %v253 = vld [vmem:[%s1 + $0x394] sm:$0xf]
    %v254 = vld [vmem:[%s1 + $0x398] sm:$0xf]
    %v255 = vld [vmem:[%s1 + $0x39c] sm:$0xf]
    %v256 = vld [vmem:[%s1 + $0x3a0] sm:$0xf]
    %v257 = vld [vmem:[%s1 + $0x3a4] sm:$0xf]
    %v258 = vld [vmem:[%s1 + $0x3a8] sm:$0xf]
    %v259 = vld [vmem:[%s1 + $0x3ac] sm:$0xf]
    %v260 = vld [vmem:[%s1 + $0x3b0] sm:$0xf]
    %v261 = vld [vmem:[%s1 + $0x3b4] sm:$0xf]
    %v262 = vld [vmem:[%s1 + $0x3b8] sm:$0xf]
    %v263 = vld [vmem:[%s1 + $0x3bc] sm:$0xf]
    %v264 = vld [vmem:[%s1 + $0x3c0] sm:$0xf]
    %v265 = vld [vmem:[%s1 + $0x3c4] sm:$0xf]
    %v266 = vld [vmem:[%s1 + $0x3c8] sm:$0xf]
    %v267 = vld [vmem:[%s1 + $0x3cc] sm:$0xf]
    %v268 = vld [vmem:[%s1 + $0x3d0] sm:$0xf]
    %v269 = vld [vmem:[%s1 + $0x3d4] sm:$0xf]
    %v270 = vld [vmem:[%s1 + $0x3d8] sm:$0xf]
    %v271 = vld [vmem:[%s1 + $0x3dc] sm:$0xf]
    %v272 = vld [vmem:[%s1 + $0x3e0] sm:$0xf]
    %v273 = vld [vmem:[%s1 + $0x3e4] sm:$0xf]
    %v274 = vld [vmem:[%s1 + $0x3e8] sm:$0xf]
    %v275 = vld [vmem:[%s1 + $0x3ec] sm:$0xf]
    %v276 = vld [vmem:[%s1 + $0x3f0] sm:$0xf]
    %v277 = vld [vmem:[%s1 + $0x3f4] sm:$0xf]
    %v278 = vld [vmem:[%s1 + $0x3f8] sm:$0xf]
    %v279 = vld [vmem:[%s1 + $0x3fc] sm:$0xf]
    %v280 = vld [vmem:[%s1 + $0x400] sm:$0xf]
    %v281 = vld [vmem:[%s1 + $0x404] sm:$0xf]
    %v282 = vld [vmem:[%s1 + $0x408] sm:$0xf]
    %v283 = vld [vmem:[%s1 + $0x40c] sm:$0xf]
    %v284 = vld [vmem:[%s1 + $0x410] sm:$0xf]
    %v285 = vld [vmem:[%s1 + $0x414] sm:$0xf]
    %v286 = vld [vmem:[%s1 + $0x418] sm:$0xf]
    %v287 = vld [vmem:[%s1 + $0x41c] sm:$0xf]
    %v288 = vld [vmem:[%s1 + $0x420] sm:$0xf]
    %v289 = vld [vmem:[%s1 + $0x424] sm:$0xf]
    %v290 = vld [vmem:[%s1 + $0x428] sm:$0xf]
    %v291 = vld [vmem:[%s1 + $0x42c] sm:$0xf]
    %v292 = vld [vmem:[%s1 + $0x430] sm:$0xf]
    %v293 = vld [vmem:[%s1 + $0x434] sm:$0xf]
    %v294 = vld [vmem:[%s1 + $0x438] sm:$0xf]
    %v295 = vld [vmem:[%s1 + $0x43c] sm:$0xf]
    %v296 = vld [vmem:[%s1 + $0x440] sm:$0xf]
    %v297 = vld [vmem:[%s1 + $0x444] sm:$0xf]
    %v298 = vld [vmem:[%s1 + $0x448] sm:$0xf]
    %v299 = vld [vmem:[%s1 + $0x44c] sm:$0xf]
    %v300 = vld [vmem:[%s1 + $0x450] sm:$0xf]
    %v301 = vld [vmem:[%s1 + $0x454] sm:$0xf]
    %v302 = vld [vmem:[%s1 + $0x458] sm:$0xf]
    %v303 = vld [vmem:[%s1 + $0x45c] sm:$0xf]
    %v304 = vld [vmem:[%s1 + $0x460] sm:$0xf]
    %v305 = vld [vmem:[%s1 + $0x464] sm:$0xf]
    %v306 = vld [vmem:[%s1 + $0x468] sm:$0xf]
    %v307 = vld [vmem:[%s1 + $0x46c] sm:$0xf]
    %v308 = vld [vmem:[%s1 + $0x470] sm:$0xf]
    %v309 = vld [vmem:[%s1 + $0x474] sm:$0xf]
    %v310 = vld [vmem:[%s1 + $0x478] sm:$0xf]
    %v311 = vld [vmem:[%s1 + $0x47c] sm:$0xf]
    %v312 = vld [vmem:[%s1 + $0x480] sm:$0xf]
    %v313 = vld [vmem:[%s1 + $0x484] sm:$0xf]
    %v314 = vld [vmem:[%s1 + $0x488] sm:$0xf]
    %v315 = vld [vmem:[%s1 + $0x48c] sm:$0xf]
    %v316 = vld [vmem:[%s1 + $0x490] sm:$0xf]
    %v317 = vld [vmem:[%s1 + $0x494] sm:$0xf]
    %v318 = vld [vmem:[%s1 + $0x498] sm:$0xf]
    %v319 = vld [vmem:[%s1 + $0x49c] sm:$0xf]
    %v320 = vld [vmem:[%s1 + $0x4a0] sm:$0xf]
    %v321 = vld [vmem:[%s1 + $0x4a4] sm:$0xf]
    %v322 = vld [vmem:[%s1 + $0x4a8] sm:$0xf]
    %v323 = vld [vmem:[%s1 + $0x4ac] sm:$0xf]
    %v324 = vld [vmem:[%s1 + $0x4b0] sm:$0xf]
    %v325 = vld [vmem:[%s1 + $0x4b4] sm:$0xf]
    %v326 = vld [vmem:[%s1 + $0x4b8] sm:$0xf]
    %v327 = vld [vmem:[%s1 + $0x4bc] sm:$0xf]
    %v328 = vld [vmem:[%s1 + $0x4c0] sm:$0xf]
    %v329 = vld [vmem:[%s1 + $0x4c4] sm:$0xf]
    %v330 = vld [vmem:[%s1 + $0x4c8] sm:$0xf]
    %v331 = vld [vmem:[%s1 + $0x4cc] sm:$0xf]
    %v332 = vld [vmem:[%s1 + $0x4d0] sm:$0xf]
    %v333 = vld [vmem:[%s1 + $0x4d4] sm:$0xf]
    %v334 = vld [vmem:[%s1 + $0x4d8] sm:$0xf]
    %v335 = vld [vmem:[%s1 + $0x4dc] sm:$0xf]
    %v336 = vld [vmem:[%s1 + $0x4e0] sm:$0xf]
    %v337 = vld [vmem:[%s1 + $0x4e4] sm:$0xf]
    %v338 = vld [vmem:[%s1 + $0x4e8] sm:$0xf]
    %v339 = vld [vmem:[%s1 + $0x4ec] sm:$0xf]
    %v340 = vld [vmem:[%s1 + $0x4f0] sm:$0xf]
    %v341 = vld [vmem:[%s1 + $0x4f4] sm:$0xf]
    %v342 = vld [vmem:[%s1 + $0x4f8] sm:$0xf]
    %v343 = vld [vmem:[%s1 + $0x4fc] sm:$0xf]
    %v344 = vld [vmem:[%s1 + $0x500] sm:$0xf]
    %v345 = vld [vmem:[%s1 + $0x504] sm:$0xf]
    %v346 = vld [vmem:[%s1 + $0x508] sm:$0xf]
    %v347 = vld [vmem:[%s1 + $0x50c] sm:$0xf]
    %v348 = vld [vmem:[%s1 + $0x510] sm:$0xf]
    %v349 = vld [vmem:[%s1 + $0x514] sm:$0xf]
    %v350 = vld [vmem:[%s1 + $0x518] sm:$0xf]
    %v351 = vld [vmem:[%s1 + $0x51c] sm:$0xf]
    %v352 = vld [vmem:[%s1 + $0x520] sm:$0xf]
    %v353 = vld [vmem:[%s1 + $0x524] sm:$0xf]
    %v354 = vld [vmem:[%s1 + $0x528] sm:$0xf]
    %v355 = vld [vmem:[%s1 + $0x52c] sm:$0xf]
    %v356 = vld [vmem:[%s1 + $0x530] sm:$0xf]
    %v357 = vld [vmem:[%s1 + $0x534] sm:$0xf]
    %v358 = vld [vmem:[%s1 + $0x538] sm:$0xf]
    %v359 = vld [vmem:[%s1 + $0x53c] sm:$0xf]
    %v360 = vld [vmem:[%s1 + $0x540] sm:$0xf]
    %v361 = vld [vmem:[%s1 + $0x544] sm:$0xf]
    %v362 = vld [vmem:[%s1 + $0x548] sm:$0xf]
    %v363 = vld [vmem:[%s1 + $0x54c] sm:$0xf]
    %v364 = vld [vmem:[%s1 + $0x550] sm:$0xf]
    %v365 = vld [vmem:[%s1 + $0x554] sm:$0xf]
    %v366 = vld [vmem:[%s1 + $0x558] sm:$0xf]
    %v367 = vld [vmem:[%s1 + $0x55c] sm:$0xf]
    %v368 = vld [vmem:[%s1 + $0x560] sm:$0xf]
    %v369 = vld [vmem:[%s1 + $0x564] sm:$0xf]
    %v370 = vld [vmem:[%s1 + $0x568] sm:$0xf]
    %v371 = vld [vmem:[%s1 + $0x56c] sm:$0xf]
    %v372 = vld [vmem:[%s1 + $0x570] sm:$0xf]
    %v373 = vld [vmem:[%s1 + $0x574] sm:$0xf]
    %v374 = vld [vmem:[%s1 + $0x578] sm:$0xf]
    %v375 = vld [vmem:[%s1 + $0x57c] sm:$0xf]
    %v376 = vld [vmem:[%s1 + $0x580] sm:$0xf]
    %v377 = vld [vmem:[%s1 + $0x584] sm:$0xf]
    %v378 = vld [vmem:[%s1 + $0x588] sm:$0xf]
    %v379 = vld [vmem:[%s1 + $0x58c] sm:$0xf]
    %v380 = vld [vmem:[%s1 + $0x590] sm:$0xf]
    %v381 = vld [vmem:[%s1 + $0x594] sm:$0xf]
    %v382 = vld [vmem:[%s1 + $0x598] sm:$0xf]
    %v383 = vld [vmem:[%s1 + $0x59c] sm:$0xf]
    %v384 = vld [vmem:[%s1 + $0x5a0] sm:$0xf]
    %v385 = vld [vmem:[%s1 + $0x5a4] sm:$0xf]
    %v386 = vld [vmem:[%s1 + $0x5a8] sm:$0xf]
    %v387 = vld [vmem:[%s1 + $0x5ac] sm:$0xf]
    %v388 = vld [vmem:[%s1 + $0x5b0] sm:$0xf]
    %v389 = vld [vmem:[%s1 + $0x5b4] sm:$0xf]
    %v390 = vld [vmem:[%s1 + $0x5b8] sm:$0xf]
    %v391 = vld [vmem:[%s1 + $0x5bc] sm:$0xf]
    %v392 = vld [vmem:[%s1 + $0x5c0] sm:$0xf]
    %v393 = vld [vmem:[%s1 + $0x5c4] sm:$0xf]
    %v394 = vld [vmem:[%s1 + $0x5c8] sm:$0xf]
    %v395 = vld [vmem:[%s1 + $0x5cc] sm:$0xf]
    %v396 = vld [vmem:[%s1 + $0x5d0] sm:$0xf]
    %v397 = vld [vmem:[%s1 + $0x5d4] sm:$0xf]
    %v398 = vld [vmem:[%s1 + $0x5d8] sm:$0xf]
    %v399 = vld [vmem:[%s1 + $0x5dc] sm:$0xf]
    %v400 = vld [vmem:[%s1 + $0x5e0] sm:$0xf]
    %v401 = vld [vmem:[%s1 + $0x5e4] sm:$0xf]
    %v402 = vld [vmem:[%s1 + $0x5e8] sm:$0xf]
    %v403 = vld [vmem:[%s1 + $0x5ec] sm:$0xf]
    %v404 = vld [vmem:[%s1 + $0x5f0] sm:$0xf]
    %v405 = vld [vmem:[%s1 + $0x5f4] sm:$0xf]
    %v406 = vld [vmem:[%s1 + $0x5f8] sm:$0xf]
    %v407 = vld [vmem:[%s1 + $0x5fc] sm:$0xf]
    %v408 = vld [vmem:[%s1 + $0x600] sm:$0xf]
    %v409 = vld [vmem:[%s1 + $0x604] sm:$0xf]
    %v410 = vld [vmem:[%s1 + $0x608] sm:$0xf]
    %v411 = vld [vmem:[%s1 + $0x60c] sm:$0xf]
    %v412 = vld [vmem:[%s1 + $0x610] sm:$0xf]
    %v413 = vld [vmem:[%s1 + $0x614] sm:$0xf]
    %v414 = vld [vmem:[%s1 + $0x618] sm:$0xf]
    %v415 = vld [vmem:[%s1 + $0x61c] sm:$0xf]
    %v416 = vld [vmem:[%s1 + $0x620] sm:$0xf]
    %v417 = vld [vmem:[%s1 + $0x624] sm:$0xf]
    %v418 = vld [vmem:[%s1 + $0x628] sm:$0xf]
    %v419 = vld [vmem:[%s1 + $0x62c] sm:$0xf]
    %v420 = vld [vmem:[%s1 + $0x630] sm:$0xf]
    %v421 = vld [vmem:[%s1 + $0x634] sm:$0xf]
    %v422 = vld [vmem:[%s1 + $0x638] sm:$0xf]
    %v423 = vld [vmem:[%s1 + $0x63c] sm:$0xf]
    %v424 = vld [vmem:[%s1 + $0x640] sm:$0xf]
    %v425 = vld [vmem:[%s1 + $0x644] sm:$0xf]
    %v426 = vld [vmem:[%s1 + $0x648] sm:$0xf]
    %v427 = vld [vmem:[%s1 + $0x64c] sm:$0xf]
    %v428 = vld [vmem:[%s1 + $0x650] sm:$0xf]
    %v429 = vld [vmem:[%s1 + $0x654] sm:$0xf]
    %v430 = vld [vmem:[%s1 + $0x658] sm:$0xf]
    %v431 = vld [vmem:[%s1 + $0x65c] sm:$0xf]
    %v432 = vld [vmem:[%s1 + $0x660] sm:$0xf]
    %v433 = vld [vmem:[%s1 + $0x664] sm:$0xf]
    %v434 = vld [vmem:[%s1 + $0x668] sm:$0xf]
    %v435 = vld [vmem:[%s1 + $0x66c] sm:$0xf]
    %v436 = vld [vmem:[%s1 + $0x670] sm:$0xf]
    %v437 = vld [vmem:[%s1 + $0x674] sm:$0xf]
    %v438 = vld [vmem:[%s1 + $0x678] sm:$0xf]
    %v439 = vld [vmem:[%s1 + $0x67c] sm:$0xf]
    %v440 = vld [vmem:[%s1 + $0x680] sm:$0xf]
    %v441 = vld [vmem:[%s1 + $0x684] sm:$0xf]
    %v442 = vld [vmem:[%s1 + $0x688] sm:$0xf]
    %v443 = vld [vmem:[%s1 + $0x68c] sm:$0xf]
    %v444 = vld [vmem:[%s1 + $0x690] sm:$0xf]
    %v445 = vld [vmem:[%s1 + $0x694] sm:$0xf]
    %v446 = vld [vmem:[%s1 + $0x698] sm:$0xf]
    %v447 = vld [vmem:[%s1 + $0x69c] sm:$0xf]
    %v448 = vld [vmem:[%s1 + $0x6a0] sm:$0xf]
    %v449 = vld [vmem:[%s1 + $0x6a4] sm:$0xf]
    %v450 = vld [vmem:[%s1 + $0x6a8] sm:$0xf]
    %v451 = vld [vmem:[%s1 + $0x6ac] sm:$0xf]
    %v452 = vld [vmem:[%s1 + $0x6b0] sm:$0xf]
    %v453 = vld [vmem:[%s1 + $0x6b4] sm:$0xf]
    %v454 = vld [vmem:[%s1 + $0x6b8] sm:$0xf]
    %v455 = vld [vmem:[%s1 + $0x6bc] sm:$0xf]
    %v456 = vld [vmem:[%s1 + $0x6c0] sm:$0xf]
    %v457 = vld [vmem:[%s1 + $0x6c4] sm:$0xf]
    %v458 = vld [vmem:[%s1 + $0x6c8] sm:$0xf]
    %v459 = vld [vmem:[%s1 + $0x6cc] sm:$0xf]
    %v460 = vld [vmem:[%s1 + $0x6d0] sm:$0xf]
    %v461 = vld [vmem:[%s1 + $0x6d4] sm:$0xf]
    %v462 = vld [vmem:[%s1 + $0x6d8] sm:$0xf]
    %v463 = vld [vmem:[%s1 + $0x6dc] sm:$0xf]
    %v464 = vld [vmem:[%s1 + $0x6e0] sm:$0xf]
    %v465 = vld [vmem:[%s1 + $0x6e4] sm:$0xf]
    %v466 = vld [vmem:[%s1 + $0x6e8] sm:$0xf]
    %v467 = vld [vmem:[%s1 + $0x6ec] sm:$0xf]
    %v468 = vld [vmem:[%s1 + $0x6f0] sm:$0xf]
    %v469 = vld [vmem:[%s1 + $0x6f4] sm:$0xf]
    %v470 = vld [vmem:[%s1 + $0x6f8] sm:$0xf]
    %v471 = vld [vmem:[%s1 + $0x6fc] sm:$0xf]
    %v472 = vld [vmem:[%s1 + $0x700] sm:$0xf]
    %v473 = vld [vmem:[%s1 + $0x704] sm:$0xf]
    %v474 = vld [vmem:[%s1 + $0x708] sm:$0xf]
    %v475 = vld [vmem:[%s1 + $0x70c] sm:$0xf]
    %v476 = vld [vmem:[%s1 + $0x710] sm:$0xf]
    %v477 = vld [vmem:[%s1 + $0x714] sm:$0xf]
    %v478 = vld [vmem:[%s1 + $0x718] sm:$0xf]
    %v479 = vld [vmem:[%s1 + $0x71c] sm:$0xf]
    %v480 = vld [vmem:[%s1 + $0x720] sm:$0xf]
    %v481 = vld [vmem:[%s1 + $0x724] sm:$0xf]
    %v482 = vld [vmem:[%s1 + $0x728] sm:$0xf]
    %v483 = vld [vmem:[%s1 + $0x72c] sm:$0xf]
    %v484 = vld [vmem:[%s1 + $0x730] sm:$0xf]
    %v485 = vld [vmem:[%s1 + $0x734] sm:$0xf]
    %v486 = vld [vmem:[%s1 + $0x738] sm:$0xf]
    %v487 = vld [vmem:[%s1 + $0x73c] sm:$0xf]
    %v488 = vld [vmem:[%s1 + $0x740] sm:$0xf]
    %v489 = vld [vmem:[%s1 + $0x744] sm:$0xf]
    %v490 = vld [vmem:[%s1 + $0x748] sm:$0xf]
    %v491 = vld [vmem:[%s1 + $0x74c] sm:$0xf]
    %v492 = vld [vmem:[%s1 + $0x750] sm:$0xf]
    %v493 = vld [vmem:[%s1 + $0x754] sm:$0xf]
    %v494 = vld [vmem:[%s1 + $0x758] sm:$0xf]
    %v495 = vld [vmem:[%s1 + $0x75c] sm:$0xf]
    %v496 = vld [vmem:[%s1 + $0x760] sm:$0xf]
    %v497 = vld [vmem:[%s1 + $0x764] sm:$0xf]
    %v498 = vld [vmem:[%s1 + $0x768] sm:$0xf]
    %v499 = vld [vmem:[%s1 + $0x76c] sm:$0xf]
    %v500 = vld [vmem:[%s1 + $0x770] sm:$0xf]
    %v501 = vld [vmem:[%s1 + $0x774] sm:$0xf]
    %v502 = vld [vmem:[%s1 + $0x778] sm:$0xf]
    %v503 = vld [vmem:[%s1 + $0x77c] sm:$0xf]
    %v504 = vld [vmem:[%s1 + $0x780] sm:$0xf]
    %v505 = vld [vmem:[%s1 + $0x784] sm:$0xf]
    %v506 = vld [vmem:[%s1 + $0x788] sm:$0xf]
    %v507 = vld [vmem:[%s1 + $0x78c] sm:$0xf]
    %v508 = vld [vmem:[%s1 + $0x790] sm:$0xf]
    %v509 = vld [vmem:[%s1 + $0x794] sm:$0xf]
    %v510 = vld [vmem:[%s1 + $0x798] sm:$0xf]
    %v511 = vld [vmem:[%s1 + $0x79c] sm:$0xf]
    %v512 = vld [vmem:[%s1 + $0x7a0] sm:$0xf]
    %v513 = vld [vmem:[%s1 + $0x7a4] sm:$0xf]
    %v514 = vld [vmem:[%s1 + $0x7a8] sm:$0xf]
    %v515 = vld [vmem:[%s1 + $0x7ac] sm:$0xf]
    %v516 = vld [vmem:[%s1 + $0x7b0] sm:$0xf]
    %v517 = vld [vmem:[%s1 + $0x7b4] sm:$0xf]
    %v518 = vld [vmem:[%s1 + $0x7b8] sm:$0xf]
    %v519 = vld [vmem:[%s1 + $0x7bc] sm:$0xf]
    %v520 = vld [vmem:[%s1 + $0x7c0] sm:$0xf]
    %v521 = vld [vmem:[%s1 + $0x7c4] sm:$0xf]
    %v522 = vld [vmem:[%s1 + $0x7c8] sm:$0xf]
    %v523 = vld [vmem:[%s1 + $0x7cc] sm:$0xf]
    %v524 = vld [vmem:[%s1 + $0x7d0] sm:$0xf]
    %v525 = vld [vmem:[%s1 + $0x7d4] sm:$0xf]
    %v526 = vld [vmem:[%s1 + $0x7d8] sm:$0xf]
    %v527 = vld [vmem:[%s1 + $0x7dc] sm:$0xf]
    %v528 = vld [vmem:[%s1 + $0x7e0] sm:$0xf]
    %v529 = vld [vmem:[%s1 + $0x7e4] sm:$0xf]
    %v530 = vld [vmem:[%s1 + $0x7e8] sm:$0xf]
    %v531 = vld [vmem:[%s1 + $0x7ec] sm:$0xf]
    %v532 = vld [vmem:[%s1 + $0x7f0] sm:$0xf]
    %v533 = vld [vmem:[%s1 + $0x7f4] sm:$0xf]
    %v534 = vld [vmem:[%s1 + $0x7f8] sm:$0xf]
    %v535 = vld [vmem:[%s1 + $0x7fc] sm:$0xf]
    %v536 = vld [vmem:[%s1 + $0x800] sm:$0xf]
    %v537 = vld [vmem:[%s1 + $0x804] sm:$0xf]
    %v538 = vld [vmem:[%s1 + $0x808] sm:$0xf]
    %v539 = vld [vmem:[%s1 + $0x80c] sm:$0xf]
    %v540 = vld [vmem:[%s1 + $0x810] sm:$0xf]
    %v541 = vld [vmem:[%s1 + $0x814] sm:$0xf]
    %v542 = vld [vmem:[%s1 + $0x818] sm:$0xf]
    %v543 = vld [vmem:[%s1 + $0x81c] sm:$0xf]
    %v544 = vld [vmem:[%s1 + $0x820] sm:$0xf]
    %v545 = vld [vmem:[%s1 + $0x824] sm:$0xf]
    %v546 = vld [vmem:[%s1 + $0x828] sm:$0xf]
    %v547 = vld [vmem:[%s1 + $0x82c] sm:$0xf]
    %v548 = vld [vmem:[%s1 + $0x830] sm:$0xf]
    %v549 = vld [vmem:[%s1 + $0x834] sm:$0xf]
    %v550 = vld [vmem:[%s1 + $0x838] sm:$0xf]
    %v551 = vld [vmem:[%s1 + $0x83c] sm:$0xf]
    %v552 = vld [vmem:[%s1 + $0x840] sm:$0xf]
    %v553 = vld [vmem:[%s1 + $0x844] sm:$0xf]
    %v554 = vld [vmem:[%s1 + $0x848] sm:$0xf]
    %v555 = vld [vmem:[%s1 + $0x84c] sm:$0xf]
    %v556 = vld [vmem:[%s1 + $0x850] sm:$0xf]
    %v557 = vld [vmem:[%s1 + $0x854] sm:$0xf]
    %v558 = vld [vmem:[%s1 + $0x858] sm:$0xf]
    %v559 = vld [vmem:[%s1 + $0x85c] sm:$0xf]
    %v560 = vld [vmem:[%s1 + $0x860] sm:$0xf]
    %v561 = vld [vmem:[%s1 + $0x864] sm:$0xf]
    %v562 = vld [vmem:[%s1 + $0x868] sm:$0xf]
    %v563 = vld [vmem:[%s1 + $0x86c] sm:$0xf]
    %v564 = vld [vmem:[%s1 + $0x870] sm:$0xf]
    %v565 = vld [vmem:[%s1 + $0x874] sm:$0xf]
    %v566 = vld [vmem:[%s1 + $0x878] sm:$0xf]
    %v567 = vld [vmem:[%s1 + $0x87c] sm:$0xf]
    %v568 = vld [vmem:[%s1 + $0x880] sm:$0xf]
    %v569 = vld [vmem:[%s1 + $0x884] sm:$0xf]
    %v570 = vld [vmem:[%s1 + $0x888] sm:$0xf]
    %v571 = vld [vmem:[%s1 + $0x88c] sm:$0xf]
    %v572 = vld [vmem:[%s1 + $0x890] sm:$0xf]
    %v573 = vld [vmem:[%s1 + $0x894] sm:$0xf]
    %v574 = vld [vmem:[%s1 + $0x898] sm:$0xf]
    %v575 = vld [vmem:[%s1 + $0x89c] sm:$0xf]
    %v576 = vld [vmem:[%s1 + $0x8a0] sm:$0xf]
    %v577 = vld [vmem:[%s1 + $0x8a4] sm:$0xf]
    %v578 = vld [vmem:[%s1 + $0x8a8] sm:$0xf]
    %v579 = vld [vmem:[%s1 + $0x8ac] sm:$0xf]
    %v580 = vld [vmem:[%s1 + $0x8b0] sm:$0xf]
    %v581 = vld [vmem:[%s1 + $0x8b4] sm:$0xf]
    %v582 = vld [vmem:[%s1 + $0x8b8] sm:$0xf]
    %v583 = vld [vmem:[%s1 + $0x8bc] sm:$0xf]
    %v584 = vld [vmem:[%s1 + $0x8c0] sm:$0xf]
    %v585 = vld [vmem:[%s1 + $0x8c4] sm:$0xf]
    %v586 = vld [vmem:[%s1 + $0x8c8] sm:$0xf]
    %v587 = vld [vmem:[%s1 + $0x8cc] sm:$0xf]
    %v588 = vld [vmem:[%s1 + $0x8d0] sm:$0xf]
    %v589 = vld [vmem:[%s1 + $0x8d4] sm:$0xf]
    %v590 = vld [vmem:[%s1 + $0x8d8] sm:$0xf]
    %v591 = vld [vmem:[%s1 + $0x8dc] sm:$0xf]
    %v592 = vld [vmem:[%s1 + $0x8e0] sm:$0xf]
    %v593 = vld [vmem:[%s1 + $0x8e4] sm:$0xf]
    %v594 = vld [vmem:[%s1 + $0x8e8] sm:$0xf]
    %v595 = vld [vmem:[%s1 + $0x8ec] sm:$0xf]
    %v596 = vld [vmem:[%s1 + $0x8f0] sm:$0xf]
    %v597 = vld [vmem:[%s1 + $0x8f4] sm:$0xf]
    %v598 = vld [vmem:[%s1 + $0x8f8] sm:$0xf]
    %v599 = vld [vmem:[%s1 + $0x8fc] sm:$0xf]
    %v600 = vld [vmem:[%s1 + $0x900] sm:$0xf]
    %v601 = vld [vmem:[%s1 + $0x904] sm:$0xf]
    %v602 = vld [vmem:[%s1 + $0x908] sm:$0xf]
    %v603 = vld [vmem:[%s1 + $0x90c] sm:$0xf]
    %v604 = vld [vmem:[%s1 + $0x910] sm:$0xf]
    %v605 = vld [vmem:[%s1 + $0x914] sm:$0xf]
    %v606 = vld [vmem:[%s1 + $0x918] sm:$0xf]
    %v607 = vld [vmem:[%s1 + $0x91c] sm:$0xf]
    %v608 = vld [vmem:[%s1 + $0x920] sm:$0xf]
    %v609 = vld [vmem:[%s1 + $0x924] sm:$0xf]
    %v610 = vld [vmem:[%s1 + $0x928] sm:$0xf]
    %v611 = vld [vmem:[%s1 + $0x92c] sm:$0xf]
    %v612 = vld [vmem:[%s1 + $0x930] sm:$0xf]
    %v613 = vld [vmem:[%s1 + $0x934] sm:$0xf]
    %v614 = vld [vmem:[%s1 + $0x938] sm:$0xf]
    %v615 = vld [vmem:[%s1 + $0x93c] sm:$0xf]
    %v616 = vld [vmem:[%s1 + $0x940] sm:$0xf]
    %v617 = vld [vmem:[%s1 + $0x944] sm:$0xf]
    %v618 = vld [vmem:[%s1 + $0x948] sm:$0xf]
    %v619 = vld [vmem:[%s1 + $0x94c] sm:$0xf]
    %v620 = vld [vmem:[%s1 + $0x950] sm:$0xf]
    %v621 = vld [vmem:[%s1 + $0x954] sm:$0xf]
    %v622 = vld [vmem:[%s1 + $0x958] sm:$0xf]
    %v623 = vld [vmem:[%s1 + $0x95c] sm:$0xf]
    %v624 = vld [vmem:[%s1 + $0x960] sm:$0xf]
    %v625 = vld [vmem:[%s1 + $0x964] sm:$0xf]
    %v626 = vld [vmem:[%s1 + $0x968] sm:$0xf]
    %v627 = vld [vmem:[%s1 + $0x96c] sm:$0xf]
    %v628 = vld [vmem:[%s1 + $0x970] sm:$0xf]
    %v629 = vld [vmem:[%s1 + $0x974] sm:$0xf]
    %v630 = vld [vmem:[%s1 + $0x978] sm:$0xf]
    %v631 = vld [vmem:[%s1 + $0x97c] sm:$0xf]
    %v632 = vld [vmem:[%s1 + $0x980] sm:$0xf]
    %v633 = vld [vmem:[%s1 + $0x984] sm:$0xf]
    %v634 = vld [vmem:[%s1 + $0x988] sm:$0xf]
    %v635 = vld [vmem:[%s1 + $0x98c] sm:$0xf]
    %v636 = vld [vmem:[%s1 + $0x990] sm:$0xf]
    %v637 = vld [vmem:[%s1 + $0x994] sm:$0xf]
    %v638 = vld [vmem:[%s1 + $0x998] sm:$0xf]
    %v639 = vld [vmem:[%s1 + $0x99c] sm:$0xf]
    %v640 = vld [vmem:[%s1 + $0x9a0] sm:$0xf]
    %v641 = vld [vmem:[%s1 + $0x9a4] sm:$0xf]
    %v642 = vld [vmem:[%s1 + $0x9a8] sm:$0xf]
    %v643 = vld [vmem:[%s1 + $0x9ac] sm:$0xf]
    %v644 = vld [vmem:[%s1 + $0x9b0] sm:$0xf]
    %v645 = vld [vmem:[%s1 + $0x9b4] sm:$0xf]
    %v646 = vld [vmem:[%s1 + $0x9b8] sm:$0xf]
    %v647 = vld [vmem:[%s1 + $0x9bc] sm:$0xf]
    %v648 = vld [vmem:[%s1 + $0x9c0] sm:$0xf]
    %v649 = vld [vmem:[%s1 + $0x9c4] sm:$0xf]
    %v650 = vld [vmem:[%s1 + $0x9c8] sm:$0xf]
    %v651 = vld [vmem:[%s1 + $0x9cc] sm:$0xf]
    %v652 = vld [vmem:[%s1 + $0x9d0] sm:$0xf]
    %v653 = vld [vmem:[%s1 + $0x9d4] sm:$0xf]
    %v654 = vld [vmem:[%s1 + $0x9d8] sm:$0xf]
    %v655 = vld [vmem:[%s1 + $0x9dc] sm:$0xf]
    %v656 = vld [vmem:[%s1 + $0x9e0] sm:$0xf]
    %v657 = vld [vmem:[%s1 + $0x9e4] sm:$0xf]
    %v658 = vld [vmem:[%s1 + $0x9e8] sm:$0xf]
    %v659 = vld [vmem:[%s1 + $0x9ec] sm:$0xf]
    %v660 = vld [vmem:[%s1 + $0x9f0] sm:$0xf]
    %v661 = vld [vmem:[%s1 + $0x9f4] sm:$0xf]
    %v662 = vld [vmem:[%s1 + $0x9f8] sm:$0xf]
    %v663 = vld [vmem:[%s1 + $0x9fc] sm:$0xf]
    %v664 = vld [vmem:[%s1 + $0xa00] sm:$0xf]
    %v665 = vld [vmem:[%s1 + $0xa04] sm:$0xf]
    %v666 = vld [vmem:[%s1 + $0xa08] sm:$0xf]
    %v667 = vld [vmem:[%s1 + $0xa0c] sm:$0xf]
    %v668 = vld [vmem:[%s1 + $0xa10] sm:$0xf]
    %v669 = vld [vmem:[%s1 + $0xa14] sm:$0xf]
    %v670 = vld [vmem:[%s1 + $0xa18] sm:$0xf]
    %v671 = vld [vmem:[%s1 + $0xa1c] sm:$0xf]
    %v672 = vld [vmem:[%s1 + $0xa20] sm:$0xf]
    %v673 = vld [vmem:[%s1 + $0xa24] sm:$0xf]
    %v674 = vld [vmem:[%s1 + $0xa28] sm:$0xf]
    %v675 = vld [vmem:[%s1 + $0xa2c] sm:$0xf]
    %v676 = vld [vmem:[%s1 + $0xa30] sm:$0xf]
    %v677 = vld [vmem:[%s1 + $0xa34] sm:$0xf]
    %v678 = vld [vmem:[%s1 + $0xa38] sm:$0xf]
    %v679 = vld [vmem:[%s1 + $0xa3c] sm:$0xf]
    %v680 = vld [vmem:[%s1 + $0xa40] sm:$0xf]
    %v681 = vld [vmem:[%s1 + $0xa44] sm:$0xf]
    %v682 = vld [vmem:[%s1 + $0xa48] sm:$0xf]
    %v683 = vld [vmem:[%s1 + $0xa4c] sm:$0xf]
    %v684 = vld [vmem:[%s1 + $0xa50] sm:$0xf]
    %v685 = vld [vmem:[%s1 + $0xa54] sm:$0xf]
    %v686 = vld [vmem:[%s1 + $0xa58] sm:$0xf]
    %v687 = vld [vmem:[%s1 + $0xa5c] sm:$0xf]
    %v688 = vld [vmem:[%s1 + $0xa60] sm:$0xf]
    %v689 = vld [vmem:[%s1 + $0xa64] sm:$0xf]
    %v690 = vld [vmem:[%s1 + $0xa68] sm:$0xf]
    %v691 = vld [vmem:[%s1 + $0xa6c] sm:$0xf]
    %v692 = vld [vmem:[%s1 + $0xa70] sm:$0xf]
    %v693 = vld [vmem:[%s1 + $0xa74] sm:$0xf]
    %v694 = vld [vmem:[%s1 + $0xa78] sm:$0xf]
    %v695 = vld [vmem:[%s1 + $0xa7c] sm:$0xf]
    %v696 = vld [vmem:[%s1 + $0xa80] sm:$0xf]
    %v697 = vld [vmem:[%s1 + $0xa84] sm:$0xf]
    %v698 = vld [vmem:[%s1 + $0xa88] sm:$0xf]
    %v699 = vld [vmem:[%s1 + $0xa8c] sm:$0xf]
    %v700 = vld [vmem:[%s1 + $0xa90] sm:$0xf]
    %v701 = vld [vmem:[%s1 + $0xa94] sm:$0xf]
    %v702 = vld [vmem:[%s1 + $0xa98] sm:$0xf]
    %v703 = vld [vmem:[%s1 + $0xa9c] sm:$0xf]
    %v704 = vld [vmem:[%s1 + $0xaa0] sm:$0xf]
    %v705 = vld [vmem:[%s1 + $0xaa4] sm:$0xf]
    %v706 = vld [vmem:[%s1 + $0xaa8] sm:$0xf]
    %v707 = vld [vmem:[%s1 + $0xaac] sm:$0xf]
    %v708 = vld [vmem:[%s1 + $0xab0] sm:$0xf]
    %v709 = vld [vmem:[%s1 + $0xab4] sm:$0xf]
    %v710 = vld [vmem:[%s1 + $0xab8] sm:$0xf]
    %v711 = vld [vmem:[%s1 + $0xabc] sm:$0xf]
    %v712 = vld [vmem:[%s1 + $0xac0] sm:$0xf]
    %v713 = vld [vmem:[%s1 + $0xac4] sm:$0xf]
    %v714 = vld [vmem:[%s1 + $0xac8] sm:$0xf]
    %v715 = vld [vmem:[%s1 + $0xacc] sm:$0xf]
    %v716 = vld [vmem:[%s1 + $0xad0] sm:$0xf]
    %v717 = vld [vmem:[%s1 + $0xad4] sm:$0xf]
    %v718 = vld [vmem:[%s1 + $0xad8] sm:$0xf]
    %v719 = vld [vmem:[%s1 + $0xadc] sm:$0xf]
    %v720 = vld [vmem:[%s1 + $0xae0] sm:$0xf]
    %v721 = vld [vmem:[%s1 + $0xae4] sm:$0xf]
    %v722 = vld [vmem:[%s1 + $0xae8] sm:$0xf]
    %v723 = vld [vmem:[%s1 + $0xaec] sm:$0xf]
    %v724 = vld [vmem:[%s1 + $0xaf0] sm:$0xf]
    %v725 = vld [vmem:[%s1 + $0xaf4] sm:$0xf]
    %v726 = vld [vmem:[%s1 + $0xaf8] sm:$0xf]
    %v727 = vld [vmem:[%s1 + $0xafc] sm:$0xf]
    %v728 = vld [vmem:[%s1 + $0xb00] sm:$0xf]
    %v729 = vld [vmem:[%s1 + $0xb04] sm:$0xf]
    %v730 = vld [vmem:[%s1 + $0xb08] sm:$0xf]
    %v731 = vld [vmem:[%s1 + $0xb0c] sm:$0xf]
    %v732 = vld [vmem:[%s1 + $0xb10] sm:$0xf]
    %v733 = vld [vmem:[%s1 + $0xb14] sm:$0xf]
    %v734 = vld [vmem:[%s1 + $0xb18] sm:$0xf]
    %v735 = vld [vmem:[%s1 + $0xb1c] sm:$0xf]
    %v736 = vld [vmem:[%s1 + $0xb20] sm:$0xf]
    %v737 = vld [vmem:[%s1 + $0xb24] sm:$0xf]
    %v738 = vld [vmem:[%s1 + $0xb28] sm:$0xf]
    %v739 = vld [vmem:[%s1 + $0xb2c] sm:$0xf]
    %v740 = vld [vmem:[%s1 + $0xb30] sm:$0xf]
    %v741 = vld [vmem:[%s1 + $0xb34] sm:$0xf]
    %v742 = vld [vmem:[%s1 + $0xb38] sm:$0xf]
    %v743 = vld [vmem:[%s1 + $0xb3c] sm:$0xf]
    %v744 = vld [vmem:[%s1 + $0xb40] sm:$0xf]
    %v745 = vld [vmem:[%s1 + $0xb44] sm:$0xf]
    %v746 = vld [vmem:[%s1 + $0xb48] sm:$0xf]
    %v747 = vld [vmem:[%s1 + $0xb4c] sm:$0xf]
    %v748 = vld [vmem:[%s1 + $0xb50] sm:$0xf]
    %v749 = vld [vmem:[%s1 + $0xb54] sm:$0xf]
    %v750 = vld [vmem:[%s1 + $0xb58] sm:$0xf]
    %v751 = vld [vmem:[%s1 + $0xb5c] sm:$0xf]
    %v752 = vld [vmem:[%s1 + $0xb60] sm:$0xf]
    %v753 = vld [vmem:[%s1 + $0xb64] sm:$0xf]
    %v754 = vld [vmem:[%s1 + $0xb68] sm:$0xf]
    %v755 = vld [vmem:[%s1 + $0xb6c] sm:$0xf]
    %v756 = vld [vmem:[%s1 + $0xb70] sm:$0xf]
    %v757 = vld [vmem:[%s1 + $0xb74] sm:$0xf]
    %v758 = vld [vmem:[%s1 + $0xb78] sm:$0xf]
    %v759 = vld [vmem:[%s1 + $0xb7c] sm:$0xf]
    %v760 = vld [vmem:[%s1 + $0xb80] sm:$0xf]
    %v761 = vld [vmem:[%s1 + $0xb84] sm:$0xf]
    %v762 = vld [vmem:[%s1 + $0xb88] sm:$0xf]
    %v763 = vld [vmem:[%s1 + $0xb8c] sm:$0xf]
    %v764 = vld [vmem:[%s1 + $0xb90] sm:$0xf]
    %v765 = vld [vmem:[%s1 + $0xb94] sm:$0xf]
    %v766 = vld [vmem:[%s1 + $0xb98] sm:$0xf]
    %v767 = vld [vmem:[%s1 + $0xb9c] sm:$0xf]
    %v768 = vld [vmem:[%s1 + $0xba0] sm:$0xf]
    %v769 = vld [vmem:[%s1 + $0xba4] sm:$0xf]
    %v770 = vld [vmem:[%s1 + $0xba8] sm:$0xf]
    %v771 = vld [vmem:[%s1 + $0xbac] sm:$0xf]
    %v772 = vld [vmem:[%s1 + $0xbb0] sm:$0xf]
    %v773 = vld [vmem:[%s1 + $0xbb4] sm:$0xf]
    %v774 = vld [vmem:[%s1 + $0xbb8] sm:$0xf]
    %v775 = vld [vmem:[%s1 + $0xbbc] sm:$0xf]
    %v776 = vld [vmem:[%s1 + $0xbc0] sm:$0xf]
    %v777 = vld [vmem:[%s1 + $0xbc4] sm:$0xf]
    %v778 = vld [vmem:[%s1 + $0xbc8] sm:$0xf]
    %v779 = vld [vmem:[%s1 + $0xbcc] sm:$0xf]
    %v780 = vld [vmem:[%s1 + $0xbd0] sm:$0xf]
    %v781 = vld [vmem:[%s1 + $0xbd4] sm:$0xf]
    %v782 = vld [vmem:[%s1 + $0xbd8] sm:$0xf]
    %v783 = vld [vmem:[%s1 + $0xbdc] sm:$0xf]
    %v784 = vld [vmem:[%s1 + $0xbe0] sm:$0xf]
    %v785 = vld [vmem:[%s1 + $0xbe4] sm:$0xf]
    %v786 = vld [vmem:[%s1 + $0xbe8] sm:$0xf]
    %v787 = vld [vmem:[%s1 + $0xbec] sm:$0xf]
    %v788 = vld [vmem:[%s1 + $0xbf0] sm:$0xf]
    %v789 = vld [vmem:[%s1 + $0xbf4] sm:$0xf]
    %v790 = vld [vmem:[%s1 + $0xbf8] sm:$0xf]
    %v791 = vld [vmem:[%s1 + $0xbfc] sm:$0xf]
    %v792 = vld [vmem:[%s1 + $0xc00] sm:$0xf]
    %v793 = vld [vmem:[%s1 + $0xc04] sm:$0xf]
    %v794 = vld [vmem:[%s1 + $0xc08] sm:$0xf]
    %v795 = vld [vmem:[%s1 + $0xc0c] sm:$0xf]
    %v796 = vld [vmem:[%s1 + $0xc10] sm:$0xf]
    %v797 = vld [vmem:[%s1 + $0xc14] sm:$0xf]
    %v798 = vld [vmem:[%s1 + $0xc18] sm:$0xf]
    %v799 = vld [vmem:[%s1 + $0xc1c] sm:$0xf]
    %v800 = vld [vmem:[%s1 + $0xc20] sm:$0xf]
    %v801 = vld [vmem:[%s1 + $0xc24] sm:$0xf]
    %v802 = vld [vmem:[%s1 + $0xc28] sm:$0xf]
    %v803 = vld [vmem:[%s1 + $0xc2c] sm:$0xf]
    %v804 = vld [vmem:[%s1 + $0xc30] sm:$0xf]
    %v805 = vld [vmem:[%s1 + $0xc34] sm:$0xf]
    %v806 = vld [vmem:[%s1 + $0xc38] sm:$0xf]
    %v807 = vld [vmem:[%s1 + $0xc3c] sm:$0xf]
    %v808 = vld [vmem:[%s1 + $0xc40] sm:$0xf]
    %v809 = vld [vmem:[%s1 + $0xc44] sm:$0xf]
    %v810 = vld [vmem:[%s1 + $0xc48] sm:$0xf]
    %v811 = vld [vmem:[%s1 + $0xc4c] sm:$0xf]
    %v812 = vld [vmem:[%s1 + $0xc50] sm:$0xf]
    %v813 = vld [vmem:[%s1 + $0xc54] sm:$0xf]
    %v814 = vld [vmem:[%s1 + $0xc58] sm:$0xf]
    %v815 = vld [vmem:[%s1 + $0xc5c] sm:$0xf]
    %v816 = vld [vmem:[%s1 + $0xc60] sm:$0xf]
    %v817 = vld [vmem:[%s1 + $0xc64] sm:$0xf]
    %v818 = vld [vmem:[%s1 + $0xc68] sm:$0xf]
    %v819 = vld [vmem:[%s1 + $0xc6c] sm:$0xf]
    %v820 = vld [vmem:[%s1 + $0xc70] sm:$0xf]
    %v821 = vld [vmem:[%s1 + $0xc74] sm:$0xf]
    %v822 = vld [vmem:[%s1 + $0xc78] sm:$0xf]
    %v823 = vld [vmem:[%s1 + $0xc7c] sm:$0xf]
    %v824 = vld [vmem:[%s1 + $0xc80] sm:$0xf]
    %v825 = vld [vmem:[%s1 + $0xc84] sm:$0xf]
    %v826 = vld [vmem:[%s1 + $0xc88] sm:$0xf]
    %v827 = vld [vmem:[%s1 + $0xc8c] sm:$0xf]
    %v828 = vld [vmem:[%s1 + $0xc90] sm:$0xf]
    %v829 = vld [vmem:[%s1 + $0xc94] sm:$0xf]
    %v830 = vld [vmem:[%s1 + $0xc98] sm:$0xf]
    %v831 = vld [vmem:[%s1 + $0xc9c] sm:$0xf]
    %v832 = vld [vmem:[%s1 + $0xca0] sm:$0xf]
    %v833 = vld [vmem:[%s1 + $0xca4] sm:$0xf]
    %v834 = vld [vmem:[%s1 + $0xca8] sm:$0xf]
    %v835 = vld [vmem:[%s1 + $0xcac] sm:$0xf]
    %v836 = vld [vmem:[%s1 + $0xcb0] sm:$0xf]
    %v837 = vld [vmem:[%s1 + $0xcb4] sm:$0xf]
    %v838 = vld [vmem:[%s1 + $0xcb8] sm:$0xf]
    %v839 = vld [vmem:[%s1 + $0xcbc] sm:$0xf]
    %v840 = vld [vmem:[%s1 + $0xcc0] sm:$0xf]
    %v841 = vld [vmem:[%s1 + $0xcc4] sm:$0xf]
    %v842 = vld [vmem:[%s1 + $0xcc8] sm:$0xf]
    %v843 = vld [vmem:[%s1 + $0xccc] sm:$0xf]
    %v844 = vld [vmem:[%s1 + $0xcd0] sm:$0xf]
    %v845 = vld [vmem:[%s1 + $0xcd4] sm:$0xf]
    %v846 = vld [vmem:[%s1 + $0xcd8] sm:$0xf]
    %v847 = vld [vmem:[%s1 + $0xcdc] sm:$0xf]
    %v848 = vld [vmem:[%s1 + $0xce0] sm:$0xf]
    %v849 = vld [vmem:[%s1 + $0xce4] sm:$0xf]
    %v850 = vld [vmem:[%s1 + $0xce8] sm:$0xf]
    %v851 = vld [vmem:[%s1 + $0xcec] sm:$0xf]
    %v852 = vld [vmem:[%s1 + $0xcf0] sm:$0xf]
    %v853 = vld [vmem:[%s1 + $0xcf4] sm:$0xf]
    %v854 = vld [vmem:[%s1 + $0xcf8] sm:$0xf]
    %v855 = vld [vmem:[%s1 + $0xcfc] sm:$0xf]
    %v856 = vld [vmem:[%s1 + $0xd00] sm:$0xf]
    %v857 = vld [vmem:[%s1 + $0xd04] sm:$0xf]
    %v858 = vld [vmem:[%s1 + $0xd08] sm:$0xf]
    %v859 = vld [vmem:[%s1 + $0xd0c] sm:$0xf]
    %v860 = vld [vmem:[%s1 + $0xd10] sm:$0xf]
    %v861 = vld [vmem:[%s1 + $0xd14] sm:$0xf]
    %v862 = vld [vmem:[%s1 + $0xd18] sm:$0xf]
    %v863 = vld [vmem:[%s1 + $0xd1c] sm:$0xf]
    %v864 = vld [vmem:[%s1 + $0xd20] sm:$0xf]
    %v865 = vld [vmem:[%s1 + $0xd24] sm:$0xf]
    %v866 = vld [vmem:[%s1 + $0xd28] sm:$0xf]
    %v867 = vld [vmem:[%s1 + $0xd2c] sm:$0xf]
    %v868 = vld [vmem:[%s1 + $0xd30] sm:$0xf]
    %v869 = vld [vmem:[%s1 + $0xd34] sm:$0xf]
    %v870 = vld [vmem:[%s1 + $0xd38] sm:$0xf]
    %v871 = vld [vmem:[%s1 + $0xd3c] sm:$0xf]
    %v872 = vld [vmem:[%s1 + $0xd40] sm:$0xf]
    %v873 = vld [vmem:[%s1 + $0xd44] sm:$0xf]
    %v874 = vld [vmem:[%s1 + $0xd48] sm:$0xf]
    %v875 = vld [vmem:[%s1 + $0xd4c] sm:$0xf]
    %v876 = vld [vmem:[%s1 + $0xd50] sm:$0xf]
    %v877 = vld [vmem:[%s1 + $0xd54] sm:$0xf]
    %v878 = vld [vmem:[%s1 + $0xd58] sm:$0xf]
    %v879 = vld [vmem:[%s1 + $0xd5c] sm:$0xf]
    %v880 = vld [vmem:[%s1 + $0xd60] sm:$0xf]
    %v881 = vld [vmem:[%s1 + $0xd64] sm:$0xf]
    %v882 = vld [vmem:[%s1 + $0xd68] sm:$0xf]
    %v883 = vld [vmem:[%s1 + $0xd6c] sm:$0xf]
    %v884 = vld [vmem:[%s1 + $0xd70] sm:$0xf]
    %v885 = vld [vmem:[%s1 + $0xd74] sm:$0xf]
    %v886 = vld [vmem:[%s1 + $0xd78] sm:$0xf]
    %v887 = vld [vmem:[%s1 + $0xd7c] sm:$0xf]
    %v888 = vld [vmem:[%s1 + $0xd80] sm:$0xf]
    %v889 = vld [vmem:[%s1 + $0xd84] sm:$0xf]
    %v890 = vld [vmem:[%s1 + $0xd88] sm:$0xf]
    %v891 = vld [vmem:[%s1 + $0xd8c] sm:$0xf]
    %v892 = vld [vmem:[%s1 + $0xd90] sm:$0xf]
    %v893 = vld [vmem:[%s1 + $0xd94] sm:$0xf]
    %v894 = vld [vmem:[%s1 + $0xd98] sm:$0xf]
    %v895 = vld [vmem:[%s1 + $0xd9c] sm:$0xf]
    %v896 = vld [vmem:[%s1 + $0xda0] sm:$0xf]
    %v897 = vld [vmem:[%s1 + $0xda4] sm:$0xf]
    %v898 = vld [vmem:[%s1 + $0xda8] sm:$0xf]
    %v899 = vld [vmem:[%s1 + $0xdac] sm:$0xf]
    %v900 = vld [vmem:[%s1 + $0xdb0] sm:$0xf]
    %v901 = vld [vmem:[%s1 + $0xdb4] sm:$0xf]
    %v902 = vld [vmem:[%s1 + $0xdb8] sm:$0xf]
    %v903 = vld [vmem:[%s1 + $0xdbc] sm:$0xf]
    %v904 = vld [vmem:[%s1 + $0xdc0] sm:$0xf]
    %v905 = vld [vmem:[%s1 + $0xdc4] sm:$0xf]
    %v906 = vld [vmem:[%s1 + $0xdc8] sm:$0xf]
    %v907 = vld [vmem:[%s1 + $0xdcc] sm:$0xf]
    %v908 = vld [vmem:[%s1 + $0xdd0] sm:$0xf]
    %v909 = vld [vmem:[%s1 + $0xdd4] sm:$0xf]
    %v910 = vld [vmem:[%s1 + $0xdd8] sm:$0xf]
    %v911 = vld [vmem:[%s1 + $0xddc] sm:$0xf]
    %v912 = vld [vmem:[%s1 + $0xde0] sm:$0xf]
    %v913 = vld [vmem:[%s1 + $0xde4] sm:$0xf]
    %v914 = vld [vmem:[%s1 + $0xde8] sm:$0xf]
    %v915 = vld [vmem:[%s1 + $0xdec] sm:$0xf]
    %v916 = vld [vmem:[%s1 + $0xdf0] sm:$0xf]
    %v917 = vld [vmem:[%s1 + $0xdf4] sm:$0xf]
    %v918 = vld [vmem:[%s1 + $0xdf8] sm:$0xf]
    %v919 = vld [vmem:[%s1 + $0xdfc] sm:$0xf]
    %v920 = vld [vmem:[%s1 + $0xe00] sm:$0xf]
    %v921 = vld [vmem:[%s1 + $0xe04] sm:$0xf]
    %v922 = vld [vmem:[%s1 + $0xe08] sm:$0xf]
    %v923 = vld [vmem:[%s1 + $0xe0c] sm:$0xf]
    %v924 = vld [vmem:[%s1 + $0xe10] sm:$0xf]
    %v925 = vld [vmem:[%s1 + $0xe14] sm:$0xf]
    %v926 = vld [vmem:[%s1 + $0xe18] sm:$0xf]
    %v927 = vld [vmem:[%s1 + $0xe1c] sm:$0xf]
    %v928 = vld [vmem:[%s1 + $0xe20] sm:$0xf]
    %v929 = vld [vmem:[%s1 + $0xe24] sm:$0xf]
    %v930 = vld [vmem:[%s1 + $0xe28] sm:$0xf]
    %v931 = vld [vmem:[%s1 + $0xe2c] sm:$0xf]
    %v932 = vld [vmem:[%s1 + $0xe30] sm:$0xf]
    %v933 = vld [vmem:[%s1 + $0xe34] sm:$0xf]
    %v934 = vld [vmem:[%s1 + $0xe38] sm:$0xf]
    %v935 = vld [vmem:[%s1 + $0xe3c] sm:$0xf]
    %v936 = vld [vmem:[%s1 + $0xe40] sm:$0xf]
    %v937 = vld [vmem:[%s1 + $0xe44] sm:$0xf]
    %v938 = vld [vmem:[%s1 + $0xe48] sm:$0xf]
    %v939 = vld [vmem:[%s1 + $0xe4c] sm:$0xf]
    %v940 = vld [vmem:[%s1 + $0xe50] sm:$0xf]
    %v941 = vld [vmem:[%s1 + $0xe54] sm:$0xf]
    %v942 = vld [vmem:[%s1 + $0xe58] sm:$0xf]
    %v943 = vld [vmem:[%s1 + $0xe5c] sm:$0xf]
    %v944 = vld [vmem:[%s1 + $0xe60] sm:$0xf]
    %v945 = vld [vmem:[%s1 + $0xe64] sm:$0xf]
    %v946 = vld [vmem:[%s1 + $0xe68] sm:$0xf]
    %v947 = vld [vmem:[%s1 + $0xe6c] sm:$0xf]
    %v948 = vld [vmem:[%s1 + $0xe70] sm:$0xf]
    %v949 = vld [vmem:[%s1 + $0xe74] sm:$0xf]
    %v950 = vld [vmem:[%s1 + $0xe78] sm:$0xf]
    %v951 = vld [vmem:[%s1 + $0xe7c] sm:$0xf]
    %v952 = vld [vmem:[%s1 + $0xe80] sm:$0xf]
    %v953 = vld [vmem:[%s1 + $0xe84] sm:$0xf]
    %v954 = vld [vmem:[%s1 + $0xe88] sm:$0xf]
    %v955 = vld [vmem:[%s1 + $0xe8c] sm:$0xf]
    %v956 = vld [vmem:[%s1 + $0xe90] sm:$0xf]
    %v957 = vld [vmem:[%s1 + $0xe94] sm:$0xf]
    %v958 = vld [vmem:[%s1 + $0xe98] sm:$0xf]
    %v959 = vld [vmem:[%s1 + $0xe9c] sm:$0xf]
    %v960 = vld [vmem:[%s1 + $0xea0] sm:$0xf]
    %v961 = vld [vmem:[%s1 + $0xea4] sm:$0xf]
    %v962 = vld [vmem:[%s1 + $0xea8] sm:$0xf]
    %v963 = vld [vmem:[%s1 + $0xeac] sm:$0xf]
    %v964 = vld [vmem:[%s1 + $0xeb0] sm:$0xf]
    %v965 = vld [vmem:[%s1 + $0xeb4] sm:$0xf]
    %v966 = vld [vmem:[%s1 + $0xeb8] sm:$0xf]
    %v967 = vld [vmem:[%s1 + $0xebc] sm:$0xf]
    %v968 = vld [vmem:[%s1 + $0xec0] sm:$0xf]
    %v969 = vld [vmem:[%s1 + $0xec4] sm:$0xf]
    %v970 = vld [vmem:[%s1 + $0xec8] sm:$0xf]
    %v971 = vld [vmem:[%s1 + $0xecc] sm:$0xf]
    %v972 = vld [vmem:[%s1 + $0xed0] sm:$0xf]
    %v973 = vld [vmem:[%s1 + $0xed4] sm:$0xf]
    %v974 = vld [vmem:[%s1 + $0xed8] sm:$0xf]
    %v975 = vld [vmem:[%s1 + $0xedc] sm:$0xf]
    %v976 = vld [vmem:[%s1 + $0xee0] sm:$0xf]
    %v977 = vld [vmem:[%s1 + $0xee4] sm:$0xf]
    %v978 = vld [vmem:[%s1 + $0xee8] sm:$0xf]
    %v979 = vld [vmem:[%s1 + $0xeec] sm:$0xf]
    %v980 = vld [vmem:[%s1 + $0xef0] sm:$0xf]
    %v981 = vld [vmem:[%s1 + $0xef4] sm:$0xf]
    %v982 = vld [vmem:[%s1 + $0xef8] sm:$0xf]
    %v983 = vld [vmem:[%s1 + $0xefc] sm:$0xf]
    %v984 = vld [vmem:[%s1 + $0xf00] sm:$0xf]
    %v985 = vld [vmem:[%s1 + $0xf04] sm:$0xf]
    %v986 = vld [vmem:[%s1 + $0xf08] sm:$0xf]
    %v987 = vld [vmem:[%s1 + $0xf0c] sm:$0xf]
    %v988 = vld [vmem:[%s1 + $0xf10] sm:$0xf]
    %v989 = vld [vmem:[%s1 + $0xf14] sm:$0xf]
    %v990 = vld [vmem:[%s1 + $0xf18] sm:$0xf]
    %v991 = vld [vmem:[%s1 + $0xf1c] sm:$0xf]
    %v992 = vld [vmem:[%s1 + $0xf20] sm:$0xf]
    %v993 = vld [vmem:[%s1 + $0xf24] sm:$0xf]
    %v994 = vld [vmem:[%s1 + $0xf28] sm:$0xf]
    %v995 = vld [vmem:[%s1 + $0xf2c] sm:$0xf]
    %v996 = vld [vmem:[%s1 + $0xf30] sm:$0xf]
    %v997 = vld [vmem:[%s1 + $0xf34] sm:$0xf]
    %v998 = vld [vmem:[%s1 + $0xf38] sm:$0xf]
    %v999 = vld [vmem:[%s1 + $0xf3c] sm:$0xf]
    %v1000 = vld [vmem:[%s1 + $0xf40] sm:$0xf]
    %v1001 = vld [vmem:[%s1 + $0xf44] sm:$0xf]
    %v1002 = vld [vmem:[%s1 + $0xf48] sm:$0xf]
    %v1003 = vld [vmem:[%s1 + $0xf4c] sm:$0xf]
    %v1004 = vld [vmem:[%s1 + $0xf50] sm:$0xf]
    %v1005 = vld [vmem:[%s1 + $0xf54] sm:$0xf]
    %v1006 = vld [vmem:[%s1 + $0xf58] sm:$0xf]
    %v1007 = vld [vmem:[%s1 + $0xf5c] sm:$0xf]
    %v1008 = vld [vmem:[%s1 + $0xf60] sm:$0xf]
    %v1009 = vld [vmem:[%s1 + $0xf64] sm:$0xf]
    %v1010 = vld [vmem:[%s1 + $0xf68] sm:$0xf]
    %v1011 = vld [vmem:[%s1 + $0xf6c] sm:$0xf]
    %v1012 = vld [vmem:[%s1 + $0xf70] sm:$0xf]
    %v1013 = vld [vmem:[%s1 + $0xf74] sm:$0xf]
    %v1014 = vld [vmem:[%s1 + $0xf78] sm:$0xf]
    %v1015 = vld [vmem:[%s1 + $0xf7c] sm:$0xf]
    %v1016 = vld [vmem:[%s1 + $0xf80] sm:$0xf]
    %v1017 = vld [vmem:[%s1 + $0xf84] sm:$0xf]
    %v1018 = vld [vmem:[%s1 + $0xf88] sm:$0xf]
    %v1019 = vld [vmem:[%s1 + $0xf8c] sm:$0xf]
    %v1020 = vld [vmem:[%s1 + $0xf90] sm:$0xf]
    %v1021 = vld [vmem:[%s1 + $0xf94] sm:$0xf]
    %v1022 = vld [vmem:[%s1 + $0xf98] sm:$0xf]
    %v1023 = vld [vmem:[%s1 + $0xf9c] sm:$0xf]
    %v1024 = vld [vmem:[%s1 + $0xfa0] sm:$0xf]
    %v1025 = vld [vmem:[%s1 + $0xfa4] sm:$0xf]
    %v1026 = vld [vmem:[%s1 + $0xfa8] sm:$0xf]
    %v1027 = vld [vmem:[%s1 + $0xfac] sm:$0xf]
    %v1028 = vld [vmem:[%s1 + $0xfb0] sm:$0xf]
    %v1029 = vld [vmem:[%s1 + $0xfb4] sm:$0xf]
    %v1030 = vld [vmem:[%s1 + $0xfb8] sm:$0xf]
    %v1031 = vld [vmem:[%s1 + $0xfbc] sm:$0xf]
    %v1032 = vld [vmem:[%s1 + $0xfc0] sm:$0xf]
    %v1033 = vld [vmem:[%s1 + $0xfc4] sm:$0xf]
    %v1034 = vld [vmem:[%s1 + $0xfc8] sm:$0xf]
    %v1035 = vld [vmem:[%s1 + $0xfcc] sm:$0xf]
    %v1036 = vld [vmem:[%s1 + $0xfd0] sm:$0xf]
    %v1037 = vld [vmem:[%s1 + $0xfd4] sm:$0xf]
    %v1038 = vld [vmem:[%s1 + $0xfd8] sm:$0xf]
    %v1039 = vld [vmem:[%s1 + $0xfdc] sm:$0xf]
    %v1040 = vld [vmem:[%s1 + $0xfe0] sm:$0xf]
    %v1041 = vld [vmem:[%s1 + $0xfe4] sm:$0xf]
    %v1042 = vld [vmem:[%s1 + $0xfe8] sm:$0xf]
    %v1043 = vld [vmem:[%s1 + $0xfec] sm:$0xf]
    %v1044 = vld [vmem:[%s1 + $0xff0] sm:$0xf]
    %v1045 = vld [vmem:[%s1 + $0xff4] sm:$0xf]
    %v1046 = vld [vmem:[%s1 + $0xff8] sm:$0xf]
    %v1047 = vld [vmem:[%s1 + $0xffc] sm:$0xf]
    %v1048 = vld [vmem:[%s2] sm:$0x1]
    %v1050 = vlaneseq
    %v1051 = vshrl.u32 %v1050, 7
    %v1052 = vsub.s32 0, %v1051
    %v1053 = vrot.slane %v1048, %v1052
    %v1063 = vcombine.high %v16, %v16
    %v1065 = vunpack.c.l.s4 1966171168
    %v1066 = vunpack.c.0.s8 %v1065
    %v1067 = vlaneseq
    %v1068 = vshrl.u32 %v1067, 7
    %v1069 = vsub.s32 %v1066, %v1068
    %v1070 = vrot.slane %v16, %v1069
    %v1072 = vunpack.c.l.s4 1966171168
    %v1073 = vunpack.c.0.s8 %v1072
    %v1074 = vlaneseq
    %v1075 = vshrl.u32 %v1074, 7
    %v1076 = vsub.s32 %v1073, %v1075
    %v1077 = vrot.slane %v1063, %v1076
    %v1078 = vcombine.high %v1070, %v1070
    %v1079 = vcombine.high %v1077, %v1077
    %v1081 = vunpack.c.l.s4 1966171168
    %v1082 = vunpack.c.0.s8 %v1081
    %v1083 = vlaneseq
    %v1084 = vshrl.u32 %v1083, 7
    %v1085 = vsub.s32 %v1082, %v1084
    %v1086 = vrot.slane %v1070, %v1085
    %v1088 = vunpack.c.l.s4 1966171168
    %v1089 = vunpack.c.0.s8 %v1088
    %v1090 = vlaneseq
    %v1091 = vshrl.u32 %v1090, 7
    %v1092 = vsub.s32 %v1089, %v1091
    %v1093 = vrot.slane %v1077, %v1092
    %v1095 = vunpack.c.l.s4 1966171168
    %v1096 = vunpack.c.0.s8 %v1095
    %v1097 = vlaneseq
    %v1098 = vshrl.u32 %v1097, 7
    %v1099 = vsub.s32 %v1096, %v1098
    %v1100 = vrot.slane %v1078, %v1099
    %v1102 = vunpack.c.l.s4 1966171168
    %v1103 = vunpack.c.0.s8 %v1102
    %v1104 = vlaneseq
    %v1105 = vshrl.u32 %v1104, 7
    %v1106 = vsub.s32 %v1103, %v1105
    %v1107 = vrot.slane %v1079, %v1106
    %v1108 = vcombine.high %v1086, %v1086
    %v1109 = vcombine.high %v1093, %v1093
    %v1110 = vcombine.high %v1100, %v1100
    %v1111 = vcombine.high %v1107, %v1107
    %v1112 = vcombine.high %v17, %v17
    %v1114 = vunpack.c.l.s4 1966171168
    %v1115 = vunpack.c.0.s8 %v1114
    %v1116 = vlaneseq
    %v1117 = vshrl.u32 %v1116, 7
    %v1118 = vsub.s32 %v1115, %v1117
    %v1119 = vrot.slane %v17, %v1118
    %v1121 = vunpack.c.l.s4 1966171168
    %v1122 = vunpack.c.0.s8 %v1121
    %v1123 = vlaneseq
    %v1124 = vshrl.u32 %v1123, 7
    %v1125 = vsub.s32 %v1122, %v1124
    %v1126 = vrot.slane %v1112, %v1125
    %v1127 = vcombine.high %v1119, %v1119
    %v1128 = vcombine.high %v1126, %v1126
    %v1130 = vunpack.c.l.s4 1966171168
    %v1131 = vunpack.c.0.s8 %v1130
    %v1132 = vlaneseq
    %v1133 = vshrl.u32 %v1132, 7
    %v1134 = vsub.s32 %v1131, %v1133
    %v1135 = vrot.slane %v1119, %v1134
    %v1137 = vunpack.c.l.s4 1966171168
    %v1138 = vunpack.c.0.s8 %v1137
    %v1139 = vlaneseq
    %v1140 = vshrl.u32 %v1139, 7
    %v1141 = vsub.s32 %v1138, %v1140
    %v1142 = vrot.slane %v1126, %v1141
    %v1144 = vunpack.c.l.s4 1966171168
    %v1145 = vunpack.c.0.s8 %v1144
    %v1146 = vlaneseq
    %v1147 = vshrl.u32 %v1146, 7
    %v1148 = vsub.s32 %v1145, %v1147
    %v1149 = vrot.slane %v1127, %v1148
    %v1151 = vunpack.c.l.s4 1966171168
    %v1152 = vunpack.c.0.s8 %v1151
    %v1153 = vlaneseq
    %v1154 = vshrl.u32 %v1153, 7
    %v1155 = vsub.s32 %v1152, %v1154
    %v1156 = vrot.slane %v1128, %v1155
    %v1157 = vcombine.high %v1135, %v1135
    %v1158 = vcombine.high %v1142, %v1142
    %v1159 = vcombine.high %v1149, %v1149
    %v1160 = vcombine.high %v1156, %v1156
    %v1161 = vcombine.high %v18, %v18
    %v1163 = vunpack.c.l.s4 1966171168
    %v1164 = vunpack.c.0.s8 %v1163
    %v1165 = vlaneseq
    %v1166 = vshrl.u32 %v1165, 7
    %v1167 = vsub.s32 %v1164, %v1166
    %v1168 = vrot.slane %v18, %v1167
    %v1170 = vunpack.c.l.s4 1966171168
    %v1171 = vunpack.c.0.s8 %v1170
    %v1172 = vlaneseq
    %v1173 = vshrl.u32 %v1172, 7
    %v1174 = vsub.s32 %v1171, %v1173
    %v1175 = vrot.slane %v1161, %v1174
    %v1176 = vcombine.high %v1168, %v1168
    %v1177 = vcombine.high %v1175, %v1175
    %v1179 = vunpack.c.l.s4 1966171168
    %v1180 = vunpack.c.0.s8 %v1179
    %v1181 = vlaneseq
    %v1182 = vshrl.u32 %v1181, 7
    %v1183 = vsub.s32 %v1180, %v1182
    %v1184 = vrot.slane %v1168, %v1183
    %v1186 = vunpack.c.l.s4 1966171168
    %v1187 = vunpack.c.0.s8 %v1186
    %v1188 = vlaneseq
    %v1189 = vshrl.u32 %v1188, 7
    %v1190 = vsub.s32 %v1187, %v1189
    %v1191 = vrot.slane %v1175, %v1190
    %v1193 = vunpack.c.l.s4 1966171168
    %v1194 = vunpack.c.0.s8 %v1193
    %v1195 = vlaneseq
    %v1196 = vshrl.u32 %v1195, 7
    %v1197 = vsub.s32 %v1194, %v1196
    %v1198 = vrot.slane %v1176, %v1197
    %v1200 = vunpack.c.l.s4 1966171168
    %v1201 = vunpack.c.0.s8 %v1200
    %v1202 = vlaneseq
    %v1203 = vshrl.u32 %v1202, 7
    %v1204 = vsub.s32 %v1201, %v1203
    %v1205 = vrot.slane %v1177, %v1204
    %v1206 = vcombine.high %v1184, %v1184
    %v1207 = vcombine.high %v1191, %v1191
    %v1208 = vcombine.high %v1198, %v1198
    %v1209 = vcombine.high %v1205, %v1205
    %v1210 = vcombine.high %v19, %v19
    %v1212 = vunpack.c.l.s4 1966171168
    %v1213 = vunpack.c.0.s8 %v1212
    %v1214 = vlaneseq
    %v1215 = vshrl.u32 %v1214, 7
    %v1216 = vsub.s32 %v1213, %v1215
    %v1217 = vrot.slane %v19, %v1216
    %v1219 = vunpack.c.l.s4 1966171168
    %v1220 = vunpack.c.0.s8 %v1219
    %v1221 = vlaneseq
    %v1222 = vshrl.u32 %v1221, 7
    %v1223 = vsub.s32 %v1220, %v1222
    %v1224 = vrot.slane %v1210, %v1223
    %v1225 = vcombine.high %v1217, %v1217
    %v1226 = vcombine.high %v1224, %v1224
    %v1228 = vunpack.c.l.s4 1966171168
    %v1229 = vunpack.c.0.s8 %v1228
    %v1230 = vlaneseq
    %v1231 = vshrl.u32 %v1230, 7
    %v1232 = vsub.s32 %v1229, %v1231
    %v1233 = vrot.slane %v1217, %v1232
    %v1235 = vunpack.c.l.s4 1966171168
    %v1236 = vunpack.c.0.s8 %v1235
    %v1237 = vlaneseq
    %v1238 = vshrl.u32 %v1237, 7
    %v1239 = vsub.s32 %v1236, %v1238
    %v1240 = vrot.slane %v1224, %v1239
    %v1242 = vunpack.c.l.s4 1966171168
    %v1243 = vunpack.c.0.s8 %v1242
    %v1244 = vlaneseq
    %v1245 = vshrl.u32 %v1244, 7
    %v1246 = vsub.s32 %v1243, %v1245
    %v1247 = vrot.slane %v1225, %v1246
    %v1249 = vunpack.c.l.s4 1966171168
    %v1250 = vunpack.c.0.s8 %v1249
    %v1251 = vlaneseq
    %v1252 = vshrl.u32 %v1251, 7
    %v1253 = vsub.s32 %v1250, %v1252
    %v1254 = vrot.slane %v1226, %v1253
    %v1255 = vcombine.high %v1233, %v1233
    %v1256 = vcombine.high %v1240, %v1240
    %v1257 = vcombine.high %v1247, %v1247
    %v1258 = vcombine.high %v1254, %v1254
    %v1259 = vcombine.high %v20, %v20
    %v1261 = vunpack.c.l.s4 1966171168
    %v1262 = vunpack.c.0.s8 %v1261
    %v1263 = vlaneseq
    %v1264 = vshrl.u32 %v1263, 7
    %v1265 = vsub.s32 %v1262, %v1264
    %v1266 = vrot.slane %v20, %v1265
    %v1268 = vunpack.c.l.s4 1966171168
    %v1269 = vunpack.c.0.s8 %v1268
    %v1270 = vlaneseq
    %v1271 = vshrl.u32 %v1270, 7
    %v1272 = vsub.s32 %v1269, %v1271
    %v1273 = vrot.slane %v1259, %v1272
    %v1274 = vcombine.high %v1266, %v1266
    %v1275 = vcombine.high %v1273, %v1273
    %v1277 = vunpack.c.l.s4 1966171168
    %v1278 = vunpack.c.0.s8 %v1277
    %v1279 = vlaneseq
    %v1280 = vshrl.u32 %v1279, 7
    %v1281 = vsub.s32 %v1278, %v1280
    %v1282 = vrot.slane %v1266, %v1281
    %v1284 = vunpack.c.l.s4 1966171168
    %v1285 = vunpack.c.0.s8 %v1284
    %v1286 = vlaneseq
    %v1287 = vshrl.u32 %v1286, 7
    %v1288 = vsub.s32 %v1285, %v1287
    %v1289 = vrot.slane %v1273, %v1288
    %v1291 = vunpack.c.l.s4 1966171168
    %v1292 = vunpack.c.0.s8 %v1291
    %v1293 = vlaneseq
    %v1294 = vshrl.u32 %v1293, 7
    %v1295 = vsub.s32 %v1292, %v1294
    %v1296 = vrot.slane %v1274, %v1295
    %v1298 = vunpack.c.l.s4 1966171168
    %v1299 = vunpack.c.0.s8 %v1298
    %v1300 = vlaneseq
    %v1301 = vshrl.u32 %v1300, 7
    %v1302 = vsub.s32 %v1299, %v1301
    %v1303 = vrot.slane %v1275, %v1302
    %v1304 = vcombine.high %v1282, %v1282
    %v1305 = vcombine.high %v1289, %v1289
    %v1306 = vcombine.high %v1296, %v1296
    %v1307 = vcombine.high %v1303, %v1303
    %v1308 = vcombine.high %v21, %v21
    %v1310 = vunpack.c.l.s4 1966171168
    %v1311 = vunpack.c.0.s8 %v1310
    %v1312 = vlaneseq
    %v1313 = vshrl.u32 %v1312, 7
    %v1314 = vsub.s32 %v1311, %v1313
    %v1315 = vrot.slane %v21, %v1314
    %v1317 = vunpack.c.l.s4 1966171168
    %v1318 = vunpack.c.0.s8 %v1317
    %v1319 = vlaneseq
    %v1320 = vshrl.u32 %v1319, 7
    %v1321 = vsub.s32 %v1318, %v1320
    %v1322 = vrot.slane %v1308, %v1321
    %v1323 = vcombine.high %v1315, %v1315
    %v1324 = vcombine.high %v1322, %v1322
    %v1326 = vunpack.c.l.s4 1966171168
    %v1327 = vunpack.c.0.s8 %v1326
    %v1328 = vlaneseq
    %v1329 = vshrl.u32 %v1328, 7
    %v1330 = vsub.s32 %v1327, %v1329
    %v1331 = vrot.slane %v1315, %v1330
    %v1333 = vunpack.c.l.s4 1966171168
    %v1334 = vunpack.c.0.s8 %v1333
    %v1335 = vlaneseq
    %v1336 = vshrl.u32 %v1335, 7
    %v1337 = vsub.s32 %v1334, %v1336
    %v1338 = vrot.slane %v1322, %v1337
    %v1340 = vunpack.c.l.s4 1966171168
    %v1341 = vunpack.c.0.s8 %v1340
    %v1342 = vlaneseq
    %v1343 = vshrl.u32 %v1342, 7
    %v1344 = vsub.s32 %v1341, %v1343
    %v1345 = vrot.slane %v1323, %v1344
    %v1347 = vunpack.c.l.s4 1966171168
    %v1348 = vunpack.c.0.s8 %v1347
    %v1349 = vlaneseq
    %v1350 = vshrl.u32 %v1349, 7
    %v1351 = vsub.s32 %v1348, %v1350
    %v1352 = vrot.slane %v1324, %v1351
    %v1353 = vcombine.high %v1331, %v1331
    %v1354 = vcombine.high %v1338, %v1338
    %v1355 = vcombine.high %v1345, %v1345
    %v1356 = vcombine.high %v1352, %v1352
    %v1357 = vcombine.high %v22, %v22
    %v1359 = vunpack.c.l.s4 1966171168
    %v1360 = vunpack.c.0.s8 %v1359
    %v1361 = vlaneseq
    %v1362 = vshrl.u32 %v1361, 7
    %v1363 = vsub.s32 %v1360, %v1362
    %v1364 = vrot.slane %v22, %v1363
    %v1366 = vunpack.c.l.s4 1966171168
    %v1367 = vunpack.c.0.s8 %v1366
    %v1368 = vlaneseq
    %v1369 = vshrl.u32 %v1368, 7
    %v1370 = vsub.s32 %v1367, %v1369
    %v1371 = vrot.slane %v1357, %v1370
    %v1372 = vcombine.high %v1364, %v1364
    %v1373 = vcombine.high %v1371, %v1371
    %v1375 = vunpack.c.l.s4 1966171168
    %v1376 = vunpack.c.0.s8 %v1375
    %v1377 = vlaneseq
    %v1378 = vshrl.u32 %v1377, 7
    %v1379 = vsub.s32 %v1376, %v1378
    %v1380 = vrot.slane %v1364, %v1379
    %v1382 = vunpack.c.l.s4 1966171168
    %v1383 = vunpack.c.0.s8 %v1382
    %v1384 = vlaneseq
    %v1385 = vshrl.u32 %v1384, 7
    %v1386 = vsub.s32 %v1383, %v1385
    %v1387 = vrot.slane %v1371, %v1386
    %v1389 = vunpack.c.l.s4 1966171168
    %v1390 = vunpack.c.0.s8 %v1389
    %v1391 = vlaneseq
    %v1392 = vshrl.u32 %v1391, 7
    %v1393 = vsub.s32 %v1390, %v1392
    %v1394 = vrot.slane %v1372, %v1393
    %v1396 = vunpack.c.l.s4 1966171168
    %v1397 = vunpack.c.0.s8 %v1396
    %v1398 = vlaneseq
    %v1399 = vshrl.u32 %v1398, 7
    %v1400 = vsub.s32 %v1397, %v1399
    %v1401 = vrot.slane %v1373, %v1400
    %v1402 = vcombine.high %v1380, %v1380
    %v1403 = vcombine.high %v1387, %v1387
    %v1404 = vcombine.high %v1394, %v1394
    %v1405 = vcombine.high %v1401, %v1401
    %v1406 = vcombine.high %v23, %v23
    %v1408 = vunpack.c.l.s4 1966171168
    %v1409 = vunpack.c.0.s8 %v1408
    %v1410 = vlaneseq
    %v1411 = vshrl.u32 %v1410, 7
    %v1412 = vsub.s32 %v1409, %v1411
    %v1413 = vrot.slane %v23, %v1412
    %v1415 = vunpack.c.l.s4 1966171168
    %v1416 = vunpack.c.0.s8 %v1415
    %v1417 = vlaneseq
    %v1418 = vshrl.u32 %v1417, 7
    %v1419 = vsub.s32 %v1416, %v1418
    %v1420 = vrot.slane %v1406, %v1419
    %v1421 = vcombine.high %v1413, %v1413
    %v1422 = vcombine.high %v1420, %v1420
    %v1424 = vunpack.c.l.s4 1966171168
    %v1425 = vunpack.c.0.s8 %v1424
    %v1426 = vlaneseq
    %v1427 = vshrl.u32 %v1426, 7
    %v1428 = vsub.s32 %v1425, %v1427
    %v1429 = vrot.slane %v1413, %v1428
    %v1431 = vunpack.c.l.s4 1966171168
    %v1432 = vunpack.c.0.s8 %v1431
    %v1433 = vlaneseq
    %v1434 = vshrl.u32 %v1433, 7
    %v1435 = vsub.s32 %v1432, %v1434
    %v1436 = vrot.slane %v1420, %v1435
    %v1438 = vunpack.c.l.s4 1966171168
    %v1439 = vunpack.c.0.s8 %v1438
    %v1440 = vlaneseq
    %v1441 = vshrl.u32 %v1440, 7
    %v1442 = vsub.s32 %v1439, %v1441
    %v1443 = vrot.slane %v1421, %v1442
    %v1445 = vunpack.c.l.s4 1966171168
    %v1446 = vunpack.c.0.s8 %v1445
    %v1447 = vlaneseq
    %v1448 = vshrl.u32 %v1447, 7
    %v1449 = vsub.s32 %v1446, %v1448
    %v1450 = vrot.slane %v1422, %v1449
    %v1451 = vcombine.high %v1429, %v1429
    %v1452 = vcombine.high %v1436, %v1436
    %v1453 = vcombine.high %v1443, %v1443
    %v1454 = vcombine.high %v1450, %v1450
    %v2543 = vunpack.c.l.b16 %v24
    %v2544 = vunpack.c.l.b16 %v25
    %v2545 = vunpack.c.l.b16 %v26
    %v2546 = vunpack.c.l.b16 %v27
    %v2547 = vunpack.c.l.b16 %v28
    %v2548 = vunpack.c.l.b16 %v29
    %v2549 = vunpack.c.l.b16 %v30
    %v2550 = vunpack.c.l.b16 %v31
    %v2551 = vunpack.c.l.b16 %v32
    %v2552 = vunpack.c.l.b16 %v33
    %v2553 = vunpack.c.l.b16 %v34
    %v2554 = vunpack.c.l.b16 %v35
    %v2555 = vunpack.c.l.b16 %v36
    %v2556 = vunpack.c.l.b16 %v37
    %v2557 = vunpack.c.l.b16 %v38
    %v2558 = vunpack.c.l.b16 %v39
    %v2559 = vunpack.c.l.b16 %v40
    %v2560 = vunpack.c.l.b16 %v41
    %v2561 = vunpack.c.l.b16 %v42
    %v2562 = vunpack.c.l.b16 %v43
    %v2563 = vunpack.c.l.b16 %v44
    %v2564 = vunpack.c.l.b16 %v45
    %v2565 = vunpack.c.l.b16 %v46
    %v2566 = vunpack.c.l.b16 %v47
    %v2567 = vunpack.c.l.b16 %v48
    %v2568 = vunpack.c.l.b16 %v49
    %v2569 = vunpack.c.l.b16 %v50
    %v2570 = vunpack.c.l.b16 %v51
    %v2571 = vunpack.c.l.b16 %v52
    %v2572 = vunpack.c.l.b16 %v53
    %v2573 = vunpack.c.l.b16 %v54
    %v2574 = vunpack.c.l.b16 %v55
    %v2575 = vunpack.c.l.b16 %v56
    %v2576 = vunpack.c.l.b16 %v57
    %v2577 = vunpack.c.l.b16 %v58
    %v2578 = vunpack.c.l.b16 %v59
    %v2579 = vunpack.c.l.b16 %v60
    %v2580 = vunpack.c.l.b16 %v61
    %v2581 = vunpack.c.l.b16 %v62
    %v2582 = vunpack.c.l.b16 %v63
    %v2583 = vunpack.c.l.b16 %v64
    %v2584 = vunpack.c.l.b16 %v65
    %v2585 = vunpack.c.l.b16 %v66
    %v2586 = vunpack.c.l.b16 %v67
    %v2587 = vunpack.c.l.b16 %v68
    %v2588 = vunpack.c.l.b16 %v69
    %v2589 = vunpack.c.l.b16 %v70
    %v2590 = vunpack.c.l.b16 %v71
    %v2591 = vunpack.c.l.b16 %v72
    %v2592 = vunpack.c.l.b16 %v73
    %v2593 = vunpack.c.l.b16 %v74
    %v2594 = vunpack.c.l.b16 %v75
    %v2595 = vunpack.c.l.b16 %v76
    %v2596 = vunpack.c.l.b16 %v77
    %v2597 = vunpack.c.l.b16 %v78
    %v2598 = vunpack.c.l.b16 %v79
    %v2599 = vunpack.c.l.b16 %v80
    %v2600 = vunpack.c.l.b16 %v81
    %v2601 = vunpack.c.l.b16 %v82
    %v2602 = vunpack.c.l.b16 %v83
    %v2603 = vunpack.c.l.b16 %v84
    %v2604 = vunpack.c.l.b16 %v85
    %v2605 = vunpack.c.l.b16 %v86
    %v2606 = vunpack.c.l.b16 %v87
    %v2607 = vunpack.c.l.b16 %v88
    %v2608 = vunpack.c.l.b16 %v89
    %v2609 = vunpack.c.l.b16 %v90
    %v2610 = vunpack.c.l.b16 %v91
    %v2611 = vunpack.c.l.b16 %v92
    %v2612 = vunpack.c.l.b16 %v93
    %v2613 = vunpack.c.l.b16 %v94
    %v2614 = vunpack.c.l.b16 %v95
    %v2615 = vunpack.c.l.b16 %v96
    %v2616 = vunpack.c.l.b16 %v97
    %v2617 = vunpack.c.l.b16 %v98
    %v2618 = vunpack.c.l.b16 %v99
    %v2619 = vunpack.c.l.b16 %v100
    %v2620 = vunpack.c.l.b16 %v101
    %v2621 = vunpack.c.l.b16 %v102
    %v2622 = vunpack.c.l.b16 %v103
    %v2623 = vunpack.c.l.b16 %v104
    %v2624 = vunpack.c.l.b16 %v105
    %v2625 = vunpack.c.l.b16 %v106
    %v2626 = vunpack.c.l.b16 %v107
    %v2627 = vunpack.c.l.b16 %v108
    %v2628 = vunpack.c.l.b16 %v109
    %v2629 = vunpack.c.l.b16 %v110
    %v2630 = vunpack.c.l.b16 %v111
    %v2631 = vunpack.c.l.b16 %v112
    %v2632 = vunpack.c.l.b16 %v113
    %v2633 = vunpack.c.l.b16 %v114
    %v2634 = vunpack.c.l.b16 %v115
    %v2635 = vunpack.c.l.b16 %v116
    %v2636 = vunpack.c.l.b16 %v117
    %v2637 = vunpack.c.l.b16 %v118
    %v2638 = vunpack.c.l.b16 %v119
    %v2639 = vunpack.c.l.b16 %v120
    %v2640 = vunpack.c.l.b16 %v121
    %v2641 = vunpack.c.l.b16 %v122
    %v2642 = vunpack.c.l.b16 %v123
    %v2643 = vunpack.c.l.b16 %v124
    %v2644 = vunpack.c.l.b16 %v125
    %v2645 = vunpack.c.l.b16 %v126
    %v2646 = vunpack.c.l.b16 %v127
    %v2647 = vunpack.c.l.b16 %v128
    %v2648 = vunpack.c.l.b16 %v129
    %v2649 = vunpack.c.l.b16 %v130
    %v2650 = vunpack.c.l.b16 %v131
    %v2651 = vunpack.c.l.b16 %v132
    %v2652 = vunpack.c.l.b16 %v133
    %v2653 = vunpack.c.l.b16 %v134
    %v2654 = vunpack.c.l.b16 %v135
    %v2655 = vunpack.c.l.b16 %v136
    %v2656 = vunpack.c.l.b16 %v137
    %v2657 = vunpack.c.l.b16 %v138
    %v2658 = vunpack.c.l.b16 %v139
    %v2659 = vunpack.c.l.b16 %v140
    %v2660 = vunpack.c.l.b16 %v141
    %v2661 = vunpack.c.l.b16 %v142
    %v2662 = vunpack.c.l.b16 %v143
    %v2663 = vunpack.c.l.b16 %v144
    %v2664 = vunpack.c.l.b16 %v145
    %v2665 = vunpack.c.l.b16 %v146
    %v2666 = vunpack.c.l.b16 %v147
    %v2667 = vunpack.c.l.b16 %v148
    %v2668 = vunpack.c.l.b16 %v149
    %v2669 = vunpack.c.l.b16 %v150
    %v2670 = vunpack.c.l.b16 %v151
    %v2671 = vunpack.c.l.b16 %v152
    %v2672 = vunpack.c.l.b16 %v153
    %v2673 = vunpack.c.l.b16 %v154
    %v2674 = vunpack.c.l.b16 %v155
    %v2675 = vunpack.c.l.b16 %v156
    %v2676 = vunpack.c.l.b16 %v157
    %v2677 = vunpack.c.l.b16 %v158
    %v2678 = vunpack.c.l.b16 %v159
    %v2679 = vunpack.c.l.b16 %v160
    %v2680 = vunpack.c.l.b16 %v161
    %v2681 = vunpack.c.l.b16 %v162
    %v2682 = vunpack.c.l.b16 %v163
    %v2683 = vunpack.c.l.b16 %v164
    %v2684 = vunpack.c.l.b16 %v165
    %v2685 = vunpack.c.l.b16 %v166
    %v2686 = vunpack.c.l.b16 %v167
    %v2687 = vunpack.c.l.b16 %v168
    %v2688 = vunpack.c.l.b16 %v169
    %v2689 = vunpack.c.l.b16 %v170
    %v2690 = vunpack.c.l.b16 %v171
    %v2691 = vunpack.c.l.b16 %v172
    %v2692 = vunpack.c.l.b16 %v173
    %v2693 = vunpack.c.l.b16 %v174
    %v2694 = vunpack.c.l.b16 %v175
    %v2695 = vunpack.c.l.b16 %v176
    %v2696 = vunpack.c.l.b16 %v177
    %v2697 = vunpack.c.l.b16 %v178
    %v2698 = vunpack.c.l.b16 %v179
    %v2699 = vunpack.c.l.b16 %v180
    %v2700 = vunpack.c.l.b16 %v181
    %v2701 = vunpack.c.l.b16 %v182
    %v2702 = vunpack.c.l.b16 %v183
    %v2703 = vunpack.c.l.b16 %v184
    %v2704 = vunpack.c.l.b16 %v185
    %v2705 = vunpack.c.l.b16 %v186
    %v2706 = vunpack.c.l.b16 %v187
    %v2707 = vunpack.c.l.b16 %v188
    %v2708 = vunpack.c.l.b16 %v189
    %v2709 = vunpack.c.l.b16 %v190
    %v2710 = vunpack.c.l.b16 %v191
    %v2711 = vunpack.c.l.b16 %v192
    %v2712 = vunpack.c.l.b16 %v193
    %v2713 = vunpack.c.l.b16 %v194
    %v2714 = vunpack.c.l.b16 %v195
    %v2715 = vunpack.c.l.b16 %v196
    %v2716 = vunpack.c.l.b16 %v197
    %v2717 = vunpack.c.l.b16 %v198
    %v2718 = vunpack.c.l.b16 %v199
    %v2719 = vunpack.c.l.b16 %v200
    %v2720 = vunpack.c.l.b16 %v201
    %v2721 = vunpack.c.l.b16 %v202
    %v2722 = vunpack.c.l.b16 %v203
    %v2723 = vunpack.c.l.b16 %v204
    %v2724 = vunpack.c.l.b16 %v205
    %v2725 = vunpack.c.l.b16 %v206
    %v2726 = vunpack.c.l.b16 %v207
    %v2727 = vunpack.c.l.b16 %v208
    %v2728 = vunpack.c.l.b16 %v209
    %v2729 = vunpack.c.l.b16 %v210
    %v2730 = vunpack.c.l.b16 %v211
    %v2731 = vunpack.c.l.b16 %v212
    %v2732 = vunpack.c.l.b16 %v213
    %v2733 = vunpack.c.l.b16 %v214
    %v2734 = vunpack.c.l.b16 %v215
    %v2735 = vunpack.c.l.b16 %v216
    %v2736 = vunpack.c.l.b16 %v217
    %v2737 = vunpack.c.l.b16 %v218
    %v2738 = vunpack.c.l.b16 %v219
    %v2739 = vunpack.c.l.b16 %v220
    %v2740 = vunpack.c.l.b16 %v221
    %v2741 = vunpack.c.l.b16 %v222
    %v2742 = vunpack.c.l.b16 %v223
    %v2743 = vunpack.c.l.b16 %v224
    %v2744 = vunpack.c.l.b16 %v225
    %v2745 = vunpack.c.l.b16 %v226
    %v2746 = vunpack.c.l.b16 %v227
    %v2747 = vunpack.c.l.b16 %v228
    %v2748 = vunpack.c.l.b16 %v229
    %v2749 = vunpack.c.l.b16 %v230
    %v2750 = vunpack.c.l.b16 %v231
    %v2751 = vunpack.c.l.b16 %v232
    %v2752 = vunpack.c.l.b16 %v233
    %v2753 = vunpack.c.l.b16 %v234
    %v2754 = vunpack.c.l.b16 %v235
    %v2755 = vunpack.c.l.b16 %v236
    %v2756 = vunpack.c.l.b16 %v237
    %v2757 = vunpack.c.l.b16 %v238
    %v2758 = vunpack.c.l.b16 %v239
    %v2759 = vunpack.c.l.b16 %v240
    %v2760 = vunpack.c.l.b16 %v241
    %v2761 = vunpack.c.l.b16 %v242
    %v2762 = vunpack.c.l.b16 %v243
    %v2763 = vunpack.c.l.b16 %v244
    %v2764 = vunpack.c.l.b16 %v245
    %v2765 = vunpack.c.l.b16 %v246
    %v2766 = vunpack.c.l.b16 %v247
    %v2767 = vunpack.c.l.b16 %v248
    %v2768 = vunpack.c.l.b16 %v249
    %v2769 = vunpack.c.l.b16 %v250
    %v2770 = vunpack.c.l.b16 %v251
    %v2771 = vunpack.c.l.b16 %v252
    %v2772 = vunpack.c.l.b16 %v253
    %v2773 = vunpack.c.l.b16 %v254
    %v2774 = vunpack.c.l.b16 %v255
    %v2775 = vunpack.c.l.b16 %v256
    %v2776 = vunpack.c.l.b16 %v257
    %v2777 = vunpack.c.l.b16 %v258
    %v2778 = vunpack.c.l.b16 %v259
    %v2779 = vunpack.c.l.b16 %v260
    %v2780 = vunpack.c.l.b16 %v261
    %v2781 = vunpack.c.l.b16 %v262
    %v2782 = vunpack.c.l.b16 %v263
    %v2783 = vunpack.c.l.b16 %v264
    %v2784 = vunpack.c.l.b16 %v265
    %v2785 = vunpack.c.l.b16 %v266
    %v2786 = vunpack.c.l.b16 %v267
    %v2787 = vunpack.c.l.b16 %v268
    %v2788 = vunpack.c.l.b16 %v269
    %v2789 = vunpack.c.l.b16 %v270
    %v2790 = vunpack.c.l.b16 %v271
    %v2791 = vunpack.c.l.b16 %v272
    %v2792 = vunpack.c.l.b16 %v273
    %v2793 = vunpack.c.l.b16 %v274
    %v2794 = vunpack.c.l.b16 %v275
    %v2795 = vunpack.c.l.b16 %v276
    %v2796 = vunpack.c.l.b16 %v277
    %v2797 = vunpack.c.l.b16 %v278
    %v2798 = vunpack.c.l.b16 %v279
    %v2799 = vunpack.c.l.b16 %v280
    %v2800 = vunpack.c.l.b16 %v281
    %v2801 = vunpack.c.l.b16 %v282
    %v2802 = vunpack.c.l.b16 %v283
    %v2803 = vunpack.c.l.b16 %v284
    %v2804 = vunpack.c.l.b16 %v285
    %v2805 = vunpack.c.l.b16 %v286
    %v2806 = vunpack.c.l.b16 %v287
    %v2807 = vunpack.c.l.b16 %v288
    %v2808 = vunpack.c.l.b16 %v289
    %v2809 = vunpack.c.l.b16 %v290
    %v2810 = vunpack.c.l.b16 %v291
    %v2811 = vunpack.c.l.b16 %v292
    %v2812 = vunpack.c.l.b16 %v293
    %v2813 = vunpack.c.l.b16 %v294
    %v2814 = vunpack.c.l.b16 %v295
    %v2815 = vunpack.c.l.b16 %v296
    %v2816 = vunpack.c.l.b16 %v297
    %v2817 = vunpack.c.l.b16 %v298
    %v2818 = vunpack.c.l.b16 %v299
    %v2819 = vunpack.c.l.b16 %v300
    %v2820 = vunpack.c.l.b16 %v301
    %v2821 = vunpack.c.l.b16 %v302
    %v2822 = vunpack.c.l.b16 %v303
    %v2823 = vunpack.c.l.b16 %v304
    %v2824 = vunpack.c.l.b16 %v305
    %v2825 = vunpack.c.l.b16 %v306
    %v2826 = vunpack.c.l.b16 %v307
    %v2827 = vunpack.c.l.b16 %v308
    %v2828 = vunpack.c.l.b16 %v309
    %v2829 = vunpack.c.l.b16 %v310
    %v2830 = vunpack.c.l.b16 %v311
    %v2831 = vunpack.c.l.b16 %v312
    %v2832 = vunpack.c.l.b16 %v313
    %v2833 = vunpack.c.l.b16 %v314
    %v2834 = vunpack.c.l.b16 %v315
    %v2835 = vunpack.c.l.b16 %v316
    %v2836 = vunpack.c.l.b16 %v317
    %v2837 = vunpack.c.l.b16 %v318
    %v2838 = vunpack.c.l.b16 %v319
    %v2839 = vunpack.c.l.b16 %v320
    %v2840 = vunpack.c.l.b16 %v321
    %v2841 = vunpack.c.l.b16 %v322
    %v2842 = vunpack.c.l.b16 %v323
    %v2843 = vunpack.c.l.b16 %v324
    %v2844 = vunpack.c.l.b16 %v325
    %v2845 = vunpack.c.l.b16 %v326
    %v2846 = vunpack.c.l.b16 %v327
    %v2847 = vunpack.c.l.b16 %v328
    %v2848 = vunpack.c.l.b16 %v329
    %v2849 = vunpack.c.l.b16 %v330
    %v2850 = vunpack.c.l.b16 %v331
    %v2851 = vunpack.c.l.b16 %v332
    %v2852 = vunpack.c.l.b16 %v333
    %v2853 = vunpack.c.l.b16 %v334
    %v2854 = vunpack.c.l.b16 %v335
    %v2855 = vunpack.c.l.b16 %v336
    %v2856 = vunpack.c.l.b16 %v337
    %v2857 = vunpack.c.l.b16 %v338
    %v2858 = vunpack.c.l.b16 %v339
    %v2859 = vunpack.c.l.b16 %v340
    %v2860 = vunpack.c.l.b16 %v341
    %v2861 = vunpack.c.l.b16 %v342
    %v2862 = vunpack.c.l.b16 %v343
    %v2863 = vunpack.c.l.b16 %v344
    %v2864 = vunpack.c.l.b16 %v345
    %v2865 = vunpack.c.l.b16 %v346
    %v2866 = vunpack.c.l.b16 %v347
    %v2867 = vunpack.c.l.b16 %v348
    %v2868 = vunpack.c.l.b16 %v349
    %v2869 = vunpack.c.l.b16 %v350
    %v2870 = vunpack.c.l.b16 %v351
    %v2871 = vunpack.c.l.b16 %v352
    %v2872 = vunpack.c.l.b16 %v353
    %v2873 = vunpack.c.l.b16 %v354
    %v2874 = vunpack.c.l.b16 %v355
    %v2875 = vunpack.c.l.b16 %v356
    %v2876 = vunpack.c.l.b16 %v357
    %v2877 = vunpack.c.l.b16 %v358
    %v2878 = vunpack.c.l.b16 %v359
    %v2879 = vunpack.c.l.b16 %v360
    %v2880 = vunpack.c.l.b16 %v361
    %v2881 = vunpack.c.l.b16 %v362
    %v2882 = vunpack.c.l.b16 %v363
    %v2883 = vunpack.c.l.b16 %v364
    %v2884 = vunpack.c.l.b16 %v365
    %v2885 = vunpack.c.l.b16 %v366
    %v2886 = vunpack.c.l.b16 %v367
    %v2887 = vunpack.c.l.b16 %v368
    %v2888 = vunpack.c.l.b16 %v369
    %v2889 = vunpack.c.l.b16 %v370
    %v2890 = vunpack.c.l.b16 %v371
    %v2891 = vunpack.c.l.b16 %v372
    %v2892 = vunpack.c.l.b16 %v373
    %v2893 = vunpack.c.l.b16 %v374
    %v2894 = vunpack.c.l.b16 %v375
    %v2895 = vunpack.c.l.b16 %v376
    %v2896 = vunpack.c.l.b16 %v377
    %v2897 = vunpack.c.l.b16 %v378
    %v2898 = vunpack.c.l.b16 %v379
    %v2899 = vunpack.c.l.b16 %v380
    %v2900 = vunpack.c.l.b16 %v381
    %v2901 = vunpack.c.l.b16 %v382
    %v2902 = vunpack.c.l.b16 %v383
    %v2903 = vunpack.c.l.b16 %v384
    %v2904 = vunpack.c.l.b16 %v385
    %v2905 = vunpack.c.l.b16 %v386
    %v2906 = vunpack.c.l.b16 %v387
    %v2907 = vunpack.c.l.b16 %v388
    %v2908 = vunpack.c.l.b16 %v389
    %v2909 = vunpack.c.l.b16 %v390
    %v2910 = vunpack.c.l.b16 %v391
    %v2911 = vunpack.c.l.b16 %v392
    %v2912 = vunpack.c.l.b16 %v393
    %v2913 = vunpack.c.l.b16 %v394
    %v2914 = vunpack.c.l.b16 %v395
    %v2915 = vunpack.c.l.b16 %v396
    %v2916 = vunpack.c.l.b16 %v397
    %v2917 = vunpack.c.l.b16 %v398
    %v2918 = vunpack.c.l.b16 %v399
    %v2919 = vunpack.c.l.b16 %v400
    %v2920 = vunpack.c.l.b16 %v401
    %v2921 = vunpack.c.l.b16 %v402
    %v2922 = vunpack.c.l.b16 %v403
    %v2923 = vunpack.c.l.b16 %v404
    %v2924 = vunpack.c.l.b16 %v405
    %v2925 = vunpack.c.l.b16 %v406
    %v2926 = vunpack.c.l.b16 %v407
    %v2927 = vunpack.c.l.b16 %v408
    %v2928 = vunpack.c.l.b16 %v409
    %v2929 = vunpack.c.l.b16 %v410
    %v2930 = vunpack.c.l.b16 %v411
    %v2931 = vunpack.c.l.b16 %v412
    %v2932 = vunpack.c.l.b16 %v413
    %v2933 = vunpack.c.l.b16 %v414
    %v2934 = vunpack.c.l.b16 %v415
    %v2935 = vunpack.c.l.b16 %v416
    %v2936 = vunpack.c.l.b16 %v417
    %v2937 = vunpack.c.l.b16 %v418
    %v2938 = vunpack.c.l.b16 %v419
    %v2939 = vunpack.c.l.b16 %v420
    %v2940 = vunpack.c.l.b16 %v421
    %v2941 = vunpack.c.l.b16 %v422
    %v2942 = vunpack.c.l.b16 %v423
    %v2943 = vunpack.c.l.b16 %v424
    %v2944 = vunpack.c.l.b16 %v425
    %v2945 = vunpack.c.l.b16 %v426
    %v2946 = vunpack.c.l.b16 %v427
    %v2947 = vunpack.c.l.b16 %v428
    %v2948 = vunpack.c.l.b16 %v429
    %v2949 = vunpack.c.l.b16 %v430
    %v2950 = vunpack.c.l.b16 %v431
    %v2951 = vunpack.c.l.b16 %v432
    %v2952 = vunpack.c.l.b16 %v433
    %v2953 = vunpack.c.l.b16 %v434
    %v2954 = vunpack.c.l.b16 %v435
    %v2955 = vunpack.c.l.b16 %v436
    %v2956 = vunpack.c.l.b16 %v437
    %v2957 = vunpack.c.l.b16 %v438
    %v2958 = vunpack.c.l.b16 %v439
    %v2959 = vunpack.c.l.b16 %v440
    %v2960 = vunpack.c.l.b16 %v441
    %v2961 = vunpack.c.l.b16 %v442
    %v2962 = vunpack.c.l.b16 %v443
    %v2963 = vunpack.c.l.b16 %v444
    %v2964 = vunpack.c.l.b16 %v445
    %v2965 = vunpack.c.l.b16 %v446
    %v2966 = vunpack.c.l.b16 %v447
    %v2967 = vunpack.c.l.b16 %v448
    %v2968 = vunpack.c.l.b16 %v449
    %v2969 = vunpack.c.l.b16 %v450
    %v2970 = vunpack.c.l.b16 %v451
    %v2971 = vunpack.c.l.b16 %v452
    %v2972 = vunpack.c.l.b16 %v453
    %v2973 = vunpack.c.l.b16 %v454
    %v2974 = vunpack.c.l.b16 %v455
    %v2975 = vunpack.c.l.b16 %v456
    %v2976 = vunpack.c.l.b16 %v457
    %v2977 = vunpack.c.l.b16 %v458
    %v2978 = vunpack.c.l.b16 %v459
    %v2979 = vunpack.c.l.b16 %v460
    %v2980 = vunpack.c.l.b16 %v461
    %v2981 = vunpack.c.l.b16 %v462
    %v2982 = vunpack.c.l.b16 %v463
    %v2983 = vunpack.c.l.b16 %v464
    %v2984 = vunpack.c.l.b16 %v465
    %v2985 = vunpack.c.l.b16 %v466
    %v2986 = vunpack.c.l.b16 %v467
    %v2987 = vunpack.c.l.b16 %v468
    %v2988 = vunpack.c.l.b16 %v469
    %v2989 = vunpack.c.l.b16 %v470
    %v2990 = vunpack.c.l.b16 %v471
    %v2991 = vunpack.c.l.b16 %v472
    %v2992 = vunpack.c.l.b16 %v473
    %v2993 = vunpack.c.l.b16 %v474
    %v2994 = vunpack.c.l.b16 %v475
    %v2995 = vunpack.c.l.b16 %v476
    %v2996 = vunpack.c.l.b16 %v477
    %v2997 = vunpack.c.l.b16 %v478
    %v2998 = vunpack.c.l.b16 %v479
    %v2999 = vunpack.c.l.b16 %v480
    %v3000 = vunpack.c.l.b16 %v481
    %v3001 = vunpack.c.l.b16 %v482
    %v3002 = vunpack.c.l.b16 %v483
    %v3003 = vunpack.c.l.b16 %v484
    %v3004 = vunpack.c.l.b16 %v485
    %v3005 = vunpack.c.l.b16 %v486
    %v3006 = vunpack.c.l.b16 %v487
    %v3007 = vunpack.c.l.b16 %v488
    %v3008 = vunpack.c.l.b16 %v489
    %v3009 = vunpack.c.l.b16 %v490
    %v3010 = vunpack.c.l.b16 %v491
    %v3011 = vunpack.c.l.b16 %v492
    %v3012 = vunpack.c.l.b16 %v493
    %v3013 = vunpack.c.l.b16 %v494
    %v3014 = vunpack.c.l.b16 %v495
    %v3015 = vunpack.c.l.b16 %v496
    %v3016 = vunpack.c.l.b16 %v497
    %v3017 = vunpack.c.l.b16 %v498
    %v3018 = vunpack.c.l.b16 %v499
    %v3019 = vunpack.c.l.b16 %v500
    %v3020 = vunpack.c.l.b16 %v501
    %v3021 = vunpack.c.l.b16 %v502
    %v3022 = vunpack.c.l.b16 %v503
    %v3023 = vunpack.c.l.b16 %v504
    %v3024 = vunpack.c.l.b16 %v505
    %v3025 = vunpack.c.l.b16 %v506
    %v3026 = vunpack.c.l.b16 %v507
    %v3027 = vunpack.c.l.b16 %v508
    %v3028 = vunpack.c.l.b16 %v509
    %v3029 = vunpack.c.l.b16 %v510
    %v3030 = vunpack.c.l.b16 %v511
    %v3031 = vunpack.c.l.b16 %v512
    %v3032 = vunpack.c.l.b16 %v513
    %v3033 = vunpack.c.l.b16 %v514
    %v3034 = vunpack.c.l.b16 %v515
    %v3035 = vunpack.c.l.b16 %v516
    %v3036 = vunpack.c.l.b16 %v517
    %v3037 = vunpack.c.l.b16 %v518
    %v3038 = vunpack.c.l.b16 %v519
    %v3039 = vunpack.c.l.b16 %v520
    %v3040 = vunpack.c.l.b16 %v521
    %v3041 = vunpack.c.l.b16 %v522
    %v3042 = vunpack.c.l.b16 %v523
    %v3043 = vunpack.c.l.b16 %v524
    %v3044 = vunpack.c.l.b16 %v525
    %v3045 = vunpack.c.l.b16 %v526
    %v3046 = vunpack.c.l.b16 %v527
    %v3047 = vunpack.c.l.b16 %v528
    %v3048 = vunpack.c.l.b16 %v529
    %v3049 = vunpack.c.l.b16 %v530
    %v3050 = vunpack.c.l.b16 %v531
    %v3051 = vunpack.c.l.b16 %v532
    %v3052 = vunpack.c.l.b16 %v533
    %v3053 = vunpack.c.l.b16 %v534
    %v3054 = vunpack.c.l.b16 %v535
    %v3055 = vunpack.c.l.b16 %v536
    %v3056 = vunpack.c.l.b16 %v537
    %v3057 = vunpack.c.l.b16 %v538
    %v3058 = vunpack.c.l.b16 %v539
    %v3059 = vunpack.c.l.b16 %v540
    %v3060 = vunpack.c.l.b16 %v541
    %v3061 = vunpack.c.l.b16 %v542
    %v3062 = vunpack.c.l.b16 %v543
    %v3063 = vunpack.c.l.b16 %v544
    %v3064 = vunpack.c.l.b16 %v545
    %v3065 = vunpack.c.l.b16 %v546
    %v3066 = vunpack.c.l.b16 %v547
    %v3067 = vunpack.c.l.b16 %v548
    %v3068 = vunpack.c.l.b16 %v549
    %v3069 = vunpack.c.l.b16 %v550
    %v3070 = vunpack.c.l.b16 %v551
    %v3071 = vunpack.c.l.b16 %v552
    %v3072 = vunpack.c.l.b16 %v553
    %v3073 = vunpack.c.l.b16 %v554
    %v3074 = vunpack.c.l.b16 %v555
    %v3075 = vunpack.c.l.b16 %v556
    %v3076 = vunpack.c.l.b16 %v557
    %v3077 = vunpack.c.l.b16 %v558
    %v3078 = vunpack.c.l.b16 %v559
    %v3079 = vunpack.c.l.b16 %v560
    %v3080 = vunpack.c.l.b16 %v561
    %v3081 = vunpack.c.l.b16 %v562
    %v3082 = vunpack.c.l.b16 %v563
    %v3083 = vunpack.c.l.b16 %v564
    %v3084 = vunpack.c.l.b16 %v565
    %v3085 = vunpack.c.l.b16 %v566
    %v3086 = vunpack.c.l.b16 %v567
    %v3087 = vunpack.c.l.b16 %v568
    %v3088 = vunpack.c.l.b16 %v569
    %v3089 = vunpack.c.l.b16 %v570
    %v3090 = vunpack.c.l.b16 %v571
    %v3091 = vunpack.c.l.b16 %v572
    %v3092 = vunpack.c.l.b16 %v573
    %v3093 = vunpack.c.l.b16 %v574
    %v3094 = vunpack.c.l.b16 %v575
    %v3095 = vunpack.c.l.b16 %v576
    %v3096 = vunpack.c.l.b16 %v577
    %v3097 = vunpack.c.l.b16 %v578
    %v3098 = vunpack.c.l.b16 %v579
    %v3099 = vunpack.c.l.b16 %v580
    %v3100 = vunpack.c.l.b16 %v581
    %v3101 = vunpack.c.l.b16 %v582
    %v3102 = vunpack.c.l.b16 %v583
    %v3103 = vunpack.c.l.b16 %v584
    %v3104 = vunpack.c.l.b16 %v585
    %v3105 = vunpack.c.l.b16 %v586
    %v3106 = vunpack.c.l.b16 %v587
    %v3107 = vunpack.c.l.b16 %v588
    %v3108 = vunpack.c.l.b16 %v589
    %v3109 = vunpack.c.l.b16 %v590
    %v3110 = vunpack.c.l.b16 %v591
    %v3111 = vunpack.c.l.b16 %v592
    %v3112 = vunpack.c.l.b16 %v593
    %v3113 = vunpack.c.l.b16 %v594
    %v3114 = vunpack.c.l.b16 %v595
    %v3115 = vunpack.c.l.b16 %v596
    %v3116 = vunpack.c.l.b16 %v597
    %v3117 = vunpack.c.l.b16 %v598
    %v3118 = vunpack.c.l.b16 %v599
    %v3119 = vunpack.c.l.b16 %v600
    %v3120 = vunpack.c.l.b16 %v601
    %v3121 = vunpack.c.l.b16 %v602
    %v3122 = vunpack.c.l.b16 %v603
    %v3123 = vunpack.c.l.b16 %v604
    %v3124 = vunpack.c.l.b16 %v605
    %v3125 = vunpack.c.l.b16 %v606
    %v3126 = vunpack.c.l.b16 %v607
    %v3127 = vunpack.c.l.b16 %v608
    %v3128 = vunpack.c.l.b16 %v609
    %v3129 = vunpack.c.l.b16 %v610
    %v3130 = vunpack.c.l.b16 %v611
    %v3131 = vunpack.c.l.b16 %v612
    %v3132 = vunpack.c.l.b16 %v613
    %v3133 = vunpack.c.l.b16 %v614
    %v3134 = vunpack.c.l.b16 %v615
    %v3135 = vunpack.c.l.b16 %v616
    %v3136 = vunpack.c.l.b16 %v617
    %v3137 = vunpack.c.l.b16 %v618
    %v3138 = vunpack.c.l.b16 %v619
    %v3139 = vunpack.c.l.b16 %v620
    %v3140 = vunpack.c.l.b16 %v621
    %v3141 = vunpack.c.l.b16 %v622
    %v3142 = vunpack.c.l.b16 %v623
    %v3143 = vunpack.c.l.b16 %v624
    %v3144 = vunpack.c.l.b16 %v625
    %v3145 = vunpack.c.l.b16 %v626
    %v3146 = vunpack.c.l.b16 %v627
    %v3147 = vunpack.c.l.b16 %v628
    %v3148 = vunpack.c.l.b16 %v629
    %v3149 = vunpack.c.l.b16 %v630
    %v3150 = vunpack.c.l.b16 %v631
    %v3151 = vunpack.c.l.b16 %v632
    %v3152 = vunpack.c.l.b16 %v633
    %v3153 = vunpack.c.l.b16 %v634
    %v3154 = vunpack.c.l.b16 %v635
    %v3155 = vunpack.c.l.b16 %v636
    %v3156 = vunpack.c.l.b16 %v637
    %v3157 = vunpack.c.l.b16 %v638
    %v3158 = vunpack.c.l.b16 %v639
    %v3159 = vunpack.c.l.b16 %v640
    %v3160 = vunpack.c.l.b16 %v641
    %v3161 = vunpack.c.l.b16 %v642
    %v3162 = vunpack.c.l.b16 %v643
    %v3163 = vunpack.c.l.b16 %v644
    %v3164 = vunpack.c.l.b16 %v645
    %v3165 = vunpack.c.l.b16 %v646
    %v3166 = vunpack.c.l.b16 %v647
    %v3167 = vunpack.c.l.b16 %v648
    %v3168 = vunpack.c.l.b16 %v649
    %v3169 = vunpack.c.l.b16 %v650
    %v3170 = vunpack.c.l.b16 %v651
    %v3171 = vunpack.c.l.b16 %v652
    %v3172 = vunpack.c.l.b16 %v653
    %v3173 = vunpack.c.l.b16 %v654
    %v3174 = vunpack.c.l.b16 %v655
    %v3175 = vunpack.c.l.b16 %v656
    %v3176 = vunpack.c.l.b16 %v657
    %v3177 = vunpack.c.l.b16 %v658
    %v3178 = vunpack.c.l.b16 %v659
    %v3179 = vunpack.c.l.b16 %v660
    %v3180 = vunpack.c.l.b16 %v661
    %v3181 = vunpack.c.l.b16 %v662
    %v3182 = vunpack.c.l.b16 %v663
    %v3183 = vunpack.c.l.b16 %v664
    %v3184 = vunpack.c.l.b16 %v665
    %v3185 = vunpack.c.l.b16 %v666
    %v3186 = vunpack.c.l.b16 %v667
    %v3187 = vunpack.c.l.b16 %v668
    %v3188 = vunpack.c.l.b16 %v669
    %v3189 = vunpack.c.l.b16 %v670
    %v3190 = vunpack.c.l.b16 %v671
    %v3191 = vunpack.c.l.b16 %v672
    %v3192 = vunpack.c.l.b16 %v673
    %v3193 = vunpack.c.l.b16 %v674
    %v3194 = vunpack.c.l.b16 %v675
    %v3195 = vunpack.c.l.b16 %v676
    %v3196 = vunpack.c.l.b16 %v677
    %v3197 = vunpack.c.l.b16 %v678
    %v3198 = vunpack.c.l.b16 %v679
    %v3199 = vunpack.c.l.b16 %v680
    %v3200 = vunpack.c.l.b16 %v681
    %v3201 = vunpack.c.l.b16 %v682
    %v3202 = vunpack.c.l.b16 %v683
    %v3203 = vunpack.c.l.b16 %v684
    %v3204 = vunpack.c.l.b16 %v685
    %v3205 = vunpack.c.l.b16 %v686
    %v3206 = vunpack.c.l.b16 %v687
    %v3207 = vunpack.c.l.b16 %v688
    %v3208 = vunpack.c.l.b16 %v689
    %v3209 = vunpack.c.l.b16 %v690
    %v3210 = vunpack.c.l.b16 %v691
    %v3211 = vunpack.c.l.b16 %v692
    %v3212 = vunpack.c.l.b16 %v693
    %v3213 = vunpack.c.l.b16 %v694
    %v3214 = vunpack.c.l.b16 %v695
    %v3215 = vunpack.c.l.b16 %v696
    %v3216 = vunpack.c.l.b16 %v697
    %v3217 = vunpack.c.l.b16 %v698
    %v3218 = vunpack.c.l.b16 %v699
    %v3219 = vunpack.c.l.b16 %v700
    %v3220 = vunpack.c.l.b16 %v701
    %v3221 = vunpack.c.l.b16 %v702
    %v3222 = vunpack.c.l.b16 %v703
    %v3223 = vunpack.c.l.b16 %v704
    %v3224 = vunpack.c.l.b16 %v705
    %v3225 = vunpack.c.l.b16 %v706
    %v3226 = vunpack.c.l.b16 %v707
    %v3227 = vunpack.c.l.b16 %v708
    %v3228 = vunpack.c.l.b16 %v709
    %v3229 = vunpack.c.l.b16 %v710
    %v3230 = vunpack.c.l.b16 %v711
    %v3231 = vunpack.c.l.b16 %v712
    %v3232 = vunpack.c.l.b16 %v713
    %v3233 = vunpack.c.l.b16 %v714
    %v3234 = vunpack.c.l.b16 %v715
    %v3235 = vunpack.c.l.b16 %v716
    %v3236 = vunpack.c.l.b16 %v717
    %v3237 = vunpack.c.l.b16 %v718
    %v3238 = vunpack.c.l.b16 %v719
    %v3239 = vunpack.c.l.b16 %v720
    %v3240 = vunpack.c.l.b16 %v721
    %v3241 = vunpack.c.l.b16 %v722
    %v3242 = vunpack.c.l.b16 %v723
    %v3243 = vunpack.c.l.b16 %v724
    %v3244 = vunpack.c.l.b16 %v725
    %v3245 = vunpack.c.l.b16 %v726
    %v3246 = vunpack.c.l.b16 %v727
    %v3247 = vunpack.c.l.b16 %v728
    %v3248 = vunpack.c.l.b16 %v729
    %v3249 = vunpack.c.l.b16 %v730
    %v3250 = vunpack.c.l.b16 %v731
    %v3251 = vunpack.c.l.b16 %v732
    %v3252 = vunpack.c.l.b16 %v733
    %v3253 = vunpack.c.l.b16 %v734
    %v3254 = vunpack.c.l.b16 %v735
    %v3255 = vunpack.c.l.b16 %v736
    %v3256 = vunpack.c.l.b16 %v737
    %v3257 = vunpack.c.l.b16 %v738
    %v3258 = vunpack.c.l.b16 %v739
    %v3259 = vunpack.c.l.b16 %v740
    %v3260 = vunpack.c.l.b16 %v741
    %v3261 = vunpack.c.l.b16 %v742
    %v3262 = vunpack.c.l.b16 %v743
    %v3263 = vunpack.c.l.b16 %v744
    %v3264 = vunpack.c.l.b16 %v745
    %v3265 = vunpack.c.l.b16 %v746
    %v3266 = vunpack.c.l.b16 %v747
    %v3267 = vunpack.c.l.b16 %v748
    %v3268 = vunpack.c.l.b16 %v749
    %v3269 = vunpack.c.l.b16 %v750
    %v3270 = vunpack.c.l.b16 %v751
    %v3271 = vunpack.c.l.b16 %v752
    %v3272 = vunpack.c.l.b16 %v753
    %v3273 = vunpack.c.l.b16 %v754
    %v3274 = vunpack.c.l.b16 %v755
    %v3275 = vunpack.c.l.b16 %v756
    %v3276 = vunpack.c.l.b16 %v757
    %v3277 = vunpack.c.l.b16 %v758
    %v3278 = vunpack.c.l.b16 %v759
    %v3279 = vunpack.c.l.b16 %v760
    %v3280 = vunpack.c.l.b16 %v761
    %v3281 = vunpack.c.l.b16 %v762
    %v3282 = vunpack.c.l.b16 %v763
    %v3283 = vunpack.c.l.b16 %v764
    %v3284 = vunpack.c.l.b16 %v765
    %v3285 = vunpack.c.l.b16 %v766
    %v3286 = vunpack.c.l.b16 %v767
    %v3287 = vunpack.c.l.b16 %v768
    %v3288 = vunpack.c.l.b16 %v769
    %v3289 = vunpack.c.l.b16 %v770
    %v3290 = vunpack.c.l.b16 %v771
    %v3291 = vunpack.c.l.b16 %v772
    %v3292 = vunpack.c.l.b16 %v773
    %v3293 = vunpack.c.l.b16 %v774
    %v3294 = vunpack.c.l.b16 %v775
    %v3295 = vunpack.c.l.b16 %v776
    %v3296 = vunpack.c.l.b16 %v777
    %v3297 = vunpack.c.l.b16 %v778
    %v3298 = vunpack.c.l.b16 %v779
    %v3299 = vunpack.c.l.b16 %v780
    %v3300 = vunpack.c.l.b16 %v781
    %v3301 = vunpack.c.l.b16 %v782
    %v3302 = vunpack.c.l.b16 %v783
    %v3303 = vunpack.c.l.b16 %v784
    %v3304 = vunpack.c.l.b16 %v785
    %v3305 = vunpack.c.l.b16 %v786
    %v3306 = vunpack.c.l.b16 %v787
    %v3307 = vunpack.c.l.b16 %v788
    %v3308 = vunpack.c.l.b16 %v789
    %v3309 = vunpack.c.l.b16 %v790
    %v3310 = vunpack.c.l.b16 %v791
    %v3311 = vunpack.c.l.b16 %v792
    %v3312 = vunpack.c.l.b16 %v793
    %v3313 = vunpack.c.l.b16 %v794
    %v3314 = vunpack.c.l.b16 %v795
    %v3315 = vunpack.c.l.b16 %v796
    %v3316 = vunpack.c.l.b16 %v797
    %v3317 = vunpack.c.l.b16 %v798
    %v3318 = vunpack.c.l.b16 %v799
    %v3319 = vunpack.c.l.b16 %v800
    %v3320 = vunpack.c.l.b16 %v801
    %v3321 = vunpack.c.l.b16 %v802
    %v3322 = vunpack.c.l.b16 %v803
    %v3323 = vunpack.c.l.b16 %v804
    %v3324 = vunpack.c.l.b16 %v805
    %v3325 = vunpack.c.l.b16 %v806
    %v3326 = vunpack.c.l.b16 %v807
    %v3327 = vunpack.c.l.b16 %v808
    %v3328 = vunpack.c.l.b16 %v809
    %v3329 = vunpack.c.l.b16 %v810
    %v3330 = vunpack.c.l.b16 %v811
    %v3331 = vunpack.c.l.b16 %v812
    %v3332 = vunpack.c.l.b16 %v813
    %v3333 = vunpack.c.l.b16 %v814
    %v3334 = vunpack.c.l.b16 %v815
    %v3335 = vunpack.c.l.b16 %v816
    %v3336 = vunpack.c.l.b16 %v817
    %v3337 = vunpack.c.l.b16 %v818
    %v3338 = vunpack.c.l.b16 %v819
    %v3339 = vunpack.c.l.b16 %v820
    %v3340 = vunpack.c.l.b16 %v821
    %v3341 = vunpack.c.l.b16 %v822
    %v3342 = vunpack.c.l.b16 %v823
    %v3343 = vunpack.c.l.b16 %v824
    %v3344 = vunpack.c.l.b16 %v825
    %v3345 = vunpack.c.l.b16 %v826
    %v3346 = vunpack.c.l.b16 %v827
    %v3347 = vunpack.c.l.b16 %v828
    %v3348 = vunpack.c.l.b16 %v829
    %v3349 = vunpack.c.l.b16 %v830
    %v3350 = vunpack.c.l.b16 %v831
    %v3351 = vunpack.c.l.b16 %v832
    %v3352 = vunpack.c.l.b16 %v833
    %v3353 = vunpack.c.l.b16 %v834
    %v3354 = vunpack.c.l.b16 %v835
    %v3355 = vunpack.c.l.b16 %v836
    %v3356 = vunpack.c.l.b16 %v837
    %v3357 = vunpack.c.l.b16 %v838
    %v3358 = vunpack.c.l.b16 %v839
    %v3359 = vunpack.c.l.b16 %v840
    %v3360 = vunpack.c.l.b16 %v841
    %v3361 = vunpack.c.l.b16 %v842
    %v3362 = vunpack.c.l.b16 %v843
    %v3363 = vunpack.c.l.b16 %v844
    %v3364 = vunpack.c.l.b16 %v845
    %v3365 = vunpack.c.l.b16 %v846
    %v3366 = vunpack.c.l.b16 %v847
    %v3367 = vunpack.c.l.b16 %v848
    %v3368 = vunpack.c.l.b16 %v849
    %v3369 = vunpack.c.l.b16 %v850
    %v3370 = vunpack.c.l.b16 %v851
    %v3371 = vunpack.c.l.b16 %v852
    %v3372 = vunpack.c.l.b16 %v853
    %v3373 = vunpack.c.l.b16 %v854
    %v3374 = vunpack.c.l.b16 %v855
    %v3375 = vunpack.c.l.b16 %v856
    %v3376 = vunpack.c.l.b16 %v857
    %v3377 = vunpack.c.l.b16 %v858
    %v3378 = vunpack.c.l.b16 %v859
    %v3379 = vunpack.c.l.b16 %v860
    %v3380 = vunpack.c.l.b16 %v861
    %v3381 = vunpack.c.l.b16 %v862
    %v3382 = vunpack.c.l.b16 %v863
    %v3383 = vunpack.c.l.b16 %v864
    %v3384 = vunpack.c.l.b16 %v865
    %v3385 = vunpack.c.l.b16 %v866
    %v3386 = vunpack.c.l.b16 %v867
    %v3387 = vunpack.c.l.b16 %v868
    %v3388 = vunpack.c.l.b16 %v869
    %v3389 = vunpack.c.l.b16 %v870
    %v3390 = vunpack.c.l.b16 %v871
    %v3391 = vunpack.c.l.b16 %v872
    %v3392 = vunpack.c.l.b16 %v873
    %v3393 = vunpack.c.l.b16 %v874
    %v3394 = vunpack.c.l.b16 %v875
    %v3395 = vunpack.c.l.b16 %v876
    %v3396 = vunpack.c.l.b16 %v877
    %v3397 = vunpack.c.l.b16 %v878
    %v3398 = vunpack.c.l.b16 %v879
    %v3399 = vunpack.c.l.b16 %v880
    %v3400 = vunpack.c.l.b16 %v881
    %v3401 = vunpack.c.l.b16 %v882
    %v3402 = vunpack.c.l.b16 %v883
    %v3403 = vunpack.c.l.b16 %v884
    %v3404 = vunpack.c.l.b16 %v885
    %v3405 = vunpack.c.l.b16 %v886
    %v3406 = vunpack.c.l.b16 %v887
    %v3407 = vunpack.c.l.b16 %v888
    %v3408 = vunpack.c.l.b16 %v889
    %v3409 = vunpack.c.l.b16 %v890
    %v3410 = vunpack.c.l.b16 %v891
    %v3411 = vunpack.c.l.b16 %v892
    %v3412 = vunpack.c.l.b16 %v893
    %v3413 = vunpack.c.l.b16 %v894
    %v3414 = vunpack.c.l.b16 %v895
    %v3415 = vunpack.c.l.b16 %v896
    %v3416 = vunpack.c.l.b16 %v897
    %v3417 = vunpack.c.l.b16 %v898
    %v3418 = vunpack.c.l.b16 %v899
    %v3419 = vunpack.c.l.b16 %v900
    %v3420 = vunpack.c.l.b16 %v901
    %v3421 = vunpack.c.l.b16 %v902
    %v3422 = vunpack.c.l.b16 %v903
    %v3423 = vunpack.c.l.b16 %v904
    %v3424 = vunpack.c.l.b16 %v905
    %v3425 = vunpack.c.l.b16 %v906
    %v3426 = vunpack.c.l.b16 %v907
    %v3427 = vunpack.c.l.b16 %v908
    %v3428 = vunpack.c.l.b16 %v909
    %v3429 = vunpack.c.l.b16 %v910
    %v3430 = vunpack.c.l.b16 %v911
    %v3431 = vunpack.c.l.b16 %v912
    %v3432 = vunpack.c.l.b16 %v913
    %v3433 = vunpack.c.l.b16 %v914
    %v3434 = vunpack.c.l.b16 %v915
    %v3435 = vunpack.c.l.b16 %v916
    %v3436 = vunpack.c.l.b16 %v917
    %v3437 = vunpack.c.l.b16 %v918
    %v3438 = vunpack.c.l.b16 %v919
    %v3439 = vunpack.c.l.b16 %v920
    %v3440 = vunpack.c.l.b16 %v921
    %v3441 = vunpack.c.l.b16 %v922
    %v3442 = vunpack.c.l.b16 %v923
    %v3443 = vunpack.c.l.b16 %v924
    %v3444 = vunpack.c.l.b16 %v925
    %v3445 = vunpack.c.l.b16 %v926
    %v3446 = vunpack.c.l.b16 %v927
    %v3447 = vunpack.c.l.b16 %v928
    %v3448 = vunpack.c.l.b16 %v929
    %v3449 = vunpack.c.l.b16 %v930
    %v3450 = vunpack.c.l.b16 %v931
    %v3451 = vunpack.c.l.b16 %v932
    %v3452 = vunpack.c.l.b16 %v933
    %v3453 = vunpack.c.l.b16 %v934
    %v3454 = vunpack.c.l.b16 %v935
    %v3455 = vunpack.c.l.b16 %v936
    %v3456 = vunpack.c.l.b16 %v937
    %v3457 = vunpack.c.l.b16 %v938
    %v3458 = vunpack.c.l.b16 %v939
    %v3459 = vunpack.c.l.b16 %v940
    %v3460 = vunpack.c.l.b16 %v941
    %v3461 = vunpack.c.l.b16 %v942
    %v3462 = vunpack.c.l.b16 %v943
    %v3463 = vunpack.c.l.b16 %v944
    %v3464 = vunpack.c.l.b16 %v945
    %v3465 = vunpack.c.l.b16 %v946
    %v3466 = vunpack.c.l.b16 %v947
    %v3467 = vunpack.c.l.b16 %v948
    %v3468 = vunpack.c.l.b16 %v949
    %v3469 = vunpack.c.l.b16 %v950
    %v3470 = vunpack.c.l.b16 %v951
    %v3471 = vunpack.c.l.b16 %v952
    %v3472 = vunpack.c.l.b16 %v953
    %v3473 = vunpack.c.l.b16 %v954
    %v3474 = vunpack.c.l.b16 %v955
    %v3475 = vunpack.c.l.b16 %v956
    %v3476 = vunpack.c.l.b16 %v957
    %v3477 = vunpack.c.l.b16 %v958
    %v3478 = vunpack.c.l.b16 %v959
    %v3479 = vunpack.c.l.b16 %v960
    %v3480 = vunpack.c.l.b16 %v961
    %v3481 = vunpack.c.l.b16 %v962
    %v3482 = vunpack.c.l.b16 %v963
    %v3483 = vunpack.c.l.b16 %v964
    %v3484 = vunpack.c.l.b16 %v965
    %v3485 = vunpack.c.l.b16 %v966
    %v3486 = vunpack.c.l.b16 %v967
    %v3487 = vunpack.c.l.b16 %v968
    %v3488 = vunpack.c.l.b16 %v969
    %v3489 = vunpack.c.l.b16 %v970
    %v3490 = vunpack.c.l.b16 %v971
    %v3491 = vunpack.c.l.b16 %v972
    %v3492 = vunpack.c.l.b16 %v973
    %v3493 = vunpack.c.l.b16 %v974
    %v3494 = vunpack.c.l.b16 %v975
    %v3495 = vunpack.c.l.b16 %v976
    %v3496 = vunpack.c.l.b16 %v977
    %v3497 = vunpack.c.l.b16 %v978
    %v3498 = vunpack.c.l.b16 %v979
    %v3499 = vunpack.c.l.b16 %v980
    %v3500 = vunpack.c.l.b16 %v981
    %v3501 = vunpack.c.l.b16 %v982
    %v3502 = vunpack.c.l.b16 %v983
    %v3503 = vunpack.c.l.b16 %v984
    %v3504 = vunpack.c.l.b16 %v985
    %v3505 = vunpack.c.l.b16 %v986
    %v3506 = vunpack.c.l.b16 %v987
    %v3507 = vunpack.c.l.b16 %v988
    %v3508 = vunpack.c.l.b16 %v989
    %v3509 = vunpack.c.l.b16 %v990
    %v3510 = vunpack.c.l.b16 %v991
    %v3511 = vunpack.c.l.b16 %v992
    %v3512 = vunpack.c.l.b16 %v993
    %v3513 = vunpack.c.l.b16 %v994
    %v3514 = vunpack.c.l.b16 %v995
    %v3515 = vunpack.c.l.b16 %v996
    %v3516 = vunpack.c.l.b16 %v997
    %v3517 = vunpack.c.l.b16 %v998
    %v3518 = vunpack.c.l.b16 %v999
    %v3519 = vunpack.c.l.b16 %v1000
    %v3520 = vunpack.c.l.b16 %v1001
    %v3521 = vunpack.c.l.b16 %v1002
    %v3522 = vunpack.c.l.b16 %v1003
    %v3523 = vunpack.c.l.b16 %v1004
    %v3524 = vunpack.c.l.b16 %v1005
    %v3525 = vunpack.c.l.b16 %v1006
    %v3526 = vunpack.c.l.b16 %v1007
    %v3527 = vunpack.c.l.b16 %v1008
    %v3528 = vunpack.c.l.b16 %v1009
    %v3529 = vunpack.c.l.b16 %v1010
    %v3530 = vunpack.c.l.b16 %v1011
    %v3531 = vunpack.c.l.b16 %v1012
    %v3532 = vunpack.c.l.b16 %v1013
    %v3533 = vunpack.c.l.b16 %v1014
    %v3534 = vunpack.c.l.b16 %v1015
    %v3535 = vunpack.c.l.b16 %v1016
    %v3536 = vunpack.c.l.b16 %v1017
    %v3537 = vunpack.c.l.b16 %v1018
    %v3538 = vunpack.c.l.b16 %v1019
    %v3539 = vunpack.c.l.b16 %v1020
    %v3540 = vunpack.c.l.b16 %v1021
    %v3541 = vunpack.c.l.b16 %v1022
    %v3542 = vunpack.c.l.b16 %v1023
    %v3543 = vunpack.c.l.b16 %v1024
    %v3544 = vunpack.c.l.b16 %v1025
    %v3545 = vunpack.c.l.b16 %v1026
    %v3546 = vunpack.c.l.b16 %v1027
    %v3547 = vunpack.c.l.b16 %v1028
    %v3548 = vunpack.c.l.b16 %v1029
    %v3549 = vunpack.c.l.b16 %v1030
    %v3550 = vunpack.c.l.b16 %v1031
    %v3551 = vunpack.c.l.b16 %v1032
    %v3552 = vunpack.c.l.b16 %v1033
    %v3553 = vunpack.c.l.b16 %v1034
    %v3554 = vunpack.c.l.b16 %v1035
    %v3555 = vunpack.c.l.b16 %v1036
    %v3556 = vunpack.c.l.b16 %v1037
    %v3557 = vunpack.c.l.b16 %v1038
    %v3558 = vunpack.c.l.b16 %v1039
    %v3559 = vunpack.c.l.b16 %v1040
    %v3560 = vunpack.c.l.b16 %v1041
    %v3561 = vunpack.c.l.b16 %v1042
    %v3562 = vunpack.c.l.b16 %v1043
    %v3563 = vunpack.c.l.b16 %v1044
    %v3564 = vunpack.c.l.b16 %v1045
    %v3565 = vunpack.c.l.b16 %v1046
    %v3566 = vunpack.c.l.b16 %v1047
    %v3567 = vpack.c.b16 %v2544, %v2543
    %v3568 = vpack.c.b16 %v2546, %v2545
    %v3569 = vpack.c.b16 %v2548, %v2547
    %v3570 = vpack.c.b16 %v2550, %v2549
    %v3571 = vpack.c.b16 %v2552, %v2551
    %v3572 = vpack.c.b16 %v2554, %v2553
    %v3573 = vpack.c.b16 %v2556, %v2555
    %v3574 = vpack.c.b16 %v2558, %v2557
    %v3575 = vpack.c.b16 %v2560, %v2559
    %v3576 = vpack.c.b16 %v2562, %v2561
    %v3577 = vpack.c.b16 %v2564, %v2563
    %v3578 = vpack.c.b16 %v2566, %v2565
    %v3579 = vpack.c.b16 %v2568, %v2567
    %v3580 = vpack.c.b16 %v2570, %v2569
    %v3581 = vpack.c.b16 %v2572, %v2571
    %v3582 = vpack.c.b16 %v2574, %v2573
    %v3583 = vpack.c.b16 %v2576, %v2575
    %v3584 = vpack.c.b16 %v2578, %v2577
    %v3585 = vpack.c.b16 %v2580, %v2579
    %v3586 = vpack.c.b16 %v2582, %v2581
    %v3587 = vpack.c.b16 %v2584, %v2583
    %v3588 = vpack.c.b16 %v2586, %v2585
    %v3589 = vpack.c.b16 %v2588, %v2587
    %v3590 = vpack.c.b16 %v2590, %v2589
    %v3591 = vpack.c.b16 %v2592, %v2591
    %v3592 = vpack.c.b16 %v2594, %v2593
    %v3593 = vpack.c.b16 %v2596, %v2595
    %v3594 = vpack.c.b16 %v2598, %v2597
    %v3595 = vpack.c.b16 %v2600, %v2599
    %v3596 = vpack.c.b16 %v2602, %v2601
    %v3597 = vpack.c.b16 %v2604, %v2603
    %v3598 = vpack.c.b16 %v2606, %v2605
    %v3599 = vpack.c.b16 %v2608, %v2607
    %v3600 = vpack.c.b16 %v2610, %v2609
    %v3601 = vpack.c.b16 %v2612, %v2611
    %v3602 = vpack.c.b16 %v2614, %v2613
    %v3603 = vpack.c.b16 %v2616, %v2615
    %v3604 = vpack.c.b16 %v2618, %v2617
    %v3605 = vpack.c.b16 %v2620, %v2619
    %v3606 = vpack.c.b16 %v2622, %v2621
    %v3607 = vpack.c.b16 %v2624, %v2623
    %v3608 = vpack.c.b16 %v2626, %v2625
    %v3609 = vpack.c.b16 %v2628, %v2627
    %v3610 = vpack.c.b16 %v2630, %v2629
    %v3611 = vpack.c.b16 %v2632, %v2631
    %v3612 = vpack.c.b16 %v2634, %v2633
    %v3613 = vpack.c.b16 %v2636, %v2635
    %v3614 = vpack.c.b16 %v2638, %v2637
    %v3615 = vpack.c.b16 %v2640, %v2639
    %v3616 = vpack.c.b16 %v2642, %v2641
    %v3617 = vpack.c.b16 %v2644, %v2643
    %v3618 = vpack.c.b16 %v2646, %v2645
    %v3619 = vpack.c.b16 %v2648, %v2647
    %v3620 = vpack.c.b16 %v2650, %v2649
    %v3621 = vpack.c.b16 %v2652, %v2651
    %v3622 = vpack.c.b16 %v2654, %v2653
    %v3623 = vpack.c.b16 %v2656, %v2655
    %v3624 = vpack.c.b16 %v2658, %v2657
    %v3625 = vpack.c.b16 %v2660, %v2659
    %v3626 = vpack.c.b16 %v2662, %v2661
    %v3627 = vpack.c.b16 %v2664, %v2663
    %v3628 = vpack.c.b16 %v2666, %v2665
    %v3629 = vpack.c.b16 %v2668, %v2667
    %v3630 = vpack.c.b16 %v2670, %v2669
    %v3631 = vpack.c.b16 %v2672, %v2671
    %v3632 = vpack.c.b16 %v2674, %v2673
    %v3633 = vpack.c.b16 %v2676, %v2675
    %v3634 = vpack.c.b16 %v2678, %v2677
    %v3635 = vpack.c.b16 %v2680, %v2679
    %v3636 = vpack.c.b16 %v2682, %v2681
    %v3637 = vpack.c.b16 %v2684, %v2683
    %v3638 = vpack.c.b16 %v2686, %v2685
    %v3639 = vpack.c.b16 %v2688, %v2687
    %v3640 = vpack.c.b16 %v2690, %v2689
    %v3641 = vpack.c.b16 %v2692, %v2691
    %v3642 = vpack.c.b16 %v2694, %v2693
    %v3643 = vpack.c.b16 %v2696, %v2695
    %v3644 = vpack.c.b16 %v2698, %v2697
    %v3645 = vpack.c.b16 %v2700, %v2699
    %v3646 = vpack.c.b16 %v2702, %v2701
    %v3647 = vpack.c.b16 %v2704, %v2703
    %v3648 = vpack.c.b16 %v2706, %v2705
    %v3649 = vpack.c.b16 %v2708, %v2707
    %v3650 = vpack.c.b16 %v2710, %v2709
    %v3651 = vpack.c.b16 %v2712, %v2711
    %v3652 = vpack.c.b16 %v2714, %v2713
    %v3653 = vpack.c.b16 %v2716, %v2715
    %v3654 = vpack.c.b16 %v2718, %v2717
    %v3655 = vpack.c.b16 %v2720, %v2719
    %v3656 = vpack.c.b16 %v2722, %v2721
    %v3657 = vpack.c.b16 %v2724, %v2723
    %v3658 = vpack.c.b16 %v2726, %v2725
    %v3659 = vpack.c.b16 %v2728, %v2727
    %v3660 = vpack.c.b16 %v2730, %v2729
    %v3661 = vpack.c.b16 %v2732, %v2731
    %v3662 = vpack.c.b16 %v2734, %v2733
    %v3663 = vpack.c.b16 %v2736, %v2735
    %v3664 = vpack.c.b16 %v2738, %v2737
    %v3665 = vpack.c.b16 %v2740, %v2739
    %v3666 = vpack.c.b16 %v2742, %v2741
    %v3667 = vpack.c.b16 %v2744, %v2743
    %v3668 = vpack.c.b16 %v2746, %v2745
    %v3669 = vpack.c.b16 %v2748, %v2747
    %v3670 = vpack.c.b16 %v2750, %v2749
    %v3671 = vpack.c.b16 %v2752, %v2751
    %v3672 = vpack.c.b16 %v2754, %v2753
    %v3673 = vpack.c.b16 %v2756, %v2755
    %v3674 = vpack.c.b16 %v2758, %v2757
    %v3675 = vpack.c.b16 %v2760, %v2759
    %v3676 = vpack.c.b16 %v2762, %v2761
    %v3677 = vpack.c.b16 %v2764, %v2763
    %v3678 = vpack.c.b16 %v2766, %v2765
    %v3679 = vpack.c.b16 %v2768, %v2767
    %v3680 = vpack.c.b16 %v2770, %v2769
    %v3681 = vpack.c.b16 %v2772, %v2771
    %v3682 = vpack.c.b16 %v2774, %v2773
    %v3683 = vpack.c.b16 %v2776, %v2775
    %v3684 = vpack.c.b16 %v2778, %v2777
    %v3685 = vpack.c.b16 %v2780, %v2779
    %v3686 = vpack.c.b16 %v2782, %v2781
    %v3687 = vpack.c.b16 %v2784, %v2783
    %v3688 = vpack.c.b16 %v2786, %v2785
    %v3689 = vpack.c.b16 %v2788, %v2787
    %v3690 = vpack.c.b16 %v2790, %v2789
    %v3691 = vpack.c.b16 %v2792, %v2791
    %v3692 = vpack.c.b16 %v2794, %v2793
    %v3693 = vpack.c.b16 %v2796, %v2795
    %v3694 = vpack.c.b16 %v2798, %v2797
    %v3695 = vpack.c.b16 %v2800, %v2799
    %v3696 = vpack.c.b16 %v2802, %v2801
    %v3697 = vpack.c.b16 %v2804, %v2803
    %v3698 = vpack.c.b16 %v2806, %v2805
    %v3699 = vpack.c.b16 %v2808, %v2807
    %v3700 = vpack.c.b16 %v2810, %v2809
    %v3701 = vpack.c.b16 %v2812, %v2811
    %v3702 = vpack.c.b16 %v2814, %v2813
    %v3703 = vpack.c.b16 %v2816, %v2815
    %v3704 = vpack.c.b16 %v2818, %v2817
    %v3705 = vpack.c.b16 %v2820, %v2819
    %v3706 = vpack.c.b16 %v2822, %v2821
    %v3707 = vpack.c.b16 %v2824, %v2823
    %v3708 = vpack.c.b16 %v2826, %v2825
    %v3709 = vpack.c.b16 %v2828, %v2827
    %v3710 = vpack.c.b16 %v2830, %v2829
    %v3711 = vpack.c.b16 %v2832, %v2831
    %v3712 = vpack.c.b16 %v2834, %v2833
    %v3713 = vpack.c.b16 %v2836, %v2835
    %v3714 = vpack.c.b16 %v2838, %v2837
    %v3715 = vpack.c.b16 %v2840, %v2839
    %v3716 = vpack.c.b16 %v2842, %v2841
    %v3717 = vpack.c.b16 %v2844, %v2843
    %v3718 = vpack.c.b16 %v2846, %v2845
    %v3719 = vpack.c.b16 %v2848, %v2847
    %v3720 = vpack.c.b16 %v2850, %v2849
    %v3721 = vpack.c.b16 %v2852, %v2851
    %v3722 = vpack.c.b16 %v2854, %v2853
    %v3723 = vpack.c.b16 %v2856, %v2855
    %v3724 = vpack.c.b16 %v2858, %v2857
    %v3725 = vpack.c.b16 %v2860, %v2859
    %v3726 = vpack.c.b16 %v2862, %v2861
    %v3727 = vpack.c.b16 %v2864, %v2863
    %v3728 = vpack.c.b16 %v2866, %v2865
    %v3729 = vpack.c.b16 %v2868, %v2867
    %v3730 = vpack.c.b16 %v2870, %v2869
    %v3731 = vpack.c.b16 %v2872, %v2871
    %v3732 = vpack.c.b16 %v2874, %v2873
    %v3733 = vpack.c.b16 %v2876, %v2875
    %v3734 = vpack.c.b16 %v2878, %v2877
    %v3735 = vpack.c.b16 %v2880, %v2879
    %v3736 = vpack.c.b16 %v2882, %v2881
    %v3737 = vpack.c.b16 %v2884, %v2883
    %v3738 = vpack.c.b16 %v2886, %v2885
    %v3739 = vpack.c.b16 %v2888, %v2887
    %v3740 = vpack.c.b16 %v2890, %v2889
    %v3741 = vpack.c.b16 %v2892, %v2891
    %v3742 = vpack.c.b16 %v2894, %v2893
    %v3743 = vpack.c.b16 %v2896, %v2895
    %v3744 = vpack.c.b16 %v2898, %v2897
    %v3745 = vpack.c.b16 %v2900, %v2899
    %v3746 = vpack.c.b16 %v2902, %v2901
    %v3747 = vpack.c.b16 %v2904, %v2903
    %v3748 = vpack.c.b16 %v2906, %v2905
    %v3749 = vpack.c.b16 %v2908, %v2907
    %v3750 = vpack.c.b16 %v2910, %v2909
    %v3751 = vpack.c.b16 %v2912, %v2911
    %v3752 = vpack.c.b16 %v2914, %v2913
    %v3753 = vpack.c.b16 %v2916, %v2915
    %v3754 = vpack.c.b16 %v2918, %v2917
    %v3755 = vpack.c.b16 %v2920, %v2919
    %v3756 = vpack.c.b16 %v2922, %v2921
    %v3757 = vpack.c.b16 %v2924, %v2923
    %v3758 = vpack.c.b16 %v2926, %v2925
    %v3759 = vpack.c.b16 %v2928, %v2927
    %v3760 = vpack.c.b16 %v2930, %v2929
    %v3761 = vpack.c.b16 %v2932, %v2931
    %v3762 = vpack.c.b16 %v2934, %v2933
    %v3763 = vpack.c.b16 %v2936, %v2935
    %v3764 = vpack.c.b16 %v2938, %v2937
    %v3765 = vpack.c.b16 %v2940, %v2939
    %v3766 = vpack.c.b16 %v2942, %v2941
    %v3767 = vpack.c.b16 %v2944, %v2943
    %v3768 = vpack.c.b16 %v2946, %v2945
    %v3769 = vpack.c.b16 %v2948, %v2947
    %v3770 = vpack.c.b16 %v2950, %v2949
    %v3771 = vpack.c.b16 %v2952, %v2951
    %v3772 = vpack.c.b16 %v2954, %v2953
    %v3773 = vpack.c.b16 %v2956, %v2955
    %v3774 = vpack.c.b16 %v2958, %v2957
    %v3775 = vpack.c.b16 %v2960, %v2959
    %v3776 = vpack.c.b16 %v2962, %v2961
    %v3777 = vpack.c.b16 %v2964, %v2963
    %v3778 = vpack.c.b16 %v2966, %v2965
    %v3779 = vpack.c.b16 %v2968, %v2967
    %v3780 = vpack.c.b16 %v2970, %v2969
    %v3781 = vpack.c.b16 %v2972, %v2971
    %v3782 = vpack.c.b16 %v2974, %v2973
    %v3783 = vpack.c.b16 %v2976, %v2975
    %v3784 = vpack.c.b16 %v2978, %v2977
    %v3785 = vpack.c.b16 %v2980, %v2979
    %v3786 = vpack.c.b16 %v2982, %v2981
    %v3787 = vpack.c.b16 %v2984, %v2983
    %v3788 = vpack.c.b16 %v2986, %v2985
    %v3789 = vpack.c.b16 %v2988, %v2987
    %v3790 = vpack.c.b16 %v2990, %v2989
    %v3791 = vpack.c.b16 %v2992, %v2991
    %v3792 = vpack.c.b16 %v2994, %v2993
    %v3793 = vpack.c.b16 %v2996, %v2995
    %v3794 = vpack.c.b16 %v2998, %v2997
    %v3795 = vpack.c.b16 %v3000, %v2999
    %v3796 = vpack.c.b16 %v3002, %v3001
    %v3797 = vpack.c.b16 %v3004, %v3003
    %v3798 = vpack.c.b16 %v3006, %v3005
    %v3799 = vpack.c.b16 %v3008, %v3007
    %v3800 = vpack.c.b16 %v3010, %v3009
    %v3801 = vpack.c.b16 %v3012, %v3011
    %v3802 = vpack.c.b16 %v3014, %v3013
    %v3803 = vpack.c.b16 %v3016, %v3015
    %v3804 = vpack.c.b16 %v3018, %v3017
    %v3805 = vpack.c.b16 %v3020, %v3019
    %v3806 = vpack.c.b16 %v3022, %v3021
    %v3807 = vpack.c.b16 %v3024, %v3023
    %v3808 = vpack.c.b16 %v3026, %v3025
    %v3809 = vpack.c.b16 %v3028, %v3027
    %v3810 = vpack.c.b16 %v3030, %v3029
    %v3811 = vpack.c.b16 %v3032, %v3031
    %v3812 = vpack.c.b16 %v3034, %v3033
    %v3813 = vpack.c.b16 %v3036, %v3035
    %v3814 = vpack.c.b16 %v3038, %v3037
    %v3815 = vpack.c.b16 %v3040, %v3039
    %v3816 = vpack.c.b16 %v3042, %v3041
    %v3817 = vpack.c.b16 %v3044, %v3043
    %v3818 = vpack.c.b16 %v3046, %v3045
    %v3819 = vpack.c.b16 %v3048, %v3047
    %v3820 = vpack.c.b16 %v3050, %v3049
    %v3821 = vpack.c.b16 %v3052, %v3051
    %v3822 = vpack.c.b16 %v3054, %v3053
    %v3823 = vpack.c.b16 %v3056, %v3055
    %v3824 = vpack.c.b16 %v3058, %v3057
    %v3825 = vpack.c.b16 %v3060, %v3059
    %v3826 = vpack.c.b16 %v3062, %v3061
    %v3827 = vpack.c.b16 %v3064, %v3063
    %v3828 = vpack.c.b16 %v3066, %v3065
    %v3829 = vpack.c.b16 %v3068, %v3067
    %v3830 = vpack.c.b16 %v3070, %v3069
    %v3831 = vpack.c.b16 %v3072, %v3071
    %v3832 = vpack.c.b16 %v3074, %v3073
    %v3833 = vpack.c.b16 %v3076, %v3075
    %v3834 = vpack.c.b16 %v3078, %v3077
    %v3835 = vpack.c.b16 %v3080, %v3079
    %v3836 = vpack.c.b16 %v3082, %v3081
    %v3837 = vpack.c.b16 %v3084, %v3083
    %v3838 = vpack.c.b16 %v3086, %v3085
    %v3839 = vpack.c.b16 %v3088, %v3087
    %v3840 = vpack.c.b16 %v3090, %v3089
    %v3841 = vpack.c.b16 %v3092, %v3091
    %v3842 = vpack.c.b16 %v3094, %v3093
    %v3843 = vpack.c.b16 %v3096, %v3095
    %v3844 = vpack.c.b16 %v3098, %v3097
    %v3845 = vpack.c.b16 %v3100, %v3099
    %v3846 = vpack.c.b16 %v3102, %v3101
    %v3847 = vpack.c.b16 %v3104, %v3103
    %v3848 = vpack.c.b16 %v3106, %v3105
    %v3849 = vpack.c.b16 %v3108, %v3107
    %v3850 = vpack.c.b16 %v3110, %v3109
    %v3851 = vpack.c.b16 %v3112, %v3111
    %v3852 = vpack.c.b16 %v3114, %v3113
    %v3853 = vpack.c.b16 %v3116, %v3115
    %v3854 = vpack.c.b16 %v3118, %v3117
    %v3855 = vpack.c.b16 %v3120, %v3119
    %v3856 = vpack.c.b16 %v3122, %v3121
    %v3857 = vpack.c.b16 %v3124, %v3123
    %v3858 = vpack.c.b16 %v3126, %v3125
    %v3859 = vpack.c.b16 %v3128, %v3127
    %v3860 = vpack.c.b16 %v3130, %v3129
    %v3861 = vpack.c.b16 %v3132, %v3131
    %v3862 = vpack.c.b16 %v3134, %v3133
    %v3863 = vpack.c.b16 %v3136, %v3135
    %v3864 = vpack.c.b16 %v3138, %v3137
    %v3865 = vpack.c.b16 %v3140, %v3139
    %v3866 = vpack.c.b16 %v3142, %v3141
    %v3867 = vpack.c.b16 %v3144, %v3143
    %v3868 = vpack.c.b16 %v3146, %v3145
    %v3869 = vpack.c.b16 %v3148, %v3147
    %v3870 = vpack.c.b16 %v3150, %v3149
    %v3871 = vpack.c.b16 %v3152, %v3151
    %v3872 = vpack.c.b16 %v3154, %v3153
    %v3873 = vpack.c.b16 %v3156, %v3155
    %v3874 = vpack.c.b16 %v3158, %v3157
    %v3875 = vpack.c.b16 %v3160, %v3159
    %v3876 = vpack.c.b16 %v3162, %v3161
    %v3877 = vpack.c.b16 %v3164, %v3163
    %v3878 = vpack.c.b16 %v3166, %v3165
    %v3879 = vpack.c.b16 %v3168, %v3167
    %v3880 = vpack.c.b16 %v3170, %v3169
    %v3881 = vpack.c.b16 %v3172, %v3171
    %v3882 = vpack.c.b16 %v3174, %v3173
    %v3883 = vpack.c.b16 %v3176, %v3175
    %v3884 = vpack.c.b16 %v3178, %v3177
    %v3885 = vpack.c.b16 %v3180, %v3179
    %v3886 = vpack.c.b16 %v3182, %v3181
    %v3887 = vpack.c.b16 %v3184, %v3183
    %v3888 = vpack.c.b16 %v3186, %v3185
    %v3889 = vpack.c.b16 %v3188, %v3187
    %v3890 = vpack.c.b16 %v3190, %v3189
    %v3891 = vpack.c.b16 %v3192, %v3191
    %v3892 = vpack.c.b16 %v3194, %v3193
    %v3893 = vpack.c.b16 %v3196, %v3195
    %v3894 = vpack.c.b16 %v3198, %v3197
    %v3895 = vpack.c.b16 %v3200, %v3199
    %v3896 = vpack.c.b16 %v3202, %v3201
    %v3897 = vpack.c.b16 %v3204, %v3203
    %v3898 = vpack.c.b16 %v3206, %v3205
    %v3899 = vpack.c.b16 %v3208, %v3207
    %v3900 = vpack.c.b16 %v3210, %v3209
    %v3901 = vpack.c.b16 %v3212, %v3211
    %v3902 = vpack.c.b16 %v3214, %v3213
    %v3903 = vpack.c.b16 %v3216, %v3215
    %v3904 = vpack.c.b16 %v3218, %v3217
    %v3905 = vpack.c.b16 %v3220, %v3219
    %v3906 = vpack.c.b16 %v3222, %v3221
    %v3907 = vpack.c.b16 %v3224, %v3223
    %v3908 = vpack.c.b16 %v3226, %v3225
    %v3909 = vpack.c.b16 %v3228, %v3227
    %v3910 = vpack.c.b16 %v3230, %v3229
    %v3911 = vpack.c.b16 %v3232, %v3231
    %v3912 = vpack.c.b16 %v3234, %v3233
    %v3913 = vpack.c.b16 %v3236, %v3235
    %v3914 = vpack.c.b16 %v3238, %v3237
    %v3915 = vpack.c.b16 %v3240, %v3239
    %v3916 = vpack.c.b16 %v3242, %v3241
    %v3917 = vpack.c.b16 %v3244, %v3243
    %v3918 = vpack.c.b16 %v3246, %v3245
    %v3919 = vpack.c.b16 %v3248, %v3247
    %v3920 = vpack.c.b16 %v3250, %v3249
    %v3921 = vpack.c.b16 %v3252, %v3251
    %v3922 = vpack.c.b16 %v3254, %v3253
    %v3923 = vpack.c.b16 %v3256, %v3255
    %v3924 = vpack.c.b16 %v3258, %v3257
    %v3925 = vpack.c.b16 %v3260, %v3259
    %v3926 = vpack.c.b16 %v3262, %v3261
    %v3927 = vpack.c.b16 %v3264, %v3263
    %v3928 = vpack.c.b16 %v3266, %v3265
    %v3929 = vpack.c.b16 %v3268, %v3267
    %v3930 = vpack.c.b16 %v3270, %v3269
    %v3931 = vpack.c.b16 %v3272, %v3271
    %v3932 = vpack.c.b16 %v3274, %v3273
    %v3933 = vpack.c.b16 %v3276, %v3275
    %v3934 = vpack.c.b16 %v3278, %v3277
    %v3935 = vpack.c.b16 %v3280, %v3279
    %v3936 = vpack.c.b16 %v3282, %v3281
    %v3937 = vpack.c.b16 %v3284, %v3283
    %v3938 = vpack.c.b16 %v3286, %v3285
    %v3939 = vpack.c.b16 %v3288, %v3287
    %v3940 = vpack.c.b16 %v3290, %v3289
    %v3941 = vpack.c.b16 %v3292, %v3291
    %v3942 = vpack.c.b16 %v3294, %v3293
    %v3943 = vpack.c.b16 %v3296, %v3295
    %v3944 = vpack.c.b16 %v3298, %v3297
    %v3945 = vpack.c.b16 %v3300, %v3299
    %v3946 = vpack.c.b16 %v3302, %v3301
    %v3947 = vpack.c.b16 %v3304, %v3303
    %v3948 = vpack.c.b16 %v3306, %v3305
    %v3949 = vpack.c.b16 %v3308, %v3307
    %v3950 = vpack.c.b16 %v3310, %v3309
    %v3951 = vpack.c.b16 %v3312, %v3311
    %v3952 = vpack.c.b16 %v3314, %v3313
    %v3953 = vpack.c.b16 %v3316, %v3315
    %v3954 = vpack.c.b16 %v3318, %v3317
    %v3955 = vpack.c.b16 %v3320, %v3319
    %v3956 = vpack.c.b16 %v3322, %v3321
    %v3957 = vpack.c.b16 %v3324, %v3323
    %v3958 = vpack.c.b16 %v3326, %v3325
    %v3959 = vpack.c.b16 %v3328, %v3327
    %v3960 = vpack.c.b16 %v3330, %v3329
    %v3961 = vpack.c.b16 %v3332, %v3331
    %v3962 = vpack.c.b16 %v3334, %v3333
    %v3963 = vpack.c.b16 %v3336, %v3335
    %v3964 = vpack.c.b16 %v3338, %v3337
    %v3965 = vpack.c.b16 %v3340, %v3339
    %v3966 = vpack.c.b16 %v3342, %v3341
    %v3967 = vpack.c.b16 %v3344, %v3343
    %v3968 = vpack.c.b16 %v3346, %v3345
    %v3969 = vpack.c.b16 %v3348, %v3347
    %v3970 = vpack.c.b16 %v3350, %v3349
    %v3971 = vpack.c.b16 %v3352, %v3351
    %v3972 = vpack.c.b16 %v3354, %v3353
    %v3973 = vpack.c.b16 %v3356, %v3355
    %v3974 = vpack.c.b16 %v3358, %v3357
    %v3975 = vpack.c.b16 %v3360, %v3359
    %v3976 = vpack.c.b16 %v3362, %v3361
    %v3977 = vpack.c.b16 %v3364, %v3363
    %v3978 = vpack.c.b16 %v3366, %v3365
    %v3979 = vpack.c.b16 %v3368, %v3367
    %v3980 = vpack.c.b16 %v3370, %v3369
    %v3981 = vpack.c.b16 %v3372, %v3371
    %v3982 = vpack.c.b16 %v3374, %v3373
    %v3983 = vpack.c.b16 %v3376, %v3375
    %v3984 = vpack.c.b16 %v3378, %v3377
    %v3985 = vpack.c.b16 %v3380, %v3379
    %v3986 = vpack.c.b16 %v3382, %v3381
    %v3987 = vpack.c.b16 %v3384, %v3383
    %v3988 = vpack.c.b16 %v3386, %v3385
    %v3989 = vpack.c.b16 %v3388, %v3387
    %v3990 = vpack.c.b16 %v3390, %v3389
    %v3991 = vpack.c.b16 %v3392, %v3391
    %v3992 = vpack.c.b16 %v3394, %v3393
    %v3993 = vpack.c.b16 %v3396, %v3395
    %v3994 = vpack.c.b16 %v3398, %v3397
    %v3995 = vpack.c.b16 %v3400, %v3399
    %v3996 = vpack.c.b16 %v3402, %v3401
    %v3997 = vpack.c.b16 %v3404, %v3403
    %v3998 = vpack.c.b16 %v3406, %v3405
    %v3999 = vpack.c.b16 %v3408, %v3407
    %v4000 = vpack.c.b16 %v3410, %v3409
    %v4001 = vpack.c.b16 %v3412, %v3411
    %v4002 = vpack.c.b16 %v3414, %v3413
    %v4003 = vpack.c.b16 %v3416, %v3415
    %v4004 = vpack.c.b16 %v3418, %v3417
    %v4005 = vpack.c.b16 %v3420, %v3419
    %v4006 = vpack.c.b16 %v3422, %v3421
    %v4007 = vpack.c.b16 %v3424, %v3423
    %v4008 = vpack.c.b16 %v3426, %v3425
    %v4009 = vpack.c.b16 %v3428, %v3427
    %v4010 = vpack.c.b16 %v3430, %v3429
    %v4011 = vpack.c.b16 %v3432, %v3431
    %v4012 = vpack.c.b16 %v3434, %v3433
    %v4013 = vpack.c.b16 %v3436, %v3435
    %v4014 = vpack.c.b16 %v3438, %v3437
    %v4015 = vpack.c.b16 %v3440, %v3439
    %v4016 = vpack.c.b16 %v3442, %v3441
    %v4017 = vpack.c.b16 %v3444, %v3443
    %v4018 = vpack.c.b16 %v3446, %v3445
    %v4019 = vpack.c.b16 %v3448, %v3447
    %v4020 = vpack.c.b16 %v3450, %v3449
    %v4021 = vpack.c.b16 %v3452, %v3451
    %v4022 = vpack.c.b16 %v3454, %v3453
    %v4023 = vpack.c.b16 %v3456, %v3455
    %v4024 = vpack.c.b16 %v3458, %v3457
    %v4025 = vpack.c.b16 %v3460, %v3459
    %v4026 = vpack.c.b16 %v3462, %v3461
    %v4027 = vpack.c.b16 %v3464, %v3463
    %v4028 = vpack.c.b16 %v3466, %v3465
    %v4029 = vpack.c.b16 %v3468, %v3467
    %v4030 = vpack.c.b16 %v3470, %v3469
    %v4031 = vpack.c.b16 %v3472, %v3471
    %v4032 = vpack.c.b16 %v3474, %v3473
    %v4033 = vpack.c.b16 %v3476, %v3475
    %v4034 = vpack.c.b16 %v3478, %v3477
    %v4035 = vpack.c.b16 %v3480, %v3479
    %v4036 = vpack.c.b16 %v3482, %v3481
    %v4037 = vpack.c.b16 %v3484, %v3483
    %v4038 = vpack.c.b16 %v3486, %v3485
    %v4039 = vpack.c.b16 %v3488, %v3487
    %v4040 = vpack.c.b16 %v3490, %v3489
    %v4041 = vpack.c.b16 %v3492, %v3491
    %v4042 = vpack.c.b16 %v3494, %v3493
    %v4043 = vpack.c.b16 %v3496, %v3495
    %v4044 = vpack.c.b16 %v3498, %v3497
    %v4045 = vpack.c.b16 %v3500, %v3499
    %v4046 = vpack.c.b16 %v3502, %v3501
    %v4047 = vpack.c.b16 %v3504, %v3503
    %v4048 = vpack.c.b16 %v3506, %v3505
    %v4049 = vpack.c.b16 %v3508, %v3507
    %v4050 = vpack.c.b16 %v3510, %v3509
    %v4051 = vpack.c.b16 %v3512, %v3511
    %v4052 = vpack.c.b16 %v3514, %v3513
    %v4053 = vpack.c.b16 %v3516, %v3515
    %v4054 = vpack.c.b16 %v3518, %v3517
    %v4055 = vpack.c.b16 %v3520, %v3519
    %v4056 = vpack.c.b16 %v3522, %v3521
    %v4057 = vpack.c.b16 %v3524, %v3523
    %v4058 = vpack.c.b16 %v3526, %v3525
    %v4059 = vpack.c.b16 %v3528, %v3527
    %v4060 = vpack.c.b16 %v3530, %v3529
    %v4061 = vpack.c.b16 %v3532, %v3531
    %v4062 = vpack.c.b16 %v3534, %v3533
    %v4063 = vpack.c.b16 %v3536, %v3535
    %v4064 = vpack.c.b16 %v3538, %v3537
    %v4065 = vpack.c.b16 %v3540, %v3539
    %v4066 = vpack.c.b16 %v3542, %v3541
    %v4067 = vpack.c.b16 %v3544, %v3543
    %v4068 = vpack.c.b16 %v3546, %v3545
    %v4069 = vpack.c.b16 %v3548, %v3547
    %v4070 = vpack.c.b16 %v3550, %v3549
    %v4071 = vpack.c.b16 %v3552, %v3551
    %v4072 = vpack.c.b16 %v3554, %v3553
    %v4073 = vpack.c.b16 %v3556, %v3555
    %v4074 = vpack.c.b16 %v3558, %v3557
    %v4075 = vpack.c.b16 %v3560, %v3559
    %v4076 = vpack.c.b16 %v3562, %v3561
    %v4077 = vpack.c.b16 %v3564, %v3563
    %v4078 = vpack.c.b16 %v3566, %v3565
    %4591 = vmatprep.subr.bf16.mxu0 0
    %4592 = vmatpush1.bf16.msra.mxu0 %v3574
    %4593 = vmatprep.subr.bf16.mxu0 0
    %4594 = vmatpush1.bf16.msra.mxu0 %v3573
    %4595 = vmatprep.subr.bf16.mxu0 0
    %4596 = vmatpush1.bf16.msra.mxu0 %v3572
    %4597 = vmatprep.subr.bf16.mxu0 0
    %4598 = vmatpush1.bf16.msra.mxu0 %v3571
    %4599 = vmatprep.subr.bf16.mxu0 0
    %4600 = vmatpush1.bf16.msra.mxu0 %v3570
    %4601 = vmatprep.subr.bf16.mxu0 0
    %4602 = vmatpush1.bf16.msra.mxu0 %v3569
    %4603 = vmatprep.subr.bf16.mxu0 0
    %4604 = vmatpush1.bf16.msra.mxu0 %v3568
    %4605 = vmatprep.subr.bf16.mxu0 0
    %4606 = vmatpush1.bf16.msra.mxu0 %v3567
    %4607 = vmatprep.subr.bf16.mxu0 0
    %4608 = vmatpush2.bf16.msra.mxu0 %v3582
    %4609 = vmatprep.subr.bf16.mxu0 0
    %4610 = vmatpush2.bf16.msra.mxu0 %v3581
    %4611 = vmatprep.subr.bf16.mxu0 0
    %4612 = vmatpush2.bf16.msra.mxu0 %v3580
    %4613 = vmatprep.subr.bf16.mxu0 0
    %4614 = vmatpush2.bf16.msra.mxu0 %v3579
    %4615 = vmatprep.subr.bf16.mxu0 0
    %4616 = vmatpush2.bf16.msra.mxu0 %v3578
    %4617 = vmatprep.subr.bf16.mxu0 0
    %4618 = vmatpush2.bf16.msra.mxu0 %v3577
    %4619 = vmatprep.subr.bf16.mxu0 0
    %4620 = vmatpush2.bf16.msra.mxu0 %v3576
    %4621 = vmatprep.subr.bf16.mxu0 0
    %4622 = vmatpush2.bf16.msra.mxu0 %v3575
    %4623 = vmatprep.mubr.bf16.mxu0 %v1100
    %4624 = vmatmul.mubr.bf16.gmra.mxu0 %v1086
    %v4625 = vpop.f32.mrf.mxu0
    %v4626 = vadd.f32 %v1053, %v4625
    %v4627 = vpop.f32.mrf.mxu0
    %v4628 = vpop.f32.mrf.mxu0
    %v4629 = vpop.f32.mrf.mxu0
    %4630 = vdwg.mxu0
    %4631 = vmatprep.subr.bf16.mxu0 0
    %4632 = vmatpush1.bf16.msra.mxu0 %v3590
    %4633 = vmatprep.subr.bf16.mxu0 0
    %4634 = vmatpush1.bf16.msra.mxu0 %v3589
    %4635 = vmatprep.subr.bf16.mxu0 0
    %4636 = vmatpush1.bf16.msra.mxu0 %v3588
    %4637 = vmatprep.subr.bf16.mxu0 0
    %4638 = vmatpush1.bf16.msra.mxu0 %v3587
    %4639 = vmatprep.subr.bf16.mxu0 0
    %4640 = vmatpush1.bf16.msra.mxu0 %v3586
    %4641 = vmatprep.subr.bf16.mxu0 0
    %4642 = vmatpush1.bf16.msra.mxu0 %v3585
    %4643 = vmatprep.subr.bf16.mxu0 0
    %4644 = vmatpush1.bf16.msra.mxu0 %v3584
    %4645 = vmatprep.subr.bf16.mxu0 0
    %4646 = vmatpush1.bf16.msra.mxu0 %v3583
    %4647 = vmatprep.subr.bf16.mxu0 0
    %4648 = vmatpush2.bf16.msra.mxu0 %v3598
    %4649 = vmatprep.subr.bf16.mxu0 0
    %4650 = vmatpush2.bf16.msra.mxu0 %v3597
    %4651 = vmatprep.subr.bf16.mxu0 0
    %4652 = vmatpush2.bf16.msra.mxu0 %v3596
    %4653 = vmatprep.subr.bf16.mxu0 0
    %4654 = vmatpush2.bf16.msra.mxu0 %v3595
    %4655 = vmatprep.subr.bf16.mxu0 0
    %4656 = vmatpush2.bf16.msra.mxu0 %v3594
    %4657 = vmatprep.subr.bf16.mxu0 0
    %4658 = vmatpush2.bf16.msra.mxu0 %v3593
    %4659 = vmatprep.subr.bf16.mxu0 0
    %4660 = vmatpush2.bf16.msra.mxu0 %v3592
    %4661 = vmatprep.subr.bf16.mxu0 0
    %4662 = vmatpush2.bf16.msra.mxu0 %v3591
    %4663 = vmatprep.mubr.bf16.mxu0 %v1110
    %4664 = vmatmul.mubr.bf16.gmra.mxu0 %v1108
    %v4665 = vpop.f32.mrf.mxu0
    %v4666 = vadd.f32 %v4626, %v4665
    %v4667 = vpop.f32.mrf.mxu0
    %v4668 = vpop.f32.mrf.mxu0
    %v4669 = vpop.f32.mrf.mxu0
    %4670 = vdwg.mxu0
    %4671 = vmatprep.subr.bf16.mxu0 0
    %4672 = vmatpush1.bf16.msra.mxu0 %v3606
    %4673 = vmatprep.subr.bf16.mxu0 0
    %4674 = vmatpush1.bf16.msra.mxu0 %v3605
    %4675 = vmatprep.subr.bf16.mxu0 0
    %4676 = vmatpush1.bf16.msra.mxu0 %v3604
    %4677 = vmatprep.subr.bf16.mxu0 0
    %4678 = vmatpush1.bf16.msra.mxu0 %v3603
    %4679 = vmatprep.subr.bf16.mxu0 0
    %4680 = vmatpush1.bf16.msra.mxu0 %v3602
    %4681 = vmatprep.subr.bf16.mxu0 0
    %4682 = vmatpush1.bf16.msra.mxu0 %v3601
    %4683 = vmatprep.subr.bf16.mxu0 0
    %4684 = vmatpush1.bf16.msra.mxu0 %v3600
    %4685 = vmatprep.subr.bf16.mxu0 0
    %4686 = vmatpush1.bf16.msra.mxu0 %v3599
    %4687 = vmatprep.subr.bf16.mxu0 0
    %4688 = vmatpush2.bf16.msra.mxu0 %v3614
    %4689 = vmatprep.subr.bf16.mxu0 0
    %4690 = vmatpush2.bf16.msra.mxu0 %v3613
    %4691 = vmatprep.subr.bf16.mxu0 0
    %4692 = vmatpush2.bf16.msra.mxu0 %v3612
    %4693 = vmatprep.subr.bf16.mxu0 0
    %4694 = vmatpush2.bf16.msra.mxu0 %v3611
    %4695 = vmatprep.subr.bf16.mxu0 0
    %4696 = vmatpush2.bf16.msra.mxu0 %v3610
    %4697 = vmatprep.subr.bf16.mxu0 0
    %4698 = vmatpush2.bf16.msra.mxu0 %v3609
    %4699 = vmatprep.subr.bf16.mxu0 0
    %4700 = vmatpush2.bf16.msra.mxu0 %v3608
    %4701 = vmatprep.subr.bf16.mxu0 0
    %4702 = vmatpush2.bf16.msra.mxu0 %v3607
    %4703 = vmatprep.mubr.bf16.mxu0 %v1107
    %4704 = vmatmul.mubr.bf16.gmra.mxu0 %v1093
    %v4705 = vpop.f32.mrf.mxu0
    %v4706 = vadd.f32 %v4666, %v4705
    %v4707 = vpop.f32.mrf.mxu0
    %v4708 = vpop.f32.mrf.mxu0
    %v4709 = vpop.f32.mrf.mxu0
    %4710 = vdwg.mxu0
    %4711 = vmatprep.subr.bf16.mxu0 0
    %4712 = vmatpush1.bf16.msra.mxu0 %v3622
    %4713 = vmatprep.subr.bf16.mxu0 0
    %4714 = vmatpush1.bf16.msra.mxu0 %v3621
    %4715 = vmatprep.subr.bf16.mxu0 0
    %4716 = vmatpush1.bf16.msra.mxu0 %v3620
    %4717 = vmatprep.subr.bf16.mxu0 0
    %4718 = vmatpush1.bf16.msra.mxu0 %v3619
    %4719 = vmatprep.subr.bf16.mxu0 0
    %4720 = vmatpush1.bf16.msra.mxu0 %v3618
    %4721 = vmatprep.subr.bf16.mxu0 0
    %4722 = vmatpush1.bf16.msra.mxu0 %v3617
    %4723 = vmatprep.subr.bf16.mxu0 0
    %4724 = vmatpush1.bf16.msra.mxu0 %v3616
    %4725 = vmatprep.subr.bf16.mxu0 0
    %4726 = vmatpush1.bf16.msra.mxu0 %v3615
    %4727 = vmatprep.subr.bf16.mxu0 0
    %4728 = vmatpush2.bf16.msra.mxu0 %v3630
    %4729 = vmatprep.subr.bf16.mxu0 0
    %4730 = vmatpush2.bf16.msra.mxu0 %v3629
    %4731 = vmatprep.subr.bf16.mxu0 0
    %4732 = vmatpush2.bf16.msra.mxu0 %v3628
    %4733 = vmatprep.subr.bf16.mxu0 0
    %4734 = vmatpush2.bf16.msra.mxu0 %v3627
    %4735 = vmatprep.subr.bf16.mxu0 0
    %4736 = vmatpush2.bf16.msra.mxu0 %v3626
    %4737 = vmatprep.subr.bf16.mxu0 0
    %4738 = vmatpush2.bf16.msra.mxu0 %v3625
    %4739 = vmatprep.subr.bf16.mxu0 0
    %4740 = vmatpush2.bf16.msra.mxu0 %v3624
    %4741 = vmatprep.subr.bf16.mxu0 0
    %4742 = vmatpush2.bf16.msra.mxu0 %v3623
    %4743 = vmatprep.mubr.bf16.mxu0 %v1111
    %4744 = vmatmul.mubr.bf16.gmra.mxu0 %v1109
    %v4745 = vpop.f32.mrf.mxu0
    %v4746 = vadd.f32 %v4706, %v4745
    %v4747 = vpop.f32.mrf.mxu0
    %v4748 = vpop.f32.mrf.mxu0
    %v4749 = vpop.f32.mrf.mxu0
    %4750 = vdwg.mxu0
    %4751 = vmatprep.subr.bf16.mxu0 0
    %4752 = vmatpush1.bf16.msra.mxu0 %v3638
    %4753 = vmatprep.subr.bf16.mxu0 0
    %4754 = vmatpush1.bf16.msra.mxu0 %v3637
    %4755 = vmatprep.subr.bf16.mxu0 0
    %4756 = vmatpush1.bf16.msra.mxu0 %v3636
    %4757 = vmatprep.subr.bf16.mxu0 0
    %4758 = vmatpush1.bf16.msra.mxu0 %v3635
    %4759 = vmatprep.subr.bf16.mxu0 0
    %4760 = vmatpush1.bf16.msra.mxu0 %v3634
    %4761 = vmatprep.subr.bf16.mxu0 0
    %4762 = vmatpush1.bf16.msra.mxu0 %v3633
    %4763 = vmatprep.subr.bf16.mxu0 0
    %4764 = vmatpush1.bf16.msra.mxu0 %v3632
    %4765 = vmatprep.subr.bf16.mxu0 0
    %4766 = vmatpush1.bf16.msra.mxu0 %v3631
    %4767 = vmatprep.subr.bf16.mxu0 0
    %4768 = vmatpush2.bf16.msra.mxu0 %v3646
    %4769 = vmatprep.subr.bf16.mxu0 0
    %4770 = vmatpush2.bf16.msra.mxu0 %v3645
    %4771 = vmatprep.subr.bf16.mxu0 0
    %4772 = vmatpush2.bf16.msra.mxu0 %v3644
    %4773 = vmatprep.subr.bf16.mxu0 0
    %4774 = vmatpush2.bf16.msra.mxu0 %v3643
    %4775 = vmatprep.subr.bf16.mxu0 0
    %4776 = vmatpush2.bf16.msra.mxu0 %v3642
    %4777 = vmatprep.subr.bf16.mxu0 0
    %4778 = vmatpush2.bf16.msra.mxu0 %v3641
    %4779 = vmatprep.subr.bf16.mxu0 0
    %4780 = vmatpush2.bf16.msra.mxu0 %v3640
    %4781 = vmatprep.subr.bf16.mxu0 0
    %4782 = vmatpush2.bf16.msra.mxu0 %v3639
    %4783 = vmatprep.mubr.bf16.mxu0 %v1149
    %4784 = vmatmul.mubr.bf16.gmra.mxu0 %v1135
    %v4785 = vpop.f32.mrf.mxu0
    %v4786 = vadd.f32 %v4746, %v4785
    %v4787 = vpop.f32.mrf.mxu0
    %v4788 = vpop.f32.mrf.mxu0
    %v4789 = vpop.f32.mrf.mxu0
    %4790 = vdwg.mxu0
    %4791 = vmatprep.subr.bf16.mxu0 0
    %4792 = vmatpush1.bf16.msra.mxu0 %v3654
    %4793 = vmatprep.subr.bf16.mxu0 0
    %4794 = vmatpush1.bf16.msra.mxu0 %v3653
    %4795 = vmatprep.subr.bf16.mxu0 0
    %4796 = vmatpush1.bf16.msra.mxu0 %v3652
    %4797 = vmatprep.subr.bf16.mxu0 0
    %4798 = vmatpush1.bf16.msra.mxu0 %v3651
    %4799 = vmatprep.subr.bf16.mxu0 0
    %4800 = vmatpush1.bf16.msra.mxu0 %v3650
    %4801 = vmatprep.subr.bf16.mxu0 0
    %4802 = vmatpush1.bf16.msra.mxu0 %v3649
    %4803 = vmatprep.subr.bf16.mxu0 0
    %4804 = vmatpush1.bf16.msra.mxu0 %v3648
    %4805 = vmatprep.subr.bf16.mxu0 0
    %4806 = vmatpush1.bf16.msra.mxu0 %v3647
    %4807 = vmatprep.subr.bf16.mxu0 0
    %4808 = vmatpush2.bf16.msra.mxu0 %v3662
    %4809 = vmatprep.subr.bf16.mxu0 0
    %4810 = vmatpush2.bf16.msra.mxu0 %v3661
    %4811 = vmatprep.subr.bf16.mxu0 0
    %4812 = vmatpush2.bf16.msra.mxu0 %v3660
    %4813 = vmatprep.subr.bf16.mxu0 0
    %4814 = vmatpush2.bf16.msra.mxu0 %v3659
    %4815 = vmatprep.subr.bf16.mxu0 0
    %4816 = vmatpush2.bf16.msra.mxu0 %v3658
    %4817 = vmatprep.subr.bf16.mxu0 0
    %4818 = vmatpush2.bf16.msra.mxu0 %v3657
    %4819 = vmatprep.subr.bf16.mxu0 0
    %4820 = vmatpush2.bf16.msra.mxu0 %v3656
    %4821 = vmatprep.subr.bf16.mxu0 0
    %4822 = vmatpush2.bf16.msra.mxu0 %v3655
    %4823 = vmatprep.mubr.bf16.mxu0 %v1159
    %4824 = vmatmul.mubr.bf16.gmra.mxu0 %v1157
    %v4825 = vpop.f32.mrf.mxu0
    %v4826 = vadd.f32 %v4786, %v4825
    %v4827 = vpop.f32.mrf.mxu0
    %v4828 = vpop.f32.mrf.mxu0
    %v4829 = vpop.f32.mrf.mxu0
    %4830 = vdwg.mxu0
    %4831 = vmatprep.subr.bf16.mxu0 0
    %4832 = vmatpush1.bf16.msra.mxu0 %v3670
    %4833 = vmatprep.subr.bf16.mxu0 0
    %4834 = vmatpush1.bf16.msra.mxu0 %v3669
    %4835 = vmatprep.subr.bf16.mxu0 0
    %4836 = vmatpush1.bf16.msra.mxu0 %v3668
    %4837 = vmatprep.subr.bf16.mxu0 0
    %4838 = vmatpush1.bf16.msra.mxu0 %v3667
    %4839 = vmatprep.subr.bf16.mxu0 0
    %4840 = vmatpush1.bf16.msra.mxu0 %v3666
    %4841 = vmatprep.subr.bf16.mxu0 0
    %4842 = vmatpush1.bf16.msra.mxu0 %v3665
    %4843 = vmatprep.subr.bf16.mxu0 0
    %4844 = vmatpush1.bf16.msra.mxu0 %v3664
    %4845 = vmatprep.subr.bf16.mxu0 0
    %4846 = vmatpush1.bf16.msra.mxu0 %v3663
    %4847 = vmatprep.subr.bf16.mxu0 0
    %4848 = vmatpush2.bf16.msra.mxu0 %v3678
    %4849 = vmatprep.subr.bf16.mxu0 0
    %4850 = vmatpush2.bf16.msra.mxu0 %v3677
    %4851 = vmatprep.subr.bf16.mxu0 0
    %4852 = vmatpush2.bf16.msra.mxu0 %v3676
    %4853 = vmatprep.subr.bf16.mxu0 0
    %4854 = vmatpush2.bf16.msra.mxu0 %v3675
    %4855 = vmatprep.subr.bf16.mxu0 0
    %4856 = vmatpush2.bf16.msra.mxu0 %v3674
    %4857 = vmatprep.subr.bf16.mxu0 0
    %4858 = vmatpush2.bf16.msra.mxu0 %v3673
    %4859 = vmatprep.subr.bf16.mxu0 0
    %4860 = vmatpush2.bf16.msra.mxu0 %v3672
    %4861 = vmatprep.subr.bf16.mxu0 0
    %4862 = vmatpush2.bf16.msra.mxu0 %v3671
    %4863 = vmatprep.mubr.bf16.mxu0 %v1156
    %4864 = vmatmul.mubr.bf16.gmra.mxu0 %v1142
    %v4865 = vpop.f32.mrf.mxu0
    %v4866 = vadd.f32 %v4826, %v4865
    %v4867 = vpop.f32.mrf.mxu0
    %v4868 = vpop.f32.mrf.mxu0
    %v4869 = vpop.f32.mrf.mxu0
    %4870 = vdwg.mxu0
    %4871 = vmatprep.subr.bf16.mxu0 0
    %4872 = vmatpush1.bf16.msra.mxu0 %v3686
    %4873 = vmatprep.subr.bf16.mxu0 0
    %4874 = vmatpush1.bf16.msra.mxu0 %v3685
    %4875 = vmatprep.subr.bf16.mxu0 0
    %4876 = vmatpush1.bf16.msra.mxu0 %v3684
    %4877 = vmatprep.subr.bf16.mxu0 0
    %4878 = vmatpush1.bf16.msra.mxu0 %v3683
    %4879 = vmatprep.subr.bf16.mxu0 0
    %4880 = vmatpush1.bf16.msra.mxu0 %v3682
    %4881 = vmatprep.subr.bf16.mxu0 0
    %4882 = vmatpush1.bf16.msra.mxu0 %v3681
    %4883 = vmatprep.subr.bf16.mxu0 0
    %4884 = vmatpush1.bf16.msra.mxu0 %v3680
    %4885 = vmatprep.subr.bf16.mxu0 0
    %4886 = vmatpush1.bf16.msra.mxu0 %v3679
    %4887 = vmatprep.subr.bf16.mxu0 0
    %4888 = vmatpush2.bf16.msra.mxu0 %v3694
    %4889 = vmatprep.subr.bf16.mxu0 0
    %4890 = vmatpush2.bf16.msra.mxu0 %v3693
    %4891 = vmatprep.subr.bf16.mxu0 0
    %4892 = vmatpush2.bf16.msra.mxu0 %v3692
    %4893 = vmatprep.subr.bf16.mxu0 0
    %4894 = vmatpush2.bf16.msra.mxu0 %v3691
    %4895 = vmatprep.subr.bf16.mxu0 0
    %4896 = vmatpush2.bf16.msra.mxu0 %v3690
    %4897 = vmatprep.subr.bf16.mxu0 0
    %4898 = vmatpush2.bf16.msra.mxu0 %v3689
    %4899 = vmatprep.subr.bf16.mxu0 0
    %4900 = vmatpush2.bf16.msra.mxu0 %v3688
    %4901 = vmatprep.subr.bf16.mxu0 0
    %4902 = vmatpush2.bf16.msra.mxu0 %v3687
    %4903 = vmatprep.mubr.bf16.mxu0 %v1160
    %4904 = vmatmul.mubr.bf16.gmra.mxu0 %v1158
    %v4905 = vpop.f32.mrf.mxu0
    %v4906 = vadd.f32 %v4866, %v4905
    %v4907 = vpop.f32.mrf.mxu0
    %v4908 = vpop.f32.mrf.mxu0
    %v4909 = vpop.f32.mrf.mxu0
    %4910 = vdwg.mxu0
    %4911 = vmatprep.subr.bf16.mxu0 0
    %4912 = vmatpush1.bf16.msra.mxu0 %v3702
    %4913 = vmatprep.subr.bf16.mxu0 0
    %4914 = vmatpush1.bf16.msra.mxu0 %v3701
    %4915 = vmatprep.subr.bf16.mxu0 0
    %4916 = vmatpush1.bf16.msra.mxu0 %v3700
    %4917 = vmatprep.subr.bf16.mxu0 0
    %4918 = vmatpush1.bf16.msra.mxu0 %v3699
    %4919 = vmatprep.subr.bf16.mxu0 0
    %4920 = vmatpush1.bf16.msra.mxu0 %v3698
    %4921 = vmatprep.subr.bf16.mxu0 0
    %4922 = vmatpush1.bf16.msra.mxu0 %v3697
    %4923 = vmatprep.subr.bf16.mxu0 0
    %4924 = vmatpush1.bf16.msra.mxu0 %v3696
    %4925 = vmatprep.subr.bf16.mxu0 0
    %4926 = vmatpush1.bf16.msra.mxu0 %v3695
    %4927 = vmatprep.subr.bf16.mxu0 0
    %4928 = vmatpush2.bf16.msra.mxu0 %v3710
    %4929 = vmatprep.subr.bf16.mxu0 0
    %4930 = vmatpush2.bf16.msra.mxu0 %v3709
    %4931 = vmatprep.subr.bf16.mxu0 0
    %4932 = vmatpush2.bf16.msra.mxu0 %v3708
    %4933 = vmatprep.subr.bf16.mxu0 0
    %4934 = vmatpush2.bf16.msra.mxu0 %v3707
    %4935 = vmatprep.subr.bf16.mxu0 0
    %4936 = vmatpush2.bf16.msra.mxu0 %v3706
    %4937 = vmatprep.subr.bf16.mxu0 0
    %4938 = vmatpush2.bf16.msra.mxu0 %v3705
    %4939 = vmatprep.subr.bf16.mxu0 0
    %4940 = vmatpush2.bf16.msra.mxu0 %v3704
    %4941 = vmatprep.subr.bf16.mxu0 0
    %4942 = vmatpush2.bf16.msra.mxu0 %v3703
    %4943 = vmatprep.mubr.bf16.mxu0 %v1198
    %4944 = vmatmul.mubr.bf16.gmra.mxu0 %v1184
    %v4945 = vpop.f32.mrf.mxu0
    %v4946 = vadd.f32 %v4906, %v4945
    %v4947 = vpop.f32.mrf.mxu0
    %v4948 = vpop.f32.mrf.mxu0
    %v4949 = vpop.f32.mrf.mxu0
    %4950 = vdwg.mxu0
    %4951 = vmatprep.subr.bf16.mxu0 0
    %4952 = vmatpush1.bf16.msra.mxu0 %v3718
    %4953 = vmatprep.subr.bf16.mxu0 0
    %4954 = vmatpush1.bf16.msra.mxu0 %v3717
    %4955 = vmatprep.subr.bf16.mxu0 0
    %4956 = vmatpush1.bf16.msra.mxu0 %v3716
    %4957 = vmatprep.subr.bf16.mxu0 0
    %4958 = vmatpush1.bf16.msra.mxu0 %v3715
    %4959 = vmatprep.subr.bf16.mxu0 0
    %4960 = vmatpush1.bf16.msra.mxu0 %v3714
    %4961 = vmatprep.subr.bf16.mxu0 0
    %4962 = vmatpush1.bf16.msra.mxu0 %v3713
    %4963 = vmatprep.subr.bf16.mxu0 0
    %4964 = vmatpush1.bf16.msra.mxu0 %v3712
    %4965 = vmatprep.subr.bf16.mxu0 0
    %4966 = vmatpush1.bf16.msra.mxu0 %v3711
    %4967 = vmatprep.subr.bf16.mxu0 0
    %4968 = vmatpush2.bf16.msra.mxu0 %v3726
    %4969 = vmatprep.subr.bf16.mxu0 0
    %4970 = vmatpush2.bf16.msra.mxu0 %v3725
    %4971 = vmatprep.subr.bf16.mxu0 0
    %4972 = vmatpush2.bf16.msra.mxu0 %v3724
    %4973 = vmatprep.subr.bf16.mxu0 0
    %4974 = vmatpush2.bf16.msra.mxu0 %v3723
    %4975 = vmatprep.subr.bf16.mxu0 0
    %4976 = vmatpush2.bf16.msra.mxu0 %v3722
    %4977 = vmatprep.subr.bf16.mxu0 0
    %4978 = vmatpush2.bf16.msra.mxu0 %v3721
    %4979 = vmatprep.subr.bf16.mxu0 0
    %4980 = vmatpush2.bf16.msra.mxu0 %v3720
    %4981 = vmatprep.subr.bf16.mxu0 0
    %4982 = vmatpush2.bf16.msra.mxu0 %v3719
    %4983 = vmatprep.mubr.bf16.mxu0 %v1208
    %4984 = vmatmul.mubr.bf16.gmra.mxu0 %v1206
    %v4985 = vpop.f32.mrf.mxu0
    %v4986 = vadd.f32 %v4946, %v4985
    %v4987 = vpop.f32.mrf.mxu0
    %v4988 = vpop.f32.mrf.mxu0
    %v4989 = vpop.f32.mrf.mxu0
    %4990 = vdwg.mxu0
    %4991 = vmatprep.subr.bf16.mxu0 0
    %4992 = vmatpush1.bf16.msra.mxu0 %v3734
    %4993 = vmatprep.subr.bf16.mxu0 0
    %4994 = vmatpush1.bf16.msra.mxu0 %v3733
    %4995 = vmatprep.subr.bf16.mxu0 0
    %4996 = vmatpush1.bf16.msra.mxu0 %v3732
    %4997 = vmatprep.subr.bf16.mxu0 0
    %4998 = vmatpush1.bf16.msra.mxu0 %v3731
    %4999 = vmatprep.subr.bf16.mxu0 0
    %5000 = vmatpush1.bf16.msra.mxu0 %v3730
    %5001 = vmatprep.subr.bf16.mxu0 0
    %5002 = vmatpush1.bf16.msra.mxu0 %v3729
    %5003 = vmatprep.subr.bf16.mxu0 0
    %5004 = vmatpush1.bf16.msra.mxu0 %v3728
    %5005 = vmatprep.subr.bf16.mxu0 0
    %5006 = vmatpush1.bf16.msra.mxu0 %v3727
    %5007 = vmatprep.subr.bf16.mxu0 0
    %5008 = vmatpush2.bf16.msra.mxu0 %v3742
    %5009 = vmatprep.subr.bf16.mxu0 0
    %5010 = vmatpush2.bf16.msra.mxu0 %v3741
    %5011 = vmatprep.subr.bf16.mxu0 0
    %5012 = vmatpush2.bf16.msra.mxu0 %v3740
    %5013 = vmatprep.subr.bf16.mxu0 0
    %5014 = vmatpush2.bf16.msra.mxu0 %v3739
    %5015 = vmatprep.subr.bf16.mxu0 0
    %5016 = vmatpush2.bf16.msra.mxu0 %v3738
    %5017 = vmatprep.subr.bf16.mxu0 0
    %5018 = vmatpush2.bf16.msra.mxu0 %v3737
    %5019 = vmatprep.subr.bf16.mxu0 0
    %5020 = vmatpush2.bf16.msra.mxu0 %v3736
    %5021 = vmatprep.subr.bf16.mxu0 0
    %5022 = vmatpush2.bf16.msra.mxu0 %v3735
    %5023 = vmatprep.mubr.bf16.mxu0 %v1205
    %5024 = vmatmul.mubr.bf16.gmra.mxu0 %v1191
    %v5025 = vpop.f32.mrf.mxu0
    %v5026 = vadd.f32 %v4986, %v5025
    %v5027 = vpop.f32.mrf.mxu0
    %v5028 = vpop.f32.mrf.mxu0
    %v5029 = vpop.f32.mrf.mxu0
    %5030 = vdwg.mxu0
    %5031 = vmatprep.subr.bf16.mxu0 0
    %5032 = vmatpush1.bf16.msra.mxu0 %v3750
    %5033 = vmatprep.subr.bf16.mxu0 0
    %5034 = vmatpush1.bf16.msra.mxu0 %v3749
    %5035 = vmatprep.subr.bf16.mxu0 0
    %5036 = vmatpush1.bf16.msra.mxu0 %v3748
    %5037 = vmatprep.subr.bf16.mxu0 0
    %5038 = vmatpush1.bf16.msra.mxu0 %v3747
    %5039 = vmatprep.subr.bf16.mxu0 0
    %5040 = vmatpush1.bf16.msra.mxu0 %v3746
    %5041 = vmatprep.subr.bf16.mxu0 0
    %5042 = vmatpush1.bf16.msra.mxu0 %v3745
    %5043 = vmatprep.subr.bf16.mxu0 0
    %5044 = vmatpush1.bf16.msra.mxu0 %v3744
    %5045 = vmatprep.subr.bf16.mxu0 0
    %5046 = vmatpush1.bf16.msra.mxu0 %v3743
    %5047 = vmatprep.subr.bf16.mxu0 0
    %5048 = vmatpush2.bf16.msra.mxu0 %v3758
    %5049 = vmatprep.subr.bf16.mxu0 0
    %5050 = vmatpush2.bf16.msra.mxu0 %v3757
    %5051 = vmatprep.subr.bf16.mxu0 0
    %5052 = vmatpush2.bf16.msra.mxu0 %v3756
    %5053 = vmatprep.subr.bf16.mxu0 0
    %5054 = vmatpush2.bf16.msra.mxu0 %v3755
    %5055 = vmatprep.subr.bf16.mxu0 0
    %5056 = vmatpush2.bf16.msra.mxu0 %v3754
    %5057 = vmatprep.subr.bf16.mxu0 0
    %5058 = vmatpush2.bf16.msra.mxu0 %v3753
    %5059 = vmatprep.subr.bf16.mxu0 0
    %5060 = vmatpush2.bf16.msra.mxu0 %v3752
    %5061 = vmatprep.subr.bf16.mxu0 0
    %5062 = vmatpush2.bf16.msra.mxu0 %v3751
    %5063 = vmatprep.mubr.bf16.mxu0 %v1209
    %5064 = vmatmul.mubr.bf16.gmra.mxu0 %v1207
    %v5065 = vpop.f32.mrf.mxu0
    %v5066 = vadd.f32 %v5026, %v5065
    %v5067 = vpop.f32.mrf.mxu0
    %v5068 = vpop.f32.mrf.mxu0
    %v5069 = vpop.f32.mrf.mxu0
    %5070 = vdwg.mxu0
    %5071 = vmatprep.subr.bf16.mxu0 0
    %5072 = vmatpush1.bf16.msra.mxu0 %v3766
    %5073 = vmatprep.subr.bf16.mxu0 0
    %5074 = vmatpush1.bf16.msra.mxu0 %v3765
    %5075 = vmatprep.subr.bf16.mxu0 0
    %5076 = vmatpush1.bf16.msra.mxu0 %v3764
    %5077 = vmatprep.subr.bf16.mxu0 0
    %5078 = vmatpush1.bf16.msra.mxu0 %v3763
    %5079 = vmatprep.subr.bf16.mxu0 0
    %5080 = vmatpush1.bf16.msra.mxu0 %v3762
    %5081 = vmatprep.subr.bf16.mxu0 0
    %5082 = vmatpush1.bf16.msra.mxu0 %v3761
    %5083 = vmatprep.subr.bf16.mxu0 0
    %5084 = vmatpush1.bf16.msra.mxu0 %v3760
    %5085 = vmatprep.subr.bf16.mxu0 0
    %5086 = vmatpush1.bf16.msra.mxu0 %v3759
    %5087 = vmatprep.subr.bf16.mxu0 0
    %5088 = vmatpush2.bf16.msra.mxu0 %v3774
    %5089 = vmatprep.subr.bf16.mxu0 0
    %5090 = vmatpush2.bf16.msra.mxu0 %v3773
    %5091 = vmatprep.subr.bf16.mxu0 0
    %5092 = vmatpush2.bf16.msra.mxu0 %v3772
    %5093 = vmatprep.subr.bf16.mxu0 0
    %5094 = vmatpush2.bf16.msra.mxu0 %v3771
    %5095 = vmatprep.subr.bf16.mxu0 0
    %5096 = vmatpush2.bf16.msra.mxu0 %v3770
    %5097 = vmatprep.subr.bf16.mxu0 0
    %5098 = vmatpush2.bf16.msra.mxu0 %v3769
    %5099 = vmatprep.subr.bf16.mxu0 0
    %5100 = vmatpush2.bf16.msra.mxu0 %v3768
    %5101 = vmatprep.subr.bf16.mxu0 0
    %5102 = vmatpush2.bf16.msra.mxu0 %v3767
    %5103 = vmatprep.mubr.bf16.mxu0 %v1247
    %5104 = vmatmul.mubr.bf16.gmra.mxu0 %v1233
    %v5105 = vpop.f32.mrf.mxu0
    %v5106 = vadd.f32 %v5066, %v5105
    %v5107 = vpop.f32.mrf.mxu0
    %v5108 = vpop.f32.mrf.mxu0
    %v5109 = vpop.f32.mrf.mxu0
    %5110 = vdwg.mxu0
    %5111 = vmatprep.subr.bf16.mxu0 0
    %5112 = vmatpush1.bf16.msra.mxu0 %v3782
    %5113 = vmatprep.subr.bf16.mxu0 0
    %5114 = vmatpush1.bf16.msra.mxu0 %v3781
    %5115 = vmatprep.subr.bf16.mxu0 0
    %5116 = vmatpush1.bf16.msra.mxu0 %v3780
    %5117 = vmatprep.subr.bf16.mxu0 0
    %5118 = vmatpush1.bf16.msra.mxu0 %v3779
    %5119 = vmatprep.subr.bf16.mxu0 0
    %5120 = vmatpush1.bf16.msra.mxu0 %v3778
    %5121 = vmatprep.subr.bf16.mxu0 0
    %5122 = vmatpush1.bf16.msra.mxu0 %v3777
    %5123 = vmatprep.subr.bf16.mxu0 0
    %5124 = vmatpush1.bf16.msra.mxu0 %v3776
    %5125 = vmatprep.subr.bf16.mxu0 0
    %5126 = vmatpush1.bf16.msra.mxu0 %v3775
    %5127 = vmatprep.subr.bf16.mxu0 0
    %5128 = vmatpush2.bf16.msra.mxu0 %v3790
    %5129 = vmatprep.subr.bf16.mxu0 0
    %5130 = vmatpush2.bf16.msra.mxu0 %v3789
    %5131 = vmatprep.subr.bf16.mxu0 0
    %5132 = vmatpush2.bf16.msra.mxu0 %v3788
    %5133 = vmatprep.subr.bf16.mxu0 0
    %5134 = vmatpush2.bf16.msra.mxu0 %v3787
    %5135 = vmatprep.subr.bf16.mxu0 0
    %5136 = vmatpush2.bf16.msra.mxu0 %v3786
    %5137 = vmatprep.subr.bf16.mxu0 0
    %5138 = vmatpush2.bf16.msra.mxu0 %v3785
    %5139 = vmatprep.subr.bf16.mxu0 0
    %5140 = vmatpush2.bf16.msra.mxu0 %v3784
    %5141 = vmatprep.subr.bf16.mxu0 0
    %5142 = vmatpush2.bf16.msra.mxu0 %v3783
    %5143 = vmatprep.mubr.bf16.mxu0 %v1257
    %5144 = vmatmul.mubr.bf16.gmra.mxu0 %v1255
    %v5145 = vpop.f32.mrf.mxu0
    %v5146 = vadd.f32 %v5106, %v5145
    %v5147 = vpop.f32.mrf.mxu0
    %v5148 = vpop.f32.mrf.mxu0
    %v5149 = vpop.f32.mrf.mxu0
    %5150 = vdwg.mxu0
    %5151 = vmatprep.subr.bf16.mxu0 0
    %5152 = vmatpush1.bf16.msra.mxu0 %v3798
    %5153 = vmatprep.subr.bf16.mxu0 0
    %5154 = vmatpush1.bf16.msra.mxu0 %v3797
    %5155 = vmatprep.subr.bf16.mxu0 0
    %5156 = vmatpush1.bf16.msra.mxu0 %v3796
    %5157 = vmatprep.subr.bf16.mxu0 0
    %5158 = vmatpush1.bf16.msra.mxu0 %v3795
    %5159 = vmatprep.subr.bf16.mxu0 0
    %5160 = vmatpush1.bf16.msra.mxu0 %v3794
    %5161 = vmatprep.subr.bf16.mxu0 0
    %5162 = vmatpush1.bf16.msra.mxu0 %v3793
    %5163 = vmatprep.subr.bf16.mxu0 0
    %5164 = vmatpush1.bf16.msra.mxu0 %v3792
    %5165 = vmatprep.subr.bf16.mxu0 0
    %5166 = vmatpush1.bf16.msra.mxu0 %v3791
    %5167 = vmatprep.subr.bf16.mxu0 0
    %5168 = vmatpush2.bf16.msra.mxu0 %v3806
    %5169 = vmatprep.subr.bf16.mxu0 0
    %5170 = vmatpush2.bf16.msra.mxu0 %v3805
    %5171 = vmatprep.subr.bf16.mxu0 0
    %5172 = vmatpush2.bf16.msra.mxu0 %v3804
    %5173 = vmatprep.subr.bf16.mxu0 0
    %5174 = vmatpush2.bf16.msra.mxu0 %v3803
    %5175 = vmatprep.subr.bf16.mxu0 0
    %5176 = vmatpush2.bf16.msra.mxu0 %v3802
    %5177 = vmatprep.subr.bf16.mxu0 0
    %5178 = vmatpush2.bf16.msra.mxu0 %v3801
    %5179 = vmatprep.subr.bf16.mxu0 0
    %5180 = vmatpush2.bf16.msra.mxu0 %v3800
    %5181 = vmatprep.subr.bf16.mxu0 0
    %5182 = vmatpush2.bf16.msra.mxu0 %v3799
    %5183 = vmatprep.mubr.bf16.mxu0 %v1254
    %5184 = vmatmul.mubr.bf16.gmra.mxu0 %v1240
    %v5185 = vpop.f32.mrf.mxu0
    %v5186 = vadd.f32 %v5146, %v5185
    %v5187 = vpop.f32.mrf.mxu0
    %v5188 = vpop.f32.mrf.mxu0
    %v5189 = vpop.f32.mrf.mxu0
    %5190 = vdwg.mxu0
    %5191 = vmatprep.subr.bf16.mxu0 0
    %5192 = vmatpush1.bf16.msra.mxu0 %v3814
    %5193 = vmatprep.subr.bf16.mxu0 0
    %5194 = vmatpush1.bf16.msra.mxu0 %v3813
    %5195 = vmatprep.subr.bf16.mxu0 0
    %5196 = vmatpush1.bf16.msra.mxu0 %v3812
    %5197 = vmatprep.subr.bf16.mxu0 0
    %5198 = vmatpush1.bf16.msra.mxu0 %v3811
    %5199 = vmatprep.subr.bf16.mxu0 0
    %5200 = vmatpush1.bf16.msra.mxu0 %v3810
    %5201 = vmatprep.subr.bf16.mxu0 0
    %5202 = vmatpush1.bf16.msra.mxu0 %v3809
    %5203 = vmatprep.subr.bf16.mxu0 0
    %5204 = vmatpush1.bf16.msra.mxu0 %v3808
    %5205 = vmatprep.subr.bf16.mxu0 0
    %5206 = vmatpush1.bf16.msra.mxu0 %v3807
    %5207 = vmatprep.subr.bf16.mxu0 0
    %5208 = vmatpush2.bf16.msra.mxu0 %v3822
    %5209 = vmatprep.subr.bf16.mxu0 0
    %5210 = vmatpush2.bf16.msra.mxu0 %v3821
    %5211 = vmatprep.subr.bf16.mxu0 0
    %5212 = vmatpush2.bf16.msra.mxu0 %v3820
    %5213 = vmatprep.subr.bf16.mxu0 0
    %5214 = vmatpush2.bf16.msra.mxu0 %v3819
    %5215 = vmatprep.subr.bf16.mxu0 0
    %5216 = vmatpush2.bf16.msra.mxu0 %v3818
    %5217 = vmatprep.subr.bf16.mxu0 0
    %5218 = vmatpush2.bf16.msra.mxu0 %v3817
    %5219 = vmatprep.subr.bf16.mxu0 0
    %5220 = vmatpush2.bf16.msra.mxu0 %v3816
    %5221 = vmatprep.subr.bf16.mxu0 0
    %5222 = vmatpush2.bf16.msra.mxu0 %v3815
    %5223 = vmatprep.mubr.bf16.mxu0 %v1258
    %5224 = vmatmul.mubr.bf16.gmra.mxu0 %v1256
    %v5225 = vpop.f32.mrf.mxu0
    %v5226 = vadd.f32 %v5186, %v5225
    %v5227 = vpop.f32.mrf.mxu0
    %v5228 = vpop.f32.mrf.mxu0
    %v5229 = vpop.f32.mrf.mxu0
    %5230 = vdwg.mxu0
    %5231 = vmatprep.subr.bf16.mxu0 0
    %5232 = vmatpush1.bf16.msra.mxu0 %v3830
    %5233 = vmatprep.subr.bf16.mxu0 0
    %5234 = vmatpush1.bf16.msra.mxu0 %v3829
    %5235 = vmatprep.subr.bf16.mxu0 0
    %5236 = vmatpush1.bf16.msra.mxu0 %v3828
    %5237 = vmatprep.subr.bf16.mxu0 0
    %5238 = vmatpush1.bf16.msra.mxu0 %v3827
    %5239 = vmatprep.subr.bf16.mxu0 0
    %5240 = vmatpush1.bf16.msra.mxu0 %v3826
    %5241 = vmatprep.subr.bf16.mxu0 0
    %5242 = vmatpush1.bf16.msra.mxu0 %v3825
    %5243 = vmatprep.subr.bf16.mxu0 0
    %5244 = vmatpush1.bf16.msra.mxu0 %v3824
    %5245 = vmatprep.subr.bf16.mxu0 0
    %5246 = vmatpush1.bf16.msra.mxu0 %v3823
    %5247 = vmatprep.subr.bf16.mxu0 0
    %5248 = vmatpush2.bf16.msra.mxu0 %v3838
    %5249 = vmatprep.subr.bf16.mxu0 0
    %5250 = vmatpush2.bf16.msra.mxu0 %v3837
    %5251 = vmatprep.subr.bf16.mxu0 0
    %5252 = vmatpush2.bf16.msra.mxu0 %v3836
    %5253 = vmatprep.subr.bf16.mxu0 0
    %5254 = vmatpush2.bf16.msra.mxu0 %v3835
    %5255 = vmatprep.subr.bf16.mxu0 0
    %5256 = vmatpush2.bf16.msra.mxu0 %v3834
    %5257 = vmatprep.subr.bf16.mxu0 0
    %5258 = vmatpush2.bf16.msra.mxu0 %v3833
    %5259 = vmatprep.subr.bf16.mxu0 0
    %5260 = vmatpush2.bf16.msra.mxu0 %v3832
    %5261 = vmatprep.subr.bf16.mxu0 0
    %5262 = vmatpush2.bf16.msra.mxu0 %v3831
    %5263 = vmatprep.mubr.bf16.mxu0 %v1296
    %5264 = vmatmul.mubr.bf16.gmra.mxu0 %v1282
    %v5265 = vpop.f32.mrf.mxu0
    %v5266 = vadd.f32 %v5226, %v5265
    %v5267 = vpop.f32.mrf.mxu0
    %v5268 = vpop.f32.mrf.mxu0
    %v5269 = vpop.f32.mrf.mxu0
    %5270 = vdwg.mxu0
    %5271 = vmatprep.subr.bf16.mxu0 0
    %5272 = vmatpush1.bf16.msra.mxu0 %v3846
    %5273 = vmatprep.subr.bf16.mxu0 0
    %5274 = vmatpush1.bf16.msra.mxu0 %v3845
    %5275 = vmatprep.subr.bf16.mxu0 0
    %5276 = vmatpush1.bf16.msra.mxu0 %v3844
    %5277 = vmatprep.subr.bf16.mxu0 0
    %5278 = vmatpush1.bf16.msra.mxu0 %v3843
    %5279 = vmatprep.subr.bf16.mxu0 0
    %5280 = vmatpush1.bf16.msra.mxu0 %v3842
    %5281 = vmatprep.subr.bf16.mxu0 0
    %5282 = vmatpush1.bf16.msra.mxu0 %v3841
    %5283 = vmatprep.subr.bf16.mxu0 0
    %5284 = vmatpush1.bf16.msra.mxu0 %v3840
    %5285 = vmatprep.subr.bf16.mxu0 0
    %5286 = vmatpush1.bf16.msra.mxu0 %v3839
    %5287 = vmatprep.subr.bf16.mxu0 0
    %5288 = vmatpush2.bf16.msra.mxu0 %v3854
    %5289 = vmatprep.subr.bf16.mxu0 0
    %5290 = vmatpush2.bf16.msra.mxu0 %v3853
    %5291 = vmatprep.subr.bf16.mxu0 0
    %5292 = vmatpush2.bf16.msra.mxu0 %v3852
    %5293 = vmatprep.subr.bf16.mxu0 0
    %5294 = vmatpush2.bf16.msra.mxu0 %v3851
    %5295 = vmatprep.subr.bf16.mxu0 0
    %5296 = vmatpush2.bf16.msra.mxu0 %v3850
    %5297 = vmatprep.subr.bf16.mxu0 0
    %5298 = vmatpush2.bf16.msra.mxu0 %v3849
    %5299 = vmatprep.subr.bf16.mxu0 0
    %5300 = vmatpush2.bf16.msra.mxu0 %v3848
    %5301 = vmatprep.subr.bf16.mxu0 0
    %5302 = vmatpush2.bf16.msra.mxu0 %v3847
    %5303 = vmatprep.mubr.bf16.mxu0 %v1306
    %5304 = vmatmul.mubr.bf16.gmra.mxu0 %v1304
    %v5305 = vpop.f32.mrf.mxu0
    %v5306 = vadd.f32 %v5266, %v5305
    %v5307 = vpop.f32.mrf.mxu0
    %v5308 = vpop.f32.mrf.mxu0
    %v5309 = vpop.f32.mrf.mxu0
    %5310 = vdwg.mxu0
    %5311 = vmatprep.subr.bf16.mxu0 0
    %5312 = vmatpush1.bf16.msra.mxu0 %v3862
    %5313 = vmatprep.subr.bf16.mxu0 0
    %5314 = vmatpush1.bf16.msra.mxu0 %v3861
    %5315 = vmatprep.subr.bf16.mxu0 0
    %5316 = vmatpush1.bf16.msra.mxu0 %v3860
    %5317 = vmatprep.subr.bf16.mxu0 0
    %5318 = vmatpush1.bf16.msra.mxu0 %v3859
    %5319 = vmatprep.subr.bf16.mxu0 0
    %5320 = vmatpush1.bf16.msra.mxu0 %v3858
    %5321 = vmatprep.subr.bf16.mxu0 0
    %5322 = vmatpush1.bf16.msra.mxu0 %v3857
    %5323 = vmatprep.subr.bf16.mxu0 0
    %5324 = vmatpush1.bf16.msra.mxu0 %v3856
    %5325 = vmatprep.subr.bf16.mxu0 0
    %5326 = vmatpush1.bf16.msra.mxu0 %v3855
    %5327 = vmatprep.subr.bf16.mxu0 0
    %5328 = vmatpush2.bf16.msra.mxu0 %v3870
    %5329 = vmatprep.subr.bf16.mxu0 0
    %5330 = vmatpush2.bf16.msra.mxu0 %v3869
    %5331 = vmatprep.subr.bf16.mxu0 0
    %5332 = vmatpush2.bf16.msra.mxu0 %v3868
    %5333 = vmatprep.subr.bf16.mxu0 0
    %5334 = vmatpush2.bf16.msra.mxu0 %v3867
    %5335 = vmatprep.subr.bf16.mxu0 0
    %5336 = vmatpush2.bf16.msra.mxu0 %v3866
    %5337 = vmatprep.subr.bf16.mxu0 0
    %5338 = vmatpush2.bf16.msra.mxu0 %v3865
    %5339 = vmatprep.subr.bf16.mxu0 0
    %5340 = vmatpush2.bf16.msra.mxu0 %v3864
    %5341 = vmatprep.subr.bf16.mxu0 0
    %5342 = vmatpush2.bf16.msra.mxu0 %v3863
    %5343 = vmatprep.mubr.bf16.mxu0 %v1303
    %5344 = vmatmul.mubr.bf16.gmra.mxu0 %v1289
    %v5345 = vpop.f32.mrf.mxu0
    %v5346 = vadd.f32 %v5306, %v5345
    %v5347 = vpop.f32.mrf.mxu0
    %v5348 = vpop.f32.mrf.mxu0
    %v5349 = vpop.f32.mrf.mxu0
    %5350 = vdwg.mxu0
    %5351 = vmatprep.subr.bf16.mxu0 0
    %5352 = vmatpush1.bf16.msra.mxu0 %v3878
    %5353 = vmatprep.subr.bf16.mxu0 0
    %5354 = vmatpush1.bf16.msra.mxu0 %v3877
    %5355 = vmatprep.subr.bf16.mxu0 0
    %5356 = vmatpush1.bf16.msra.mxu0 %v3876
    %5357 = vmatprep.subr.bf16.mxu0 0
    %5358 = vmatpush1.bf16.msra.mxu0 %v3875
    %5359 = vmatprep.subr.bf16.mxu0 0
    %5360 = vmatpush1.bf16.msra.mxu0 %v3874
    %5361 = vmatprep.subr.bf16.mxu0 0
    %5362 = vmatpush1.bf16.msra.mxu0 %v3873
    %5363 = vmatprep.subr.bf16.mxu0 0
    %5364 = vmatpush1.bf16.msra.mxu0 %v3872
    %5365 = vmatprep.subr.bf16.mxu0 0
    %5366 = vmatpush1.bf16.msra.mxu0 %v3871
    %5367 = vmatprep.subr.bf16.mxu0 0
    %5368 = vmatpush2.bf16.msra.mxu0 %v3886
    %5369 = vmatprep.subr.bf16.mxu0 0
    %5370 = vmatpush2.bf16.msra.mxu0 %v3885
    %5371 = vmatprep.subr.bf16.mxu0 0
    %5372 = vmatpush2.bf16.msra.mxu0 %v3884
    %5373 = vmatprep.subr.bf16.mxu0 0
    %5374 = vmatpush2.bf16.msra.mxu0 %v3883
    %5375 = vmatprep.subr.bf16.mxu0 0
    %5376 = vmatpush2.bf16.msra.mxu0 %v3882
    %5377 = vmatprep.subr.bf16.mxu0 0
    %5378 = vmatpush2.bf16.msra.mxu0 %v3881
    %5379 = vmatprep.subr.bf16.mxu0 0
    %5380 = vmatpush2.bf16.msra.mxu0 %v3880
    %5381 = vmatprep.subr.bf16.mxu0 0
    %5382 = vmatpush2.bf16.msra.mxu0 %v3879
    %5383 = vmatprep.mubr.bf16.mxu0 %v1307
    %5384 = vmatmul.mubr.bf16.gmra.mxu0 %v1305
    %v5385 = vpop.f32.mrf.mxu0
    %v5386 = vadd.f32 %v5346, %v5385
    %v5387 = vpop.f32.mrf.mxu0
    %v5388 = vpop.f32.mrf.mxu0
    %v5389 = vpop.f32.mrf.mxu0
    %5390 = vdwg.mxu0
    %5391 = vmatprep.subr.bf16.mxu0 0
    %5392 = vmatpush1.bf16.msra.mxu0 %v3894
    %5393 = vmatprep.subr.bf16.mxu0 0
    %5394 = vmatpush1.bf16.msra.mxu0 %v3893
    %5395 = vmatprep.subr.bf16.mxu0 0
    %5396 = vmatpush1.bf16.msra.mxu0 %v3892
    %5397 = vmatprep.subr.bf16.mxu0 0
    %5398 = vmatpush1.bf16.msra.mxu0 %v3891
    %5399 = vmatprep.subr.bf16.mxu0 0
    %5400 = vmatpush1.bf16.msra.mxu0 %v3890
    %5401 = vmatprep.subr.bf16.mxu0 0
    %5402 = vmatpush1.bf16.msra.mxu0 %v3889
    %5403 = vmatprep.subr.bf16.mxu0 0
    %5404 = vmatpush1.bf16.msra.mxu0 %v3888
    %5405 = vmatprep.subr.bf16.mxu0 0
    %5406 = vmatpush1.bf16.msra.mxu0 %v3887
    %5407 = vmatprep.subr.bf16.mxu0 0
    %5408 = vmatpush2.bf16.msra.mxu0 %v3902
    %5409 = vmatprep.subr.bf16.mxu0 0
    %5410 = vmatpush2.bf16.msra.mxu0 %v3901
    %5411 = vmatprep.subr.bf16.mxu0 0
    %5412 = vmatpush2.bf16.msra.mxu0 %v3900
    %5413 = vmatprep.subr.bf16.mxu0 0
    %5414 = vmatpush2.bf16.msra.mxu0 %v3899
    %5415 = vmatprep.subr.bf16.mxu0 0
    %5416 = vmatpush2.bf16.msra.mxu0 %v3898
    %5417 = vmatprep.subr.bf16.mxu0 0
    %5418 = vmatpush2.bf16.msra.mxu0 %v3897
    %5419 = vmatprep.subr.bf16.mxu0 0
    %5420 = vmatpush2.bf16.msra.mxu0 %v3896
    %5421 = vmatprep.subr.bf16.mxu0 0
    %5422 = vmatpush2.bf16.msra.mxu0 %v3895
    %5423 = vmatprep.mubr.bf16.mxu0 %v1345
    %5424 = vmatmul.mubr.bf16.gmra.mxu0 %v1331
    %v5425 = vpop.f32.mrf.mxu0
    %v5426 = vadd.f32 %v5386, %v5425
    %v5427 = vpop.f32.mrf.mxu0
    %v5428 = vpop.f32.mrf.mxu0
    %v5429 = vpop.f32.mrf.mxu0
    %5430 = vdwg.mxu0
    %5431 = vmatprep.subr.bf16.mxu0 0
    %5432 = vmatpush1.bf16.msra.mxu0 %v3910
    %5433 = vmatprep.subr.bf16.mxu0 0
    %5434 = vmatpush1.bf16.msra.mxu0 %v3909
    %5435 = vmatprep.subr.bf16.mxu0 0
    %5436 = vmatpush1.bf16.msra.mxu0 %v3908
    %5437 = vmatprep.subr.bf16.mxu0 0
    %5438 = vmatpush1.bf16.msra.mxu0 %v3907
    %5439 = vmatprep.subr.bf16.mxu0 0
    %5440 = vmatpush1.bf16.msra.mxu0 %v3906
    %5441 = vmatprep.subr.bf16.mxu0 0
    %5442 = vmatpush1.bf16.msra.mxu0 %v3905
    %5443 = vmatprep.subr.bf16.mxu0 0
    %5444 = vmatpush1.bf16.msra.mxu0 %v3904
    %5445 = vmatprep.subr.bf16.mxu0 0
    %5446 = vmatpush1.bf16.msra.mxu0 %v3903
    %5447 = vmatprep.subr.bf16.mxu0 0
    %5448 = vmatpush2.bf16.msra.mxu0 %v3918
    %5449 = vmatprep.subr.bf16.mxu0 0
    %5450 = vmatpush2.bf16.msra.mxu0 %v3917
    %5451 = vmatprep.subr.bf16.mxu0 0
    %5452 = vmatpush2.bf16.msra.mxu0 %v3916
    %5453 = vmatprep.subr.bf16.mxu0 0
    %5454 = vmatpush2.bf16.msra.mxu0 %v3915
    %5455 = vmatprep.subr.bf16.mxu0 0
    %5456 = vmatpush2.bf16.msra.mxu0 %v3914
    %5457 = vmatprep.subr.bf16.mxu0 0
    %5458 = vmatpush2.bf16.msra.mxu0 %v3913
    %5459 = vmatprep.subr.bf16.mxu0 0
    %5460 = vmatpush2.bf16.msra.mxu0 %v3912
    %5461 = vmatprep.subr.bf16.mxu0 0
    %5462 = vmatpush2.bf16.msra.mxu0 %v3911
    %5463 = vmatprep.mubr.bf16.mxu0 %v1355
    %5464 = vmatmul.mubr.bf16.gmra.mxu0 %v1353
    %v5465 = vpop.f32.mrf.mxu0
    %v5466 = vadd.f32 %v5426, %v5465
    %v5467 = vpop.f32.mrf.mxu0
    %v5468 = vpop.f32.mrf.mxu0
    %v5469 = vpop.f32.mrf.mxu0
    %5470 = vdwg.mxu0
    %5471 = vmatprep.subr.bf16.mxu0 0
    %5472 = vmatpush1.bf16.msra.mxu0 %v3926
    %5473 = vmatprep.subr.bf16.mxu0 0
    %5474 = vmatpush1.bf16.msra.mxu0 %v3925
    %5475 = vmatprep.subr.bf16.mxu0 0
    %5476 = vmatpush1.bf16.msra.mxu0 %v3924
    %5477 = vmatprep.subr.bf16.mxu0 0
    %5478 = vmatpush1.bf16.msra.mxu0 %v3923
    %5479 = vmatprep.subr.bf16.mxu0 0
    %5480 = vmatpush1.bf16.msra.mxu0 %v3922
    %5481 = vmatprep.subr.bf16.mxu0 0
    %5482 = vmatpush1.bf16.msra.mxu0 %v3921
    %5483 = vmatprep.subr.bf16.mxu0 0
    %5484 = vmatpush1.bf16.msra.mxu0 %v3920
    %5485 = vmatprep.subr.bf16.mxu0 0
    %5486 = vmatpush1.bf16.msra.mxu0 %v3919
    %5487 = vmatprep.subr.bf16.mxu0 0
    %5488 = vmatpush2.bf16.msra.mxu0 %v3934
    %5489 = vmatprep.subr.bf16.mxu0 0
    %5490 = vmatpush2.bf16.msra.mxu0 %v3933
    %5491 = vmatprep.subr.bf16.mxu0 0
    %5492 = vmatpush2.bf16.msra.mxu0 %v3932
    %5493 = vmatprep.subr.bf16.mxu0 0
    %5494 = vmatpush2.bf16.msra.mxu0 %v3931
    %5495 = vmatprep.subr.bf16.mxu0 0
    %5496 = vmatpush2.bf16.msra.mxu0 %v3930
    %5497 = vmatprep.subr.bf16.mxu0 0
    %5498 = vmatpush2.bf16.msra.mxu0 %v3929
    %5499 = vmatprep.subr.bf16.mxu0 0
    %5500 = vmatpush2.bf16.msra.mxu0 %v3928
    %5501 = vmatprep.subr.bf16.mxu0 0
    %5502 = vmatpush2.bf16.msra.mxu0 %v3927
    %5503 = vmatprep.mubr.bf16.mxu0 %v1352
    %5504 = vmatmul.mubr.bf16.gmra.mxu0 %v1338
    %v5505 = vpop.f32.mrf.mxu0
    %v5506 = vadd.f32 %v5466, %v5505
    %v5507 = vpop.f32.mrf.mxu0
    %v5508 = vpop.f32.mrf.mxu0
    %v5509 = vpop.f32.mrf.mxu0
    %5510 = vdwg.mxu0
    %5511 = vmatprep.subr.bf16.mxu0 0
    %5512 = vmatpush1.bf16.msra.mxu0 %v3942
    %5513 = vmatprep.subr.bf16.mxu0 0
    %5514 = vmatpush1.bf16.msra.mxu0 %v3941
    %5515 = vmatprep.subr.bf16.mxu0 0
    %5516 = vmatpush1.bf16.msra.mxu0 %v3940
    %5517 = vmatprep.subr.bf16.mxu0 0
    %5518 = vmatpush1.bf16.msra.mxu0 %v3939
    %5519 = vmatprep.subr.bf16.mxu0 0
    %5520 = vmatpush1.bf16.msra.mxu0 %v3938
    %5521 = vmatprep.subr.bf16.mxu0 0
    %5522 = vmatpush1.bf16.msra.mxu0 %v3937
    %5523 = vmatprep.subr.bf16.mxu0 0
    %5524 = vmatpush1.bf16.msra.mxu0 %v3936
    %5525 = vmatprep.subr.bf16.mxu0 0
    %5526 = vmatpush1.bf16.msra.mxu0 %v3935
    %5527 = vmatprep.subr.bf16.mxu0 0
    %5528 = vmatpush2.bf16.msra.mxu0 %v3950
    %5529 = vmatprep.subr.bf16.mxu0 0
    %5530 = vmatpush2.bf16.msra.mxu0 %v3949
    %5531 = vmatprep.subr.bf16.mxu0 0
    %5532 = vmatpush2.bf16.msra.mxu0 %v3948
    %5533 = vmatprep.subr.bf16.mxu0 0
    %5534 = vmatpush2.bf16.msra.mxu0 %v3947
    %5535 = vmatprep.subr.bf16.mxu0 0
    %5536 = vmatpush2.bf16.msra.mxu0 %v3946
    %5537 = vmatprep.subr.bf16.mxu0 0
    %5538 = vmatpush2.bf16.msra.mxu0 %v3945
    %5539 = vmatprep.subr.bf16.mxu0 0
    %5540 = vmatpush2.bf16.msra.mxu0 %v3944
    %5541 = vmatprep.subr.bf16.mxu0 0
    %5542 = vmatpush2.bf16.msra.mxu0 %v3943
    %5543 = vmatprep.mubr.bf16.mxu0 %v1356
    %5544 = vmatmul.mubr.bf16.gmra.mxu0 %v1354
    %v5545 = vpop.f32.mrf.mxu0
    %v5546 = vadd.f32 %v5506, %v5545
    %v5547 = vpop.f32.mrf.mxu0
    %v5548 = vpop.f32.mrf.mxu0
    %v5549 = vpop.f32.mrf.mxu0
    %5550 = vdwg.mxu0
    %5551 = vmatprep.subr.bf16.mxu0 0
    %5552 = vmatpush1.bf16.msra.mxu0 %v3958
    %5553 = vmatprep.subr.bf16.mxu0 0
    %5554 = vmatpush1.bf16.msra.mxu0 %v3957
    %5555 = vmatprep.subr.bf16.mxu0 0
    %5556 = vmatpush1.bf16.msra.mxu0 %v3956
    %5557 = vmatprep.subr.bf16.mxu0 0
    %5558 = vmatpush1.bf16.msra.mxu0 %v3955
    %5559 = vmatprep.subr.bf16.mxu0 0
    %5560 = vmatpush1.bf16.msra.mxu0 %v3954
    %5561 = vmatprep.subr.bf16.mxu0 0
    %5562 = vmatpush1.bf16.msra.mxu0 %v3953
    %5563 = vmatprep.subr.bf16.mxu0 0
    %5564 = vmatpush1.bf16.msra.mxu0 %v3952
    %5565 = vmatprep.subr.bf16.mxu0 0
    %5566 = vmatpush1.bf16.msra.mxu0 %v3951
    %5567 = vmatprep.subr.bf16.mxu0 0
    %5568 = vmatpush2.bf16.msra.mxu0 %v3966
    %5569 = vmatprep.subr.bf16.mxu0 0
    %5570 = vmatpush2.bf16.msra.mxu0 %v3965
    %5571 = vmatprep.subr.bf16.mxu0 0
    %5572 = vmatpush2.bf16.msra.mxu0 %v3964
    %5573 = vmatprep.subr.bf16.mxu0 0
    %5574 = vmatpush2.bf16.msra.mxu0 %v3963
    %5575 = vmatprep.subr.bf16.mxu0 0
    %5576 = vmatpush2.bf16.msra.mxu0 %v3962
    %5577 = vmatprep.subr.bf16.mxu0 0
    %5578 = vmatpush2.bf16.msra.mxu0 %v3961
    %5579 = vmatprep.subr.bf16.mxu0 0
    %5580 = vmatpush2.bf16.msra.mxu0 %v3960
    %5581 = vmatprep.subr.bf16.mxu0 0
    %5582 = vmatpush2.bf16.msra.mxu0 %v3959
    %5583 = vmatprep.mubr.bf16.mxu0 %v1394
    %5584 = vmatmul.mubr.bf16.gmra.mxu0 %v1380
    %v5585 = vpop.f32.mrf.mxu0
    %v5586 = vadd.f32 %v5546, %v5585
    %v5587 = vpop.f32.mrf.mxu0
    %v5588 = vpop.f32.mrf.mxu0
    %v5589 = vpop.f32.mrf.mxu0
    %5590 = vdwg.mxu0
    %5591 = vmatprep.subr.bf16.mxu0 0
    %5592 = vmatpush1.bf16.msra.mxu0 %v3974
    %5593 = vmatprep.subr.bf16.mxu0 0
    %5594 = vmatpush1.bf16.msra.mxu0 %v3973
    %5595 = vmatprep.subr.bf16.mxu0 0
    %5596 = vmatpush1.bf16.msra.mxu0 %v3972
    %5597 = vmatprep.subr.bf16.mxu0 0
    %5598 = vmatpush1.bf16.msra.mxu0 %v3971
    %5599 = vmatprep.subr.bf16.mxu0 0
    %5600 = vmatpush1.bf16.msra.mxu0 %v3970
    %5601 = vmatprep.subr.bf16.mxu0 0
    %5602 = vmatpush1.bf16.msra.mxu0 %v3969
    %5603 = vmatprep.subr.bf16.mxu0 0
    %5604 = vmatpush1.bf16.msra.mxu0 %v3968
    %5605 = vmatprep.subr.bf16.mxu0 0
    %5606 = vmatpush1.bf16.msra.mxu0 %v3967
    %5607 = vmatprep.subr.bf16.mxu0 0
    %5608 = vmatpush2.bf16.msra.mxu0 %v3982
    %5609 = vmatprep.subr.bf16.mxu0 0
    %5610 = vmatpush2.bf16.msra.mxu0 %v3981
    %5611 = vmatprep.subr.bf16.mxu0 0
    %5612 = vmatpush2.bf16.msra.mxu0 %v3980
    %5613 = vmatprep.subr.bf16.mxu0 0
    %5614 = vmatpush2.bf16.msra.mxu0 %v3979
    %5615 = vmatprep.subr.bf16.mxu0 0
    %5616 = vmatpush2.bf16.msra.mxu0 %v3978
    %5617 = vmatprep.subr.bf16.mxu0 0
    %5618 = vmatpush2.bf16.msra.mxu0 %v3977
    %5619 = vmatprep.subr.bf16.mxu0 0
    %5620 = vmatpush2.bf16.msra.mxu0 %v3976
    %5621 = vmatprep.subr.bf16.mxu0 0
    %5622 = vmatpush2.bf16.msra.mxu0 %v3975
    %5623 = vmatprep.mubr.bf16.mxu0 %v1404
    %5624 = vmatmul.mubr.bf16.gmra.mxu0 %v1402
    %v5625 = vpop.f32.mrf.mxu0
    %v5626 = vadd.f32 %v5586, %v5625
    %v5627 = vpop.f32.mrf.mxu0
    %v5628 = vpop.f32.mrf.mxu0
    %v5629 = vpop.f32.mrf.mxu0
    %5630 = vdwg.mxu0
    %5631 = vmatprep.subr.bf16.mxu0 0
    %5632 = vmatpush1.bf16.msra.mxu0 %v3990
    %5633 = vmatprep.subr.bf16.mxu0 0
    %5634 = vmatpush1.bf16.msra.mxu0 %v3989
    %5635 = vmatprep.subr.bf16.mxu0 0
    %5636 = vmatpush1.bf16.msra.mxu0 %v3988
    %5637 = vmatprep.subr.bf16.mxu0 0
    %5638 = vmatpush1.bf16.msra.mxu0 %v3987
    %5639 = vmatprep.subr.bf16.mxu0 0
    %5640 = vmatpush1.bf16.msra.mxu0 %v3986
    %5641 = vmatprep.subr.bf16.mxu0 0
    %5642 = vmatpush1.bf16.msra.mxu0 %v3985
    %5643 = vmatprep.subr.bf16.mxu0 0
    %5644 = vmatpush1.bf16.msra.mxu0 %v3984
    %5645 = vmatprep.subr.bf16.mxu0 0
    %5646 = vmatpush1.bf16.msra.mxu0 %v3983
    %5647 = vmatprep.subr.bf16.mxu0 0
    %5648 = vmatpush2.bf16.msra.mxu0 %v3998
    %5649 = vmatprep.subr.bf16.mxu0 0
    %5650 = vmatpush2.bf16.msra.mxu0 %v3997
    %5651 = vmatprep.subr.bf16.mxu0 0
    %5652 = vmatpush2.bf16.msra.mxu0 %v3996
    %5653 = vmatprep.subr.bf16.mxu0 0
    %5654 = vmatpush2.bf16.msra.mxu0 %v3995
    %5655 = vmatprep.subr.bf16.mxu0 0
    %5656 = vmatpush2.bf16.msra.mxu0 %v3994
    %5657 = vmatprep.subr.bf16.mxu0 0
    %5658 = vmatpush2.bf16.msra.mxu0 %v3993
    %5659 = vmatprep.subr.bf16.mxu0 0
    %5660 = vmatpush2.bf16.msra.mxu0 %v3992
    %5661 = vmatprep.subr.bf16.mxu0 0
    %5662 = vmatpush2.bf16.msra.mxu0 %v3991
    %5663 = vmatprep.mubr.bf16.mxu0 %v1401
    %5664 = vmatmul.mubr.bf16.gmra.mxu0 %v1387
    %v5665 = vpop.f32.mrf.mxu0
    %v5666 = vadd.f32 %v5626, %v5665
    %v5667 = vpop.f32.mrf.mxu0
    %v5668 = vpop.f32.mrf.mxu0
    %v5669 = vpop.f32.mrf.mxu0
    %5670 = vdwg.mxu0
    %5671 = vmatprep.subr.bf16.mxu0 0
    %5672 = vmatpush1.bf16.msra.mxu0 %v4006
    %5673 = vmatprep.subr.bf16.mxu0 0
    %5674 = vmatpush1.bf16.msra.mxu0 %v4005
    %5675 = vmatprep.subr.bf16.mxu0 0
    %5676 = vmatpush1.bf16.msra.mxu0 %v4004
    %5677 = vmatprep.subr.bf16.mxu0 0
    %5678 = vmatpush1.bf16.msra.mxu0 %v4003
    %5679 = vmatprep.subr.bf16.mxu0 0
    %5680 = vmatpush1.bf16.msra.mxu0 %v4002
    %5681 = vmatprep.subr.bf16.mxu0 0
    %5682 = vmatpush1.bf16.msra.mxu0 %v4001
    %5683 = vmatprep.subr.bf16.mxu0 0
    %5684 = vmatpush1.bf16.msra.mxu0 %v4000
    %5685 = vmatprep.subr.bf16.mxu0 0
    %5686 = vmatpush1.bf16.msra.mxu0 %v3999
    %5687 = vmatprep.subr.bf16.mxu0 0
    %5688 = vmatpush2.bf16.msra.mxu0 %v4014
    %5689 = vmatprep.subr.bf16.mxu0 0
    %5690 = vmatpush2.bf16.msra.mxu0 %v4013
    %5691 = vmatprep.subr.bf16.mxu0 0
    %5692 = vmatpush2.bf16.msra.mxu0 %v4012
    %5693 = vmatprep.subr.bf16.mxu0 0
    %5694 = vmatpush2.bf16.msra.mxu0 %v4011
    %5695 = vmatprep.subr.bf16.mxu0 0
    %5696 = vmatpush2.bf16.msra.mxu0 %v4010
    %5697 = vmatprep.subr.bf16.mxu0 0
    %5698 = vmatpush2.bf16.msra.mxu0 %v4009
    %5699 = vmatprep.subr.bf16.mxu0 0
    %5700 = vmatpush2.bf16.msra.mxu0 %v4008
    %5701 = vmatprep.subr.bf16.mxu0 0
    %5702 = vmatpush2.bf16.msra.mxu0 %v4007
    %5703 = vmatprep.mubr.bf16.mxu0 %v1405
    %5704 = vmatmul.mubr.bf16.gmra.mxu0 %v1403
    %v5705 = vpop.f32.mrf.mxu0
    %v5706 = vadd.f32 %v5666, %v5705
    %v5707 = vpop.f32.mrf.mxu0
    %v5708 = vpop.f32.mrf.mxu0
    %v5709 = vpop.f32.mrf.mxu0
    %5710 = vdwg.mxu0
    %5711 = vmatprep.subr.bf16.mxu0 0
    %5712 = vmatpush1.bf16.msra.mxu0 %v4022
    %5713 = vmatprep.subr.bf16.mxu0 0
    %5714 = vmatpush1.bf16.msra.mxu0 %v4021
    %5715 = vmatprep.subr.bf16.mxu0 0
    %5716 = vmatpush1.bf16.msra.mxu0 %v4020
    %5717 = vmatprep.subr.bf16.mxu0 0
    %5718 = vmatpush1.bf16.msra.mxu0 %v4019
    %5719 = vmatprep.subr.bf16.mxu0 0
    %5720 = vmatpush1.bf16.msra.mxu0 %v4018
    %5721 = vmatprep.subr.bf16.mxu0 0
    %5722 = vmatpush1.bf16.msra.mxu0 %v4017
    %5723 = vmatprep.subr.bf16.mxu0 0
    %5724 = vmatpush1.bf16.msra.mxu0 %v4016
    %5725 = vmatprep.subr.bf16.mxu0 0
    %5726 = vmatpush1.bf16.msra.mxu0 %v4015
    %5727 = vmatprep.subr.bf16.mxu0 0
    %5728 = vmatpush2.bf16.msra.mxu0 %v4030
    %5729 = vmatprep.subr.bf16.mxu0 0
    %5730 = vmatpush2.bf16.msra.mxu0 %v4029
    %5731 = vmatprep.subr.bf16.mxu0 0
    %5732 = vmatpush2.bf16.msra.mxu0 %v4028
    %5733 = vmatprep.subr.bf16.mxu0 0
    %5734 = vmatpush2.bf16.msra.mxu0 %v4027
    %5735 = vmatprep.subr.bf16.mxu0 0
    %5736 = vmatpush2.bf16.msra.mxu0 %v4026
    %5737 = vmatprep.subr.bf16.mxu0 0
    %5738 = vmatpush2.bf16.msra.mxu0 %v4025
    %5739 = vmatprep.subr.bf16.mxu0 0
    %5740 = vmatpush2.bf16.msra.mxu0 %v4024
    %5741 = vmatprep.subr.bf16.mxu0 0
    %5742 = vmatpush2.bf16.msra.mxu0 %v4023
    %5743 = vmatprep.mubr.bf16.mxu0 %v1443
    %5744 = vmatmul.mubr.bf16.gmra.mxu0 %v1429
    %v5745 = vpop.f32.mrf.mxu0
    %v5746 = vadd.f32 %v5706, %v5745
    %v5747 = vpop.f32.mrf.mxu0
    %v5748 = vpop.f32.mrf.mxu0
    %v5749 = vpop.f32.mrf.mxu0
    %5750 = vdwg.mxu0
    %5751 = vmatprep.subr.bf16.mxu0 0
    %5752 = vmatpush1.bf16.msra.mxu0 %v4038
    %5753 = vmatprep.subr.bf16.mxu0 0
    %5754 = vmatpush1.bf16.msra.mxu0 %v4037
    %5755 = vmatprep.subr.bf16.mxu0 0
    %5756 = vmatpush1.bf16.msra.mxu0 %v4036
    %5757 = vmatprep.subr.bf16.mxu0 0
    %5758 = vmatpush1.bf16.msra.mxu0 %v4035
    %5759 = vmatprep.subr.bf16.mxu0 0
    %5760 = vmatpush1.bf16.msra.mxu0 %v4034
    %5761 = vmatprep.subr.bf16.mxu0 0
    %5762 = vmatpush1.bf16.msra.mxu0 %v4033
    %5763 = vmatprep.subr.bf16.mxu0 0
    %5764 = vmatpush1.bf16.msra.mxu0 %v4032
    %5765 = vmatprep.subr.bf16.mxu0 0
    %5766 = vmatpush1.bf16.msra.mxu0 %v4031
    %5767 = vmatprep.subr.bf16.mxu0 0
    %5768 = vmatpush2.bf16.msra.mxu0 %v4046
    %5769 = vmatprep.subr.bf16.mxu0 0
    %5770 = vmatpush2.bf16.msra.mxu0 %v4045
    %5771 = vmatprep.subr.bf16.mxu0 0
    %5772 = vmatpush2.bf16.msra.mxu0 %v4044
    %5773 = vmatprep.subr.bf16.mxu0 0
    %5774 = vmatpush2.bf16.msra.mxu0 %v4043
    %5775 = vmatprep.subr.bf16.mxu0 0
    %5776 = vmatpush2.bf16.msra.mxu0 %v4042
    %5777 = vmatprep.subr.bf16.mxu0 0
    %5778 = vmatpush2.bf16.msra.mxu0 %v4041
    %5779 = vmatprep.subr.bf16.mxu0 0
    %5780 = vmatpush2.bf16.msra.mxu0 %v4040
    %5781 = vmatprep.subr.bf16.mxu0 0
    %5782 = vmatpush2.bf16.msra.mxu0 %v4039
    %5783 = vmatprep.mubr.bf16.mxu0 %v1453
    %5784 = vmatmul.mubr.bf16.gmra.mxu0 %v1451
    %v5785 = vpop.f32.mrf.mxu0
    %v5786 = vadd.f32 %v5746, %v5785
    %v5787 = vpop.f32.mrf.mxu0
    %v5788 = vpop.f32.mrf.mxu0
    %v5789 = vpop.f32.mrf.mxu0
    %5790 = vdwg.mxu0
    %5791 = vmatprep.subr.bf16.mxu0 0
    %5792 = vmatpush1.bf16.msra.mxu0 %v4054
    %5793 = vmatprep.subr.bf16.mxu0 0
    %5794 = vmatpush1.bf16.msra.mxu0 %v4053
    %5795 = vmatprep.subr.bf16.mxu0 0
    %5796 = vmatpush1.bf16.msra.mxu0 %v4052
    %5797 = vmatprep.subr.bf16.mxu0 0
    %5798 = vmatpush1.bf16.msra.mxu0 %v4051
    %5799 = vmatprep.subr.bf16.mxu0 0
    %5800 = vmatpush1.bf16.msra.mxu0 %v4050
    %5801 = vmatprep.subr.bf16.mxu0 0
    %5802 = vmatpush1.bf16.msra.mxu0 %v4049
    %5803 = vmatprep.subr.bf16.mxu0 0
    %5804 = vmatpush1.bf16.msra.mxu0 %v4048
    %5805 = vmatprep.subr.bf16.mxu0 0
    %5806 = vmatpush1.bf16.msra.mxu0 %v4047
    %5807 = vmatprep.subr.bf16.mxu0 0
    %5808 = vmatpush2.bf16.msra.mxu0 %v4062
    %5809 = vmatprep.subr.bf16.mxu0 0
    %5810 = vmatpush2.bf16.msra.mxu0 %v4061
    %5811 = vmatprep.subr.bf16.mxu0 0
    %5812 = vmatpush2.bf16.msra.mxu0 %v4060
    %5813 = vmatprep.subr.bf16.mxu0 0
    %5814 = vmatpush2.bf16.msra.mxu0 %v4059
    %5815 = vmatprep.subr.bf16.mxu0 0
    %5816 = vmatpush2.bf16.msra.mxu0 %v4058
    %5817 = vmatprep.subr.bf16.mxu0 0
    %5818 = vmatpush2.bf16.msra.mxu0 %v4057
    %5819 = vmatprep.subr.bf16.mxu0 0
    %5820 = vmatpush2.bf16.msra.mxu0 %v4056
    %5821 = vmatprep.subr.bf16.mxu0 0
    %5822 = vmatpush2.bf16.msra.mxu0 %v4055
    %5823 = vmatprep.mubr.bf16.mxu0 %v1450
    %5824 = vmatmul.mubr.bf16.gmra.mxu0 %v1436
    %v5825 = vpop.f32.mrf.mxu0
    %v5826 = vadd.f32 %v5786, %v5825
    %v5827 = vpop.f32.mrf.mxu0
    %v5828 = vpop.f32.mrf.mxu0
    %v5829 = vpop.f32.mrf.mxu0
    %5830 = vdwg.mxu0
    %5831 = vmatprep.subr.bf16.mxu0 0
    %5832 = vmatpush1.bf16.msra.mxu0 %v4070
    %5833 = vmatprep.subr.bf16.mxu0 0
    %5834 = vmatpush1.bf16.msra.mxu0 %v4069
    %5835 = vmatprep.subr.bf16.mxu0 0
    %5836 = vmatpush1.bf16.msra.mxu0 %v4068
    %5837 = vmatprep.subr.bf16.mxu0 0
    %5838 = vmatpush1.bf16.msra.mxu0 %v4067
    %5839 = vmatprep.subr.bf16.mxu0 0
    %5840 = vmatpush1.bf16.msra.mxu0 %v4066
    %5841 = vmatprep.subr.bf16.mxu0 0
    %5842 = vmatpush1.bf16.msra.mxu0 %v4065
    %5843 = vmatprep.subr.bf16.mxu0 0
    %5844 = vmatpush1.bf16.msra.mxu0 %v4064
    %5845 = vmatprep.subr.bf16.mxu0 0
    %5846 = vmatpush1.bf16.msra.mxu0 %v4063
    %5847 = vmatprep.subr.bf16.mxu0 0
    %5848 = vmatpush2.bf16.msra.mxu0 %v4078
    %5849 = vmatprep.subr.bf16.mxu0 0
    %5850 = vmatpush2.bf16.msra.mxu0 %v4077
    %5851 = vmatprep.subr.bf16.mxu0 0
    %5852 = vmatpush2.bf16.msra.mxu0 %v4076
    %5853 = vmatprep.subr.bf16.mxu0 0
    %5854 = vmatpush2.bf16.msra.mxu0 %v4075
    %5855 = vmatprep.subr.bf16.mxu0 0
    %5856 = vmatpush2.bf16.msra.mxu0 %v4074
    %5857 = vmatprep.subr.bf16.mxu0 0
    %5858 = vmatpush2.bf16.msra.mxu0 %v4073
    %5859 = vmatprep.subr.bf16.mxu0 0
    %5860 = vmatpush2.bf16.msra.mxu0 %v4072
    %5861 = vmatprep.subr.bf16.mxu0 0
    %5862 = vmatpush2.bf16.msra.mxu0 %v4071
    %5863 = vmatprep.mubr.bf16.mxu0 %v1454
    %5864 = vmatmul.mubr.bf16.gmra.mxu0 %v1452
    %v5865 = vpop.f32.mrf.mxu0
    %v5866 = vadd.f32 %v5826, %v5865
    %v5867 = vpop.f32.mrf.mxu0
    %v5868 = vpop.f32.mrf.mxu0
    %v5869 = vpop.f32.mrf.mxu0
    %5870 = vdwg.mxu0
    %vm5871 = vcmask 99328
    %5872 = vst.msk [vmem:[#allocation2] sm:$0x3] %vm5871, %v5866
    // Predicated region
    $region14: #{tpu_custom_call.1} parent=1 // pred_check
      _
    $region15: #{tpu_custom_call.1} parent=1 // pred_check_branch
      %5874 = sbr.rel (0) target = $region17
    $region16: #{tpu_custom_call.1} parent=1 // pred_region
      %s5876 = ssub.s32 32, 32
      %5877 = vsyncadd [#allocation3], %s5876
      %s5879 = sshll.u32 [#allocation2], 4
      %s5880 = int_to_ptr.vmem [resolvable:$true] %s5879
      %5882 = dma.vmem_to_hbm [thread:$0]  %s5880, 32, %s3, [#allocation3]
    $region17: #{tpu_custom_call.1} parent=1 // pred_fallthru
      _
    // Predicated region
    $region18: #{tpu_custom_call.1} parent=1 // pred_check
      _
    $region19: #{tpu_custom_call.1} parent=1 // pred_check_branch
      %5884 = sbr.rel (0) target = $region21
    $region20: #{tpu_custom_call.1} parent=1 // pred_region
      %5885 = dma.done [#allocation3], 32
    $region21: #{tpu_custom_call.1} parent=1 // pred_fallthru
      _
    %5886 = vsyncpa [#allocation3], 1

</llo_original>
